<compile_context>
chip_gen: v7x
topology: tpu7x:2x2x1
jax: 0.10.0
libtpu: 0.0.40
codegen_flags: <defaults>
</compile_context>

<pallas_src>
import jax
import jax.numpy as jnp
from jax import lax
from jax.experimental import pallas as pl
from jax.experimental.pallas import tpu as pltpu


def _seq_attn_kernel(x_ref, g_ref, wih_ref, b_ref, whh_ref, out_ref,
                     gf_ref, gb_ref, sf_ref, sb_ref):
    TB, S, H = x_ref.shape
    Hh = whh_ref.shape[1]
    G = 4 * Hh

    x = x_ref[...]                                      # (TB, S, H)
    y = x * g_ref[...][:, None, :]                      # (TB, S, H)

    # ---- hoisted input projection: one MXU matmul for both directions ----
    gall = jnp.dot(y.reshape(TB * S, H), wih_ref[...],
                   preferred_element_type=jnp.float32) + b_ref[...]   # (TB*S, 2G)
    gall = jnp.transpose(gall.reshape(TB, S, 2 * G), (1, 0, 2))        # (S, TB, 2G)
    gf_ref[...] = gall[..., :G]       # fwd input-projected gates, time-major
    gb_ref[...] = gall[..., G:]       # bwd input-projected gates, time-major

    whh = whh_ref[...]                # (2, Hh, G), gate order [i, f, o, g]

    def step(t, carry):
        h, c = carry                                    # (2, TB, Hh) each
        rt = S - 1 - t
        # dir 0 = forward at time t, dir 1 = backward at time rt
        g_in = jnp.stack([gf_ref[t], gb_ref[rt]], axis=0)            # (2, TB, G)
        gates = g_in + jnp.einsum('dbh,dhg->dbg', h, whh,
                                  preferred_element_type=jnp.float32)
        sig = jax.nn.sigmoid(gates[..., :3 * Hh])       # one EUP pass: i, f, o
        g_g = jnp.tanh(gates[..., 3 * Hh:])             # one EUP pass: g
        i_g = sig[..., :Hh]
        f_g = sig[..., Hh:2 * Hh]
        o_g = sig[..., 2 * Hh:]
        c_new = f_g * c + i_g * g_g
        h_new = o_g * jnp.tanh(c_new)
        # per-timestep feature sums (attention scores), aligned to real time
        sf_ref[t] = jnp.sum(h_new[0:1], axis=-1)        # (1, TB)
        sb_ref[rt] = jnp.sum(h_new[1:2], axis=-1)       # (1, TB)
        return h_new, c_new

    h0 = jnp.zeros((2, TB, Hh), jnp.float32)
    c0 = jnp.zeros((2, TB, Hh), jnp.float32)
    lax.fori_loop(0, S, step, (h0, c0),
                  unroll=True if S <= 16 else 4)

    # ---- softmax over time + attention-weighted sum ----
    scores = (sf_ref[...] + sb_ref[...])[:, 0, :]       # (S, TB)
    m = jnp.max(scores, axis=0, keepdims=True)
    e = jnp.exp(scores - m)
    alpha = e / jnp.sum(e, axis=0, keepdims=True)       # softmax over S
    alpha_bs = jnp.transpose(alpha)                     # (TB, S)
    out = jnp.sum(x * alpha_bs[:, :, None], axis=1)     # (TB, H)
    out_ref[...] = out.astype(out_ref.dtype)


def _prep_params(params):
    """PyTorch-layout LSTM params -> kernel layout (done once, host-side).

    Input (PyTorch gate order [i, f, g, o]):
      wih_f, wih_b : (4*Hh, H)
      whh_f, whh_b : (4*Hh, Hh)
      b_f,   b_b   : (1, 4*Hh)   (= b_ih + b_hh)
    Output (gate order [i, f, o, g], pre-transposed):
      wih_cat : (H, 8*Hh)   fwd || bwd
      b_cat   : (1, 8*Hh)
      whh_s   : (2, Hh, 4*Hh)
    """
    wih_f, whh_f, b_f, wih_b, whh_b, b_b = params
    Hh = whh_f.shape[1]
    perm = jnp.concatenate([jnp.arange(0, 2 * Hh),
                            jnp.arange(3 * Hh, 4 * Hh),
                            jnp.arange(2 * Hh, 3 * Hh)])
    wih_cat = jnp.concatenate([wih_f[perm].T, wih_b[perm].T], axis=1)
    b_cat = jnp.concatenate([b_f[:, perm], b_b[:, perm]], axis=1)
    whh_s = jnp.stack([whh_f[perm].T, whh_b[perm].T], axis=0)
    return wih_cat, b_cat, whh_s


def sequential_attention(x, g, params, *, batch_block=None):
    B, S, H = x.shape
    Hh = H // 2
    G = 4 * Hh
    wih_cat, b_cat, whh_s = _prep_params(params)

    if batch_block is None:
        batch_block = B if B <= 8 else 8
    TB = batch_block
    assert B % TB == 0, "batch must be divisible by the batch tile"

    kernel = pl.pallas_call(
        _seq_attn_kernel,
        out_shape=jax.ShapeDtypeStruct((B, H), jnp.float32),
        grid=(B // TB,),
        in_specs=[
            pl.BlockSpec((TB, S, H), lambda b: (b, 0, 0)),     # x
            pl.BlockSpec((TB, H), lambda b: (b, 0)),           # gate vector
            pl.BlockSpec((H, 2 * G), lambda b: (0, 0)),        # W_ih (both dirs)
            pl.BlockSpec((1, 2 * G), lambda b: (0, 0)),        # bias (both dirs)
            pl.BlockSpec((2, Hh, G), lambda b: (0, 0, 0)),     # W_hh stacked
        ],
        out_specs=pl.BlockSpec((TB, H), lambda b: (b, 0)),
        scratch_shapes=[
            pltpu.VMEM((S, TB, G), jnp.float32),   # fwd pre-projected gates
            pltpu.VMEM((S, TB, G), jnp.float32),   # bwd pre-projected gates
            pltpu.VMEM((S, 1, TB), jnp.float32),   # fwd per-step feature sums
            pltpu.VMEM((S, 1, TB), jnp.float32),   # bwd per-step feature sums
        ],
        compiler_params=pltpu.CompilerParams(
            dimension_semantics=("parallel",)),
    )
    return kernel(x, g, wih_cat, b_cat, whh_s)


# ---------------- pure-JAX reference for verification ----------------
def _lstm_scan_ref(y_tm, wih, whh, b, Hh, reverse=False):
    B = y_tm.shape[1]

    def step(carry, y_t):
        h, c = carry
        gates = y_t @ wih.T + h @ whh.T + b
        i_g = jax.nn.sigmoid(gates[:, :Hh])
        f_g = jax.nn.sigmoid(gates[:, Hh:2 * Hh])
        g_g = jnp.tanh(gates[:, 2 * Hh:3 * Hh])
        o_g = jax.nn.sigmoid(gates[:, 3 * Hh:])
        c = f_g * c + i_g * g_g
        h = o_g * jnp.tanh(c)
        return (h, c), h

    init = (jnp.zeros((B, Hh), jnp.float32), jnp.zeros((B, Hh), jnp.float32))
    _, hs = lax.scan(step, init, y_tm, reverse=reverse)
    return hs                                                  # (S, B, Hh)


def sequential_attention_ref(x, g, params):
    wih_f, whh_f, b_f, wih_b, whh_b, b_b = params
    H = x.shape[-1]
    Hh = H // 2
    y = x * g[:, None, :]
    y_tm = jnp.transpose(y, (1, 0, 2))
    hfwd = _lstm_scan_ref(y_tm, wih_f, whh_f, b_f, Hh, reverse=False)
    hbwd = _lstm_scan_ref(y_tm, wih_b, whh_b, b_b, Hh, reverse=True)
    outputs = jnp.transpose(jnp.concatenate([hfwd, hbwd], -1), (1, 0, 2))
    scores = jnp.sum(outputs, axis=2, keepdims=True)           # (B, S, 1)
    alpha = jax.nn.softmax(scores, axis=1)
    return jnp.sum(x * alpha, axis=1)


if __name__ == "__main__":
    B, S, H = 2, 8, 32
    Hh = H // 2
    bound = float(1.0 / (Hh ** 0.5))     # PyTorch LSTM default init range

    keys = jax.random.split(jax.random.PRNGKey(0), 10)

    def u(k, shape):
        return jax.random.uniform(k, shape, jnp.float32, -bound, bound)

    x = jax.random.normal(keys[0], (B, S, H), jnp.float32)     # inputs[0]
    g = jax.random.normal(keys[1], (B, H), jnp.float32)        # inputs[1]

    wih_f = u(keys[2], (4 * Hh, H))
    whh_f = u(keys[3], (4 * Hh, Hh))
    b_f = u(keys[4], (1, 4 * Hh)) + u(keys[5], (1, 4 * Hh))    # b_ih + b_hh
    wih_b = u(keys[6], (4 * Hh, H))
    whh_b = u(keys[7], (4 * Hh, Hh))
    b_b = u(keys[8], (1, 4 * Hh)) + u(keys[9], (1, 4 * Hh))
    params = (wih_f, whh_f, b_f, wih_b, whh_b, b_b)

    out = jax.block_until_ready(sequential_attention(x, g, params))
    ref = sequential_attention_ref(x, g, params)

    assert out.shape == (B, H), out.shape
    err = float(jnp.max(jnp.abs(out - ref)))
    assert jnp.allclose(out, ref, atol=1e-4, rtol=1e-4), err
    print("KERNEL_OK")
</pallas_src>

<mosaic_0001>
module attributes {stable_mosaic.version = 11 : i64} {
  func.func @_seq_attn_kernel(%arg0: i32, %arg1: memref<2x8x32xf32, #tpu.memory_space<vmem>>, %arg2: memref<2x32xf32, #tpu.memory_space<vmem>>, %arg3: memref<32x128xf32, #tpu.memory_space<vmem>>, %arg4: memref<1x128xf32, #tpu.memory_space<vmem>>, %arg5: memref<2x16x64xf32, #tpu.memory_space<vmem>>, %arg6: memref<2x32xf32, #tpu.memory_space<vmem>>, %arg7: memref<8x2x64xf32, #tpu.memory_space<vmem>>, %arg8: memref<8x2x64xf32, #tpu.memory_space<vmem>>, %arg9: memref<8x1x2xf32, #tpu.memory_space<vmem>>, %arg10: memref<8x1x2xf32, #tpu.memory_space<vmem>>) attributes {dimension_semantics = [#tpu.dimension_semantics<parallel>], iteration_bounds = array<i64: 1>, scalar_prefetch = 0 : i64, scratch_operands = 4 : i64, tpu.core_type = #tpu.core_type<tc>, window_params = [{transform_indices = @transform_0, window_bounds = array<i64: 2, 8, 32>}, {transform_indices = @transform_1, window_bounds = array<i64: 2, 32>}, {pipeline_mode = #tpu.pipeline_mode<synchronous>, transform_indices = @transform_2, window_bounds = array<i64: 32, 128>}, {pipeline_mode = #tpu.pipeline_mode<synchronous>, transform_indices = @transform_3, window_bounds = array<i64: 1, 128>}, {pipeline_mode = #tpu.pipeline_mode<synchronous>, transform_indices = @transform_4, window_bounds = array<i64: 2, 16, 64>}, {transform_indices = @transform_5, window_bounds = array<i64: 2, 32>}]} {
    %c0 = arith.constant 0 : index
    %c0_0 = arith.constant 0 : index
    %c0_1 = arith.constant 0 : index
    %0 = vector.load %arg1[%c0, %c0_0, %c0_1] : memref<2x8x32xf32, #tpu.memory_space<vmem>>, vector<2x8x32xf32>
    %c0_2 = arith.constant 0 : index
    %c0_3 = arith.constant 0 : index
    %1 = vector.load %arg2[%c0_2, %c0_3] : memref<2x32xf32, #tpu.memory_space<vmem>>, vector<2x32xf32>
    %2 = vector.shape_cast %1 : vector<2x32xf32> to vector<2x1x32xf32>
    %3 = vector.broadcast %2 : vector<2x1x32xf32> to vector<2x8x32xf32>
    %4 = arith.mulf %0, %3 : vector<2x8x32xf32>
    %5 = vector.shape_cast %4 : vector<2x8x32xf32> to vector<16x32xf32>
    %c0_4 = arith.constant 0 : index
    %c0_5 = arith.constant 0 : index
    %6 = vector.load %arg3[%c0_4, %c0_5] : memref<32x128xf32, #tpu.memory_space<vmem>>, vector<32x128xf32>
    %cst = arith.constant dense<0.000000e+00> : vector<16x128xf32>
    %7 = tpu.matmul %5, %6, %cst {dimension_numbers = #tpu.dot_dimension_numbers<[1], [0], [0], [1], [0, 0, 1, 1], [], []>} : vector<16x32xf32>, vector<32x128xf32>, vector<16x128xf32> -> vector<16x128xf32>
    %c0_6 = arith.constant 0 : index
    %c0_7 = arith.constant 0 : index
    %8 = vector.load %arg4[%c0_6, %c0_7] : memref<1x128xf32, #tpu.memory_space<vmem>>, vector<1x128xf32>
    %9 = vector.broadcast %8 : vector<1x128xf32> to vector<16x128xf32>
    %10 = arith.addf %7, %9 : vector<16x128xf32>
    %11 = vector.shape_cast %10 : vector<16x128xf32> to vector<2x8x128xf32>
    %12 = tpu.transpose %11, [1, 0, 2] : vector<2x8x128xf32> -> vector<8x2x128xf32>
    %13 = vector.extract_strided_slice %12 {offsets = [0, 0, 0], sizes = [8, 2, 64], strides = [1, 1, 1]} : vector<8x2x128xf32> to vector<8x2x64xf32>
    %c0_8 = arith.constant 0 : index
    %c0_9 = arith.constant 0 : index
    %c0_10 = arith.constant 0 : index
    %14 = vector.load %arg7[%c0_8, %c0_9, %c0_10] : memref<8x2x64xf32, #tpu.memory_space<vmem>>, vector<8x2x64xf32>
    tpu.vector_store %arg7[%c0_8, %c0_9, %c0_10], %13 {strides = array<i32>} : memref<8x2x64xf32, #tpu.memory_space<vmem>>, vector<8x2x64xf32>,
    %15 = vector.extract_strided_slice %12 {offsets = [0, 0, 64], sizes = [8, 2, 64], strides = [1, 1, 1]} : vector<8x2x128xf32> to vector<8x2x64xf32>
    %c0_11 = arith.constant 0 : index
    %c0_12 = arith.constant 0 : index
    %c0_13 = arith.constant 0 : index
    %16 = vector.load %arg8[%c0_11, %c0_12, %c0_13] : memref<8x2x64xf32, #tpu.memory_space<vmem>>, vector<8x2x64xf32>
    tpu.vector_store %arg8[%c0_11, %c0_12, %c0_13], %15 {strides = array<i32>} : memref<8x2x64xf32, #tpu.memory_space<vmem>>, vector<8x2x64xf32>,
    %c0_14 = arith.constant 0 : index
    %c0_15 = arith.constant 0 : index
    %c0_16 = arith.constant 0 : index
    %17 = vector.load %arg5[%c0_14, %c0_15, %c0_16] : memref<2x16x64xf32, #tpu.memory_space<vmem>>, vector<2x16x64xf32>
    %cst_17 = arith.constant 0.000000e+00 : f32
    %18 = vector.broadcast %cst_17 : f32 to vector<2x2x16xf32>
    %cst_18 = arith.constant 0.000000e+00 : f32
    %19 = vector.broadcast %cst_18 : f32 to vector<2x2x16xf32>
    %c0_i32 = arith.constant 0 : i32
    %c7_i32 = arith.constant 7 : i32
    %20 = arith.subi %c7_i32, %c0_i32 : i32
    %21 = arith.index_cast %c0_i32 : i32 to index
    %c0_19 = arith.constant 0 : index
    %c0_20 = arith.constant 0 : index
    %22 = vector.load %arg7[%21, %c0_19, %c0_20] : memref<8x2x64xf32, #tpu.memory_space<vmem>>, vector<1x2x64xf32>
    %23 = vector.shape_cast %22 : vector<1x2x64xf32> to vector<2x64xf32>
    %24 = arith.index_cast %20 : i32 to index
    %c0_21 = arith.constant 0 : index
    %c0_22 = arith.constant 0 : index
    %25 = vector.load %arg8[%24, %c0_21, %c0_22] : memref<8x2x64xf32, #tpu.memory_space<vmem>>, vector<1x2x64xf32>
    %26 = vector.shape_cast %25 : vector<1x2x64xf32> to vector<2x64xf32>
    %27 = vector.shape_cast %23 : vector<2x64xf32> to vector<1x2x64xf32>
    %28 = vector.shape_cast %26 : vector<2x64xf32> to vector<1x2x64xf32>
    %29 = tpu.concatenate %27, %28 in 0 : vector<1x2x64xf32>, vector<1x2x64xf32> -> vector<2x2x64xf32>
    "tpu.trace_start"() <{level = 10 : i32, message = "dbh,dhg->dbg"}> : () -> ()
    %cst_23 = arith.constant dense<0.000000e+00> : vector<2x2x64xf32>
    %30 = tpu.matmul %18, %17, %cst_23 {dimension_numbers = #tpu.dot_dimension_numbers<[2], [1], [1], [2], [0, 0, 0, 1, 1, 2], [0], [0]>} : vector<2x2x16xf32>, vector<2x16x64xf32>, vector<2x2x64xf32> -> vector<2x2x64xf32>
    "tpu.trace_stop"() : () -> ()
    %31 = arith.addf %29, %30 : vector<2x2x64xf32>
    %32 = vector.extract_strided_slice %31 {offsets = [0, 0, 0], sizes = [2, 2, 48], strides = [1, 1, 1]} : vector<2x2x64xf32> to vector<2x2x48xf32>
    %33 = arith.negf %32 : vector<2x2x48xf32>
    %34 = math.exp %33 : vector<2x2x48xf32>
    %cst_24 = arith.constant 1.000000e+00 : f32
    %35 = vector.broadcast %cst_24 : f32 to vector<2x2x48xf32>
    %36 = arith.addf %35, %34 : vector<2x2x48xf32>
    %37 = arith.divf %35, %36 : vector<2x2x48xf32>
    %38 = vector.extract_strided_slice %31 {offsets = [0, 0, 48], sizes = [2, 2, 16], strides = [1, 1, 1]} : vector<2x2x64xf32> to vector<2x2x16xf32>
    %39 = math.tanh %38 : vector<2x2x16xf32>
    %40 = vector.extract_strided_slice %37 {offsets = [0, 0, 0], sizes = [2, 2, 16], strides = [1, 1, 1]} : vector<2x2x48xf32> to vector<2x2x16xf32>
    %41 = vector.extract_strided_slice %37 {offsets = [0, 0, 16], sizes = [2, 2, 16], strides = [1, 1, 1]} : vector<2x2x48xf32> to vector<2x2x16xf32>
    %42 = vector.extract_strided_slice %37 {offsets = [0, 0, 32], sizes = [2, 2, 16], strides = [1, 1, 1]} : vector<2x2x48xf32> to vector<2x2x16xf32>
    %43 = arith.mulf %41, %19 : vector<2x2x16xf32>
    %44 = arith.mulf %40, %39 : vector<2x2x16xf32>
    %45 = arith.addf %43, %44 : vector<2x2x16xf32>
    %46 = math.tanh %45 : vector<2x2x16xf32>
    %47 = arith.mulf %42, %46 : vector<2x2x16xf32>
    %48 = vector.extract_strided_slice %47 {offsets = [0, 0, 0], sizes = [1, 2, 16], strides = [1, 1, 1]} : vector<2x2x16xf32> to vector<1x2x16xf32>
    %cst_25 = arith.constant dense<0.000000e+00> : vector<1x2xf32>
    %49 = vector.multi_reduction <add>, %48, %cst_25 [2] : vector<1x2x16xf32> to vector<1x2xf32>
    %50 = arith.index_cast %c0_i32 : i32 to index
    %c0_26 = arith.constant 0 : index
    %c0_27 = arith.constant 0 : index
    %51 = vector.load %arg9[%50, %c0_26, %c0_27] : memref<8x1x2xf32, #tpu.memory_space<vmem>>, vector<1x1x2xf32>
    %52 = vector.shape_cast %51 : vector<1x1x2xf32> to vector<1x2xf32>
    %53 = vector.shape_cast %49 : vector<1x2xf32> to vector<1x1x2xf32>
    tpu.vector_store %arg9[%50, %c0_26, %c0_27], %53 {strides = array<i32>} : memref<8x1x2xf32, #tpu.memory_space<vmem>>, vector<1x1x2xf32>,
    %54 = vector.extract_strided_slice %47 {offsets = [1, 0, 0], sizes = [1, 2, 16], strides = [1, 1, 1]} : vector<2x2x16xf32> to vector<1x2x16xf32>
    %cst_28 = arith.constant dense<0.000000e+00> : vector<1x2xf32>
    %55 = vector.multi_reduction <add>, %54, %cst_28 [2] : vector<1x2x16xf32> to vector<1x2xf32>
    %56 = arith.index_cast %20 : i32 to index
    %c0_29 = arith.constant 0 : index
    %c0_30 = arith.constant 0 : index
    %57 = vector.load %arg10[%56, %c0_29, %c0_30] : memref<8x1x2xf32, #tpu.memory_space<vmem>>, vector<1x1x2xf32>
    %58 = vector.shape_cast %57 : vector<1x1x2xf32> to vector<1x2xf32>
    %59 = vector.shape_cast %55 : vector<1x2xf32> to vector<1x1x2xf32>
    tpu.vector_store %arg10[%56, %c0_29, %c0_30], %59 {strides = array<i32>} : memref<8x1x2xf32, #tpu.memory_space<vmem>>, vector<1x1x2xf32>,
    %c1_i32 = arith.constant 1 : i32
    %c7_i32_31 = arith.constant 7 : i32
    %60 = arith.subi %c7_i32_31, %c1_i32 : i32
    %61 = arith.index_cast %c1_i32 : i32 to index
    %c0_32 = arith.constant 0 : index
    %c0_33 = arith.constant 0 : index
    %62 = vector.load %arg7[%61, %c0_32, %c0_33] : memref<8x2x64xf32, #tpu.memory_space<vmem>>, vector<1x2x64xf32>
    %63 = vector.shape_cast %62 : vector<1x2x64xf32> to vector<2x64xf32>
    %64 = arith.index_cast %60 : i32 to index
    %c0_34 = arith.constant 0 : index
    %c0_35 = arith.constant 0 : index
    %65 = vector.load %arg8[%64, %c0_34, %c0_35] : memref<8x2x64xf32, #tpu.memory_space<vmem>>, vector<1x2x64xf32>
    %66 = vector.shape_cast %65 : vector<1x2x64xf32> to vector<2x64xf32>
    %67 = vector.shape_cast %63 : vector<2x64xf32> to vector<1x2x64xf32>
    %68 = vector.shape_cast %66 : vector<2x64xf32> to vector<1x2x64xf32>
    %69 = tpu.concatenate %67, %68 in 0 : vector<1x2x64xf32>, vector<1x2x64xf32> -> vector<2x2x64xf32>
    "tpu.trace_start"() <{level = 10 : i32, message = "dbh,dhg->dbg"}> : () -> ()
    %cst_36 = arith.constant dense<0.000000e+00> : vector<2x2x64xf32>
    %70 = tpu.matmul %47, %17, %cst_36 {dimension_numbers = #tpu.dot_dimension_numbers<[2], [1], [1], [2], [0, 0, 0, 1, 1, 2], [0], [0]>} : vector<2x2x16xf32>, vector<2x16x64xf32>, vector<2x2x64xf32> -> vector<2x2x64xf32>
    "tpu.trace_stop"() : () -> ()
    %71 = arith.addf %69, %70 : vector<2x2x64xf32>
    %72 = vector.extract_strided_slice %71 {offsets = [0, 0, 0], sizes = [2, 2, 48], strides = [1, 1, 1]} : vector<2x2x64xf32> to vector<2x2x48xf32>
    %73 = arith.negf %72 : vector<2x2x48xf32>
    %74 = math.exp %73 : vector<2x2x48xf32>
    %cst_37 = arith.constant 1.000000e+00 : f32
    %75 = vector.broadcast %cst_37 : f32 to vector<2x2x48xf32>
    %76 = arith.addf %75, %74 : vector<2x2x48xf32>
    %77 = arith.divf %75, %76 : vector<2x2x48xf32>
    %78 = vector.extract_strided_slice %71 {offsets = [0, 0, 48], sizes = [2, 2, 16], strides = [1, 1, 1]} : vector<2x2x64xf32> to vector<2x2x16xf32>
    %79 = math.tanh %78 : vector<2x2x16xf32>
    %80 = vector.extract_strided_slice %77 {offsets = [0, 0, 0], sizes = [2, 2, 16], strides = [1, 1, 1]} : vector<2x2x48xf32> to vector<2x2x16xf32>
    %81 = vector.extract_strided_slice %77 {offsets = [0, 0, 16], sizes = [2, 2, 16], strides = [1, 1, 1]} : vector<2x2x48xf32> to vector<2x2x16xf32>
    %82 = vector.extract_strided_slice %77 {offsets = [0, 0, 32], sizes = [2, 2, 16], strides = [1, 1, 1]} : vector<2x2x48xf32> to vector<2x2x16xf32>
    %83 = arith.mulf %81, %45 : vector<2x2x16xf32>
    %84 = arith.mulf %80, %79 : vector<2x2x16xf32>
    %85 = arith.addf %83, %84 : vector<2x2x16xf32>
    %86 = math.tanh %85 : vector<2x2x16xf32>
    %87 = arith.mulf %82, %86 : vector<2x2x16xf32>
    %88 = vector.extract_strided_slice %87 {offsets = [0, 0, 0], sizes = [1, 2, 16], strides = [1, 1, 1]} : vector<2x2x16xf32> to vector<1x2x16xf32>
    %cst_38 = arith.constant dense<0.000000e+00> : vector<1x2xf32>
    %89 = vector.multi_reduction <add>, %88, %cst_38 [2] : vector<1x2x16xf32> to vector<1x2xf32>
    %90 = arith.index_cast %c1_i32 : i32 to index
    %c0_39 = arith.constant 0 : index
    %c0_40 = arith.constant 0 : index
    %91 = vector.load %arg9[%90, %c0_39, %c0_40] : memref<8x1x2xf32, #tpu.memory_space<vmem>>, vector<1x1x2xf32>
    %92 = vector.shape_cast %91 : vector<1x1x2xf32> to vector<1x2xf32>
    %93 = vector.shape_cast %89 : vector<1x2xf32> to vector<1x1x2xf32>
    tpu.vector_store %arg9[%90, %c0_39, %c0_40], %93 {strides = array<i32>} : memref<8x1x2xf32, #tpu.memory_space<vmem>>, vector<1x1x2xf32>,
    %94 = vector.extract_strided_slice %87 {offsets = [1, 0, 0], sizes = [1, 2, 16], strides = [1, 1, 1]} : vector<2x2x16xf32> to vector<1x2x16xf32>
    %cst_41 = arith.constant dense<0.000000e+00> : vector<1x2xf32>
    %95 = vector.multi_reduction <add>, %94, %cst_41 [2] : vector<1x2x16xf32> to vector<1x2xf32>
    %96 = arith.index_cast %60 : i32 to index
    %c0_42 = arith.constant 0 : index
    %c0_43 = arith.constant 0 : index
    %97 = vector.load %arg10[%96, %c0_42, %c0_43] : memref<8x1x2xf32, #tpu.memory_space<vmem>>, vector<1x1x2xf32>
    %98 = vector.shape_cast %97 : vector<1x1x2xf32> to vector<1x2xf32>
    %99 = vector.shape_cast %95 : vector<1x2xf32> to vector<1x1x2xf32>
    tpu.vector_store %arg10[%96, %c0_42, %c0_43], %99 {strides = array<i32>} : memref<8x1x2xf32, #tpu.memory_space<vmem>>, vector<1x1x2xf32>,
    %c2_i32 = arith.constant 2 : i32
    %c7_i32_44 = arith.constant 7 : i32
    %100 = arith.subi %c7_i32_44, %c2_i32 : i32
    %101 = arith.index_cast %c2_i32 : i32 to index
    %c0_45 = arith.constant 0 : index
    %c0_46 = arith.constant 0 : index
    %102 = vector.load %arg7[%101, %c0_45, %c0_46] : memref<8x2x64xf32, #tpu.memory_space<vmem>>, vector<1x2x64xf32>
    %103 = vector.shape_cast %102 : vector<1x2x64xf32> to vector<2x64xf32>
    %104 = arith.index_cast %100 : i32 to index
    %c0_47 = arith.constant 0 : index
    %c0_48 = arith.constant 0 : index
    %105 = vector.load %arg8[%104, %c0_47, %c0_48] : memref<8x2x64xf32, #tpu.memory_space<vmem>>, vector<1x2x64xf32>
    %106 = vector.shape_cast %105 : vector<1x2x64xf32> to vector<2x64xf32>
    %107 = vector.shape_cast %103 : vector<2x64xf32> to vector<1x2x64xf32>
    %108 = vector.shape_cast %106 : vector<2x64xf32> to vector<1x2x64xf32>
    %109 = tpu.concatenate %107, %108 in 0 : vector<1x2x64xf32>, vector<1x2x64xf32> -> vector<2x2x64xf32>
    "tpu.trace_start"() <{level = 10 : i32, message = "dbh,dhg->dbg"}> : () -> ()
    %cst_49 = arith.constant dense<0.000000e+00> : vector<2x2x64xf32>
    %110 = tpu.matmul %87, %17, %cst_49 {dimension_numbers = #tpu.dot_dimension_numbers<[2], [1], [1], [2], [0, 0, 0, 1, 1, 2], [0], [0]>} : vector<2x2x16xf32>, vector<2x16x64xf32>, vector<2x2x64xf32> -> vector<2x2x64xf32>
    "tpu.trace_stop"() : () -> ()
    %111 = arith.addf %109, %110 : vector<2x2x64xf32>
    %112 = vector.extract_strided_slice %111 {offsets = [0, 0, 0], sizes = [2, 2, 48], strides = [1, 1, 1]} : vector<2x2x64xf32> to vector<2x2x48xf32>
    %113 = arith.negf %112 : vector<2x2x48xf32>
    %114 = math.exp %113 : vector<2x2x48xf32>
    %cst_50 = arith.constant 1.000000e+00 : f32
    %115 = vector.broadcast %cst_50 : f32 to vector<2x2x48xf32>
    %116 = arith.addf %115, %114 : vector<2x2x48xf32>
    %117 = arith.divf %115, %116 : vector<2x2x48xf32>
    %118 = vector.extract_strided_slice %111 {offsets = [0, 0, 48], sizes = [2, 2, 16], strides = [1, 1, 1]} : vector<2x2x64xf32> to vector<2x2x16xf32>
    %119 = math.tanh %118 : vector<2x2x16xf32>
    %120 = vector.extract_strided_slice %117 {offsets = [0, 0, 0], sizes = [2, 2, 16], strides = [1, 1, 1]} : vector<2x2x48xf32> to vector<2x2x16xf32>
    %121 = vector.extract_strided_slice %117 {offsets = [0, 0, 16], sizes = [2, 2, 16], strides = [1, 1, 1]} : vector<2x2x48xf32> to vector<2x2x16xf32>
    %122 = vector.extract_strided_slice %117 {offsets = [0, 0, 32], sizes = [2, 2, 16], strides = [1, 1, 1]} : vector<2x2x48xf32> to vector<2x2x16xf32>
    %123 = arith.mulf %121, %85 : vector<2x2x16xf32>
    %124 = arith.mulf %120, %119 : vector<2x2x16xf32>
    %125 = arith.addf %123, %124 : vector<2x2x16xf32>
    %126 = math.tanh %125 : vector<2x2x16xf32>
    %127 = arith.mulf %122, %126 : vector<2x2x16xf32>
    %128 = vector.extract_strided_slice %127 {offsets = [0, 0, 0], sizes = [1, 2, 16], strides = [1, 1, 1]} : vector<2x2x16xf32> to vector<1x2x16xf32>
    %cst_51 = arith.constant dense<0.000000e+00> : vector<1x2xf32>
    %129 = vector.multi_reduction <add>, %128, %cst_51 [2] : vector<1x2x16xf32> to vector<1x2xf32>
    %130 = arith.index_cast %c2_i32 : i32 to index
    %c0_52 = arith.constant 0 : index
    %c0_53 = arith.constant 0 : index
    %131 = vector.load %arg9[%130, %c0_52, %c0_53] : memref<8x1x2xf32, #tpu.memory_space<vmem>>, vector<1x1x2xf32>
    %132 = vector.shape_cast %131 : vector<1x1x2xf32> to vector<1x2xf32>
    %133 = vector.shape_cast %129 : vector<1x2xf32> to vector<1x1x2xf32>
    tpu.vector_store %arg9[%130, %c0_52, %c0_53], %133 {strides = array<i32>} : memref<8x1x2xf32, #tpu.memory_space<vmem>>, vector<1x1x2xf32>,
    %134 = vector.extract_strided_slice %127 {offsets = [1, 0, 0], sizes = [1, 2, 16], strides = [1, 1, 1]} : vector<2x2x16xf32> to vector<1x2x16xf32>
    %cst_54 = arith.constant dense<0.000000e+00> : vector<1x2xf32>
    %135 = vector.multi_reduction <add>, %134, %cst_54 [2] : vector<1x2x16xf32> to vector<1x2xf32>
    %136 = arith.index_cast %100 : i32 to index
    %c0_55 = arith.constant 0 : index
    %c0_56 = arith.constant 0 : index
    %137 = vector.load %arg10[%136, %c0_55, %c0_56] : memref<8x1x2xf32, #tpu.memory_space<vmem>>, vector<1x1x2xf32>
    %138 = vector.shape_cast %137 : vector<1x1x2xf32> to vector<1x2xf32>
    %139 = vector.shape_cast %135 : vector<1x2xf32> to vector<1x1x2xf32>
    tpu.vector_store %arg10[%136, %c0_55, %c0_56], %139 {strides = array<i32>} : memref<8x1x2xf32, #tpu.memory_space<vmem>>, vector<1x1x2xf32>,
    %c3_i32 = arith.constant 3 : i32
    %c7_i32_57 = arith.constant 7 : i32
    %140 = arith.subi %c7_i32_57, %c3_i32 : i32
    %141 = arith.index_cast %c3_i32 : i32 to index
    %c0_58 = arith.constant 0 : index
    %c0_59 = arith.constant 0 : index
    %142 = vector.load %arg7[%141, %c0_58, %c0_59] : memref<8x2x64xf32, #tpu.memory_space<vmem>>, vector<1x2x64xf32>
    %143 = vector.shape_cast %142 : vector<1x2x64xf32> to vector<2x64xf32>
    %144 = arith.index_cast %140 : i32 to index
    %c0_60 = arith.constant 0 : index
    %c0_61 = arith.constant 0 : index
    %145 = vector.load %arg8[%144, %c0_60, %c0_61] : memref<8x2x64xf32, #tpu.memory_space<vmem>>, vector<1x2x64xf32>
    %146 = vector.shape_cast %145 : vector<1x2x64xf32> to vector<2x64xf32>
    %147 = vector.shape_cast %143 : vector<2x64xf32> to vector<1x2x64xf32>
    %148 = vector.shape_cast %146 : vector<2x64xf32> to vector<1x2x64xf32>
    %149 = tpu.concatenate %147, %148 in 0 : vector<1x2x64xf32>, vector<1x2x64xf32> -> vector<2x2x64xf32>
    "tpu.trace_start"() <{level = 10 : i32, message = "dbh,dhg->dbg"}> : () -> ()
    %cst_62 = arith.constant dense<0.000000e+00> : vector<2x2x64xf32>
    %150 = tpu.matmul %127, %17, %cst_62 {dimension_numbers = #tpu.dot_dimension_numbers<[2], [1], [1], [2], [0, 0, 0, 1, 1, 2], [0], [0]>} : vector<2x2x16xf32>, vector<2x16x64xf32>, vector<2x2x64xf32> -> vector<2x2x64xf32>
    "tpu.trace_stop"() : () -> ()
    %151 = arith.addf %149, %150 : vector<2x2x64xf32>
    %152 = vector.extract_strided_slice %151 {offsets = [0, 0, 0], sizes = [2, 2, 48], strides = [1, 1, 1]} : vector<2x2x64xf32> to vector<2x2x48xf32>
    %153 = arith.negf %152 : vector<2x2x48xf32>
    %154 = math.exp %153 : vector<2x2x48xf32>
    %cst_63 = arith.constant 1.000000e+00 : f32
    %155 = vector.broadcast %cst_63 : f32 to vector<2x2x48xf32>
    %156 = arith.addf %155, %154 : vector<2x2x48xf32>
    %157 = arith.divf %155, %156 : vector<2x2x48xf32>
    %158 = vector.extract_strided_slice %151 {offsets = [0, 0, 48], sizes = [2, 2, 16], strides = [1, 1, 1]} : vector<2x2x64xf32> to vector<2x2x16xf32>
    %159 = math.tanh %158 : vector<2x2x16xf32>
    %160 = vector.extract_strided_slice %157 {offsets = [0, 0, 0], sizes = [2, 2, 16], strides = [1, 1, 1]} : vector<2x2x48xf32> to vector<2x2x16xf32>
    %161 = vector.extract_strided_slice %157 {offsets = [0, 0, 16], sizes = [2, 2, 16], strides = [1, 1, 1]} : vector<2x2x48xf32> to vector<2x2x16xf32>
    %162 = vector.extract_strided_slice %157 {offsets = [0, 0, 32], sizes = [2, 2, 16], strides = [1, 1, 1]} : vector<2x2x48xf32> to vector<2x2x16xf32>
    %163 = arith.mulf %161, %125 : vector<2x2x16xf32>
    %164 = arith.mulf %160, %159 : vector<2x2x16xf32>
    %165 = arith.addf %163, %164 : vector<2x2x16xf32>
    %166 = math.tanh %165 : vector<2x2x16xf32>
    %167 = arith.mulf %162, %166 : vector<2x2x16xf32>
    %168 = vector.extract_strided_slice %167 {offsets = [0, 0, 0], sizes = [1, 2, 16], strides = [1, 1, 1]} : vector<2x2x16xf32> to vector<1x2x16xf32>
    %cst_64 = arith.constant dense<0.000000e+00> : vector<1x2xf32>
    %169 = vector.multi_reduction <add>, %168, %cst_64 [2] : vector<1x2x16xf32> to vector<1x2xf32>
    %170 = arith.index_cast %c3_i32 : i32 to index
    %c0_65 = arith.constant 0 : index
    %c0_66 = arith.constant 0 : index
    %171 = vector.load %arg9[%170, %c0_65, %c0_66] : memref<8x1x2xf32, #tpu.memory_space<vmem>>, vector<1x1x2xf32>
    %172 = vector.shape_cast %171 : vector<1x1x2xf32> to vector<1x2xf32>
    %173 = vector.shape_cast %169 : vector<1x2xf32> to vector<1x1x2xf32>
    tpu.vector_store %arg9[%170, %c0_65, %c0_66], %173 {strides = array<i32>} : memref<8x1x2xf32, #tpu.memory_space<vmem>>, vector<1x1x2xf32>,
    %174 = vector.extract_strided_slice %167 {offsets = [1, 0, 0], sizes = [1, 2, 16], strides = [1, 1, 1]} : vector<2x2x16xf32> to vector<1x2x16xf32>
    %cst_67 = arith.constant dense<0.000000e+00> : vector<1x2xf32>
    %175 = vector.multi_reduction <add>, %174, %cst_67 [2] : vector<1x2x16xf32> to vector<1x2xf32>
    %176 = arith.index_cast %140 : i32 to index
    %c0_68 = arith.constant 0 : index
    %c0_69 = arith.constant 0 : index
    %177 = vector.load %arg10[%176, %c0_68, %c0_69] : memref<8x1x2xf32, #tpu.memory_space<vmem>>, vector<1x1x2xf32>
    %178 = vector.shape_cast %177 : vector<1x1x2xf32> to vector<1x2xf32>
    %179 = vector.shape_cast %175 : vector<1x2xf32> to vector<1x1x2xf32>
    tpu.vector_store %arg10[%176, %c0_68, %c0_69], %179 {strides = array<i32>} : memref<8x1x2xf32, #tpu.memory_space<vmem>>, vector<1x1x2xf32>,
    %c4_i32 = arith.constant 4 : i32
    %c7_i32_70 = arith.constant 7 : i32
    %180 = arith.subi %c7_i32_70, %c4_i32 : i32
    %181 = arith.index_cast %c4_i32 : i32 to index
    %c0_71 = arith.constant 0 : index
    %c0_72 = arith.constant 0 : index
    %182 = vector.load %arg7[%181, %c0_71, %c0_72] : memref<8x2x64xf32, #tpu.memory_space<vmem>>, vector<1x2x64xf32>
    %183 = vector.shape_cast %182 : vector<1x2x64xf32> to vector<2x64xf32>
    %184 = arith.index_cast %180 : i32 to index
    %c0_73 = arith.constant 0 : index
    %c0_74 = arith.constant 0 : index
    %185 = vector.load %arg8[%184, %c0_73, %c0_74] : memref<8x2x64xf32, #tpu.memory_space<vmem>>, vector<1x2x64xf32>
    %186 = vector.shape_cast %185 : vector<1x2x64xf32> to vector<2x64xf32>
    %187 = vector.shape_cast %183 : vector<2x64xf32> to vector<1x2x64xf32>
    %188 = vector.shape_cast %186 : vector<2x64xf32> to vector<1x2x64xf32>
    %189 = tpu.concatenate %187, %188 in 0 : vector<1x2x64xf32>, vector<1x2x64xf32> -> vector<2x2x64xf32>
    "tpu.trace_start"() <{level = 10 : i32, message = "dbh,dhg->dbg"}> : () -> ()
    %cst_75 = arith.constant dense<0.000000e+00> : vector<2x2x64xf32>
    %190 = tpu.matmul %167, %17, %cst_75 {dimension_numbers = #tpu.dot_dimension_numbers<[2], [1], [1], [2], [0, 0, 0, 1, 1, 2], [0], [0]>} : vector<2x2x16xf32>, vector<2x16x64xf32>, vector<2x2x64xf32> -> vector<2x2x64xf32>
    "tpu.trace_stop"() : () -> ()
    %191 = arith.addf %189, %190 : vector<2x2x64xf32>
    %192 = vector.extract_strided_slice %191 {offsets = [0, 0, 0], sizes = [2, 2, 48], strides = [1, 1, 1]} : vector<2x2x64xf32> to vector<2x2x48xf32>
    %193 = arith.negf %192 : vector<2x2x48xf32>
    %194 = math.exp %193 : vector<2x2x48xf32>
    %cst_76 = arith.constant 1.000000e+00 : f32
    %195 = vector.broadcast %cst_76 : f32 to vector<2x2x48xf32>
    %196 = arith.addf %195, %194 : vector<2x2x48xf32>
    %197 = arith.divf %195, %196 : vector<2x2x48xf32>
    %198 = vector.extract_strided_slice %191 {offsets = [0, 0, 48], sizes = [2, 2, 16], strides = [1, 1, 1]} : vector<2x2x64xf32> to vector<2x2x16xf32>
    %199 = math.tanh %198 : vector<2x2x16xf32>
    %200 = vector.extract_strided_slice %197 {offsets = [0, 0, 0], sizes = [2, 2, 16], strides = [1, 1, 1]} : vector<2x2x48xf32> to vector<2x2x16xf32>
    %201 = vector.extract_strided_slice %197 {offsets = [0, 0, 16], sizes = [2, 2, 16], strides = [1, 1, 1]} : vector<2x2x48xf32> to vector<2x2x16xf32>
    %202 = vector.extract_strided_slice %197 {offsets = [0, 0, 32], sizes = [2, 2, 16], strides = [1, 1, 1]} : vector<2x2x48xf32> to vector<2x2x16xf32>
    %203 = arith.mulf %201, %165 : vector<2x2x16xf32>
    %204 = arith.mulf %200, %199 : vector<2x2x16xf32>
    %205 = arith.addf %203, %204 : vector<2x2x16xf32>
    %206 = math.tanh %205 : vector<2x2x16xf32>
    %207 = arith.mulf %202, %206 : vector<2x2x16xf32>
    %208 = vector.extract_strided_slice %207 {offsets = [0, 0, 0], sizes = [1, 2, 16], strides = [1, 1, 1]} : vector<2x2x16xf32> to vector<1x2x16xf32>
    %cst_77 = arith.constant dense<0.000000e+00> : vector<1x2xf32>
    %209 = vector.multi_reduction <add>, %208, %cst_77 [2] : vector<1x2x16xf32> to vector<1x2xf32>
    %210 = arith.index_cast %c4_i32 : i32 to index
    %c0_78 = arith.constant 0 : index
    %c0_79 = arith.constant 0 : index
    %211 = vector.load %arg9[%210, %c0_78, %c0_79] : memref<8x1x2xf32, #tpu.memory_space<vmem>>, vector<1x1x2xf32>
    %212 = vector.shape_cast %211 : vector<1x1x2xf32> to vector<1x2xf32>
    %213 = vector.shape_cast %209 : vector<1x2xf32> to vector<1x1x2xf32>
    tpu.vector_store %arg9[%210, %c0_78, %c0_79], %213 {strides = array<i32>} : memref<8x1x2xf32, #tpu.memory_space<vmem>>, vector<1x1x2xf32>,
    %214 = vector.extract_strided_slice %207 {offsets = [1, 0, 0], sizes = [1, 2, 16], strides = [1, 1, 1]} : vector<2x2x16xf32> to vector<1x2x16xf32>
    %cst_80 = arith.constant dense<0.000000e+00> : vector<1x2xf32>
    %215 = vector.multi_reduction <add>, %214, %cst_80 [2] : vector<1x2x16xf32> to vector<1x2xf32>
    %216 = arith.index_cast %180 : i32 to index
    %c0_81 = arith.constant 0 : index
    %c0_82 = arith.constant 0 : index
    %217 = vector.load %arg10[%216, %c0_81, %c0_82] : memref<8x1x2xf32, #tpu.memory_space<vmem>>, vector<1x1x2xf32>
    %218 = vector.shape_cast %217 : vector<1x1x2xf32> to vector<1x2xf32>
    %219 = vector.shape_cast %215 : vector<1x2xf32> to vector<1x1x2xf32>
    tpu.vector_store %arg10[%216, %c0_81, %c0_82], %219 {strides = array<i32>} : memref<8x1x2xf32, #tpu.memory_space<vmem>>, vector<1x1x2xf32>,
    %c5_i32 = arith.constant 5 : i32
    %c7_i32_83 = arith.constant 7 : i32
    %220 = arith.subi %c7_i32_83, %c5_i32 : i32
    %221 = arith.index_cast %c5_i32 : i32 to index
    %c0_84 = arith.constant 0 : index
    %c0_85 = arith.constant 0 : index
    %222 = vector.load %arg7[%221, %c0_84, %c0_85] : memref<8x2x64xf32, #tpu.memory_space<vmem>>, vector<1x2x64xf32>
    %223 = vector.shape_cast %222 : vector<1x2x64xf32> to vector<2x64xf32>
    %224 = arith.index_cast %220 : i32 to index
    %c0_86 = arith.constant 0 : index
    %c0_87 = arith.constant 0 : index
    %225 = vector.load %arg8[%224, %c0_86, %c0_87] : memref<8x2x64xf32, #tpu.memory_space<vmem>>, vector<1x2x64xf32>
    %226 = vector.shape_cast %225 : vector<1x2x64xf32> to vector<2x64xf32>
    %227 = vector.shape_cast %223 : vector<2x64xf32> to vector<1x2x64xf32>
    %228 = vector.shape_cast %226 : vector<2x64xf32> to vector<1x2x64xf32>
    %229 = tpu.concatenate %227, %228 in 0 : vector<1x2x64xf32>, vector<1x2x64xf32> -> vector<2x2x64xf32>
    "tpu.trace_start"() <{level = 10 : i32, message = "dbh,dhg->dbg"}> : () -> ()
    %cst_88 = arith.constant dense<0.000000e+00> : vector<2x2x64xf32>
    %230 = tpu.matmul %207, %17, %cst_88 {dimension_numbers = #tpu.dot_dimension_numbers<[2], [1], [1], [2], [0, 0, 0, 1, 1, 2], [0], [0]>} : vector<2x2x16xf32>, vector<2x16x64xf32>, vector<2x2x64xf32> -> vector<2x2x64xf32>
    "tpu.trace_stop"() : () -> ()
    %231 = arith.addf %229, %230 : vector<2x2x64xf32>
    %232 = vector.extract_strided_slice %231 {offsets = [0, 0, 0], sizes = [2, 2, 48], strides = [1, 1, 1]} : vector<2x2x64xf32> to vector<2x2x48xf32>
    %233 = arith.negf %232 : vector<2x2x48xf32>
    %234 = math.exp %233 : vector<2x2x48xf32>
    %cst_89 = arith.constant 1.000000e+00 : f32
    %235 = vector.broadcast %cst_89 : f32 to vector<2x2x48xf32>
    %236 = arith.addf %235, %234 : vector<2x2x48xf32>
    %237 = arith.divf %235, %236 : vector<2x2x48xf32>
    %238 = vector.extract_strided_slice %231 {offsets = [0, 0, 48], sizes = [2, 2, 16], strides = [1, 1, 1]} : vector<2x2x64xf32> to vector<2x2x16xf32>
    %239 = math.tanh %238 : vector<2x2x16xf32>
    %240 = vector.extract_strided_slice %237 {offsets = [0, 0, 0], sizes = [2, 2, 16], strides = [1, 1, 1]} : vector<2x2x48xf32> to vector<2x2x16xf32>
    %241 = vector.extract_strided_slice %237 {offsets = [0, 0, 16], sizes = [2, 2, 16], strides = [1, 1, 1]} : vector<2x2x48xf32> to vector<2x2x16xf32>
    %242 = vector.extract_strided_slice %237 {offsets = [0, 0, 32], sizes = [2, 2, 16], strides = [1, 1, 1]} : vector<2x2x48xf32> to vector<2x2x16xf32>
    %243 = arith.mulf %241, %205 : vector<2x2x16xf32>
    %244 = arith.mulf %240, %239 : vector<2x2x16xf32>
    %245 = arith.addf %243, %244 : vector<2x2x16xf32>
    %246 = math.tanh %245 : vector<2x2x16xf32>
    %247 = arith.mulf %242, %246 : vector<2x2x16xf32>
    %248 = vector.extract_strided_slice %247 {offsets = [0, 0, 0], sizes = [1, 2, 16], strides = [1, 1, 1]} : vector<2x2x16xf32> to vector<1x2x16xf32>
    %cst_90 = arith.constant dense<0.000000e+00> : vector<1x2xf32>
    %249 = vector.multi_reduction <add>, %248, %cst_90 [2] : vector<1x2x16xf32> to vector<1x2xf32>
    %250 = arith.index_cast %c5_i32 : i32 to index
    %c0_91 = arith.constant 0 : index
    %c0_92 = arith.constant 0 : index
    %251 = vector.load %arg9[%250, %c0_91, %c0_92] : memref<8x1x2xf32, #tpu.memory_space<vmem>>, vector<1x1x2xf32>
    %252 = vector.shape_cast %251 : vector<1x1x2xf32> to vector<1x2xf32>
    %253 = vector.shape_cast %249 : vector<1x2xf32> to vector<1x1x2xf32>
    tpu.vector_store %arg9[%250, %c0_91, %c0_92], %253 {strides = array<i32>} : memref<8x1x2xf32, #tpu.memory_space<vmem>>, vector<1x1x2xf32>,
    %254 = vector.extract_strided_slice %247 {offsets = [1, 0, 0], sizes = [1, 2, 16], strides = [1, 1, 1]} : vector<2x2x16xf32> to vector<1x2x16xf32>
    %cst_93 = arith.constant dense<0.000000e+00> : vector<1x2xf32>
    %255 = vector.multi_reduction <add>, %254, %cst_93 [2] : vector<1x2x16xf32> to vector<1x2xf32>
    %256 = arith.index_cast %220 : i32 to index
    %c0_94 = arith.constant 0 : index
    %c0_95 = arith.constant 0 : index
    %257 = vector.load %arg10[%256, %c0_94, %c0_95] : memref<8x1x2xf32, #tpu.memory_space<vmem>>, vector<1x1x2xf32>
    %258 = vector.shape_cast %257 : vector<1x1x2xf32> to vector<1x2xf32>
    %259 = vector.shape_cast %255 : vector<1x2xf32> to vector<1x1x2xf32>
    tpu.vector_store %arg10[%256, %c0_94, %c0_95], %259 {strides = array<i32>} : memref<8x1x2xf32, #tpu.memory_space<vmem>>, vector<1x1x2xf32>,
    %c6_i32 = arith.constant 6 : i32
    %c7_i32_96 = arith.constant 7 : i32
    %260 = arith.subi %c7_i32_96, %c6_i32 : i32
    %261 = arith.index_cast %c6_i32 : i32 to index
    %c0_97 = arith.constant 0 : index
    %c0_98 = arith.constant 0 : index
    %262 = vector.load %arg7[%261, %c0_97, %c0_98] : memref<8x2x64xf32, #tpu.memory_space<vmem>>, vector<1x2x64xf32>
    %263 = vector.shape_cast %262 : vector<1x2x64xf32> to vector<2x64xf32>
    %264 = arith.index_cast %260 : i32 to index
    %c0_99 = arith.constant 0 : index
    %c0_100 = arith.constant 0 : index
    %265 = vector.load %arg8[%264, %c0_99, %c0_100] : memref<8x2x64xf32, #tpu.memory_space<vmem>>, vector<1x2x64xf32>
    %266 = vector.shape_cast %265 : vector<1x2x64xf32> to vector<2x64xf32>
    %267 = vector.shape_cast %263 : vector<2x64xf32> to vector<1x2x64xf32>
    %268 = vector.shape_cast %266 : vector<2x64xf32> to vector<1x2x64xf32>
    %269 = tpu.concatenate %267, %268 in 0 : vector<1x2x64xf32>, vector<1x2x64xf32> -> vector<2x2x64xf32>
    "tpu.trace_start"() <{level = 10 : i32, message = "dbh,dhg->dbg"}> : () -> ()
    %cst_101 = arith.constant dense<0.000000e+00> : vector<2x2x64xf32>
    %270 = tpu.matmul %247, %17, %cst_101 {dimension_numbers = #tpu.dot_dimension_numbers<[2], [1], [1], [2], [0, 0, 0, 1, 1, 2], [0], [0]>} : vector<2x2x16xf32>, vector<2x16x64xf32>, vector<2x2x64xf32> -> vector<2x2x64xf32>
    "tpu.trace_stop"() : () -> ()
    %271 = arith.addf %269, %270 : vector<2x2x64xf32>
    %272 = vector.extract_strided_slice %271 {offsets = [0, 0, 0], sizes = [2, 2, 48], strides = [1, 1, 1]} : vector<2x2x64xf32> to vector<2x2x48xf32>
    %273 = arith.negf %272 : vector<2x2x48xf32>
    %274 = math.exp %273 : vector<2x2x48xf32>
    %cst_102 = arith.constant 1.000000e+00 : f32
    %275 = vector.broadcast %cst_102 : f32 to vector<2x2x48xf32>
    %276 = arith.addf %275, %274 : vector<2x2x48xf32>
    %277 = arith.divf %275, %276 : vector<2x2x48xf32>
    %278 = vector.extract_strided_slice %271 {offsets = [0, 0, 48], sizes = [2, 2, 16], strides = [1, 1, 1]} : vector<2x2x64xf32> to vector<2x2x16xf32>
    %279 = math.tanh %278 : vector<2x2x16xf32>
    %280 = vector.extract_strided_slice %277 {offsets = [0, 0, 0], sizes = [2, 2, 16], strides = [1, 1, 1]} : vector<2x2x48xf32> to vector<2x2x16xf32>
    %281 = vector.extract_strided_slice %277 {offsets = [0, 0, 16], sizes = [2, 2, 16], strides = [1, 1, 1]} : vector<2x2x48xf32> to vector<2x2x16xf32>
    %282 = vector.extract_strided_slice %277 {offsets = [0, 0, 32], sizes = [2, 2, 16], strides = [1, 1, 1]} : vector<2x2x48xf32> to vector<2x2x16xf32>
    %283 = arith.mulf %281, %245 : vector<2x2x16xf32>
    %284 = arith.mulf %280, %279 : vector<2x2x16xf32>
    %285 = arith.addf %283, %284 : vector<2x2x16xf32>
    %286 = math.tanh %285 : vector<2x2x16xf32>
    %287 = arith.mulf %282, %286 : vector<2x2x16xf32>
    %288 = vector.extract_strided_slice %287 {offsets = [0, 0, 0], sizes = [1, 2, 16], strides = [1, 1, 1]} : vector<2x2x16xf32> to vector<1x2x16xf32>
    %cst_103 = arith.constant dense<0.000000e+00> : vector<1x2xf32>
    %289 = vector.multi_reduction <add>, %288, %cst_103 [2] : vector<1x2x16xf32> to vector<1x2xf32>
    %290 = arith.index_cast %c6_i32 : i32 to index
    %c0_104 = arith.constant 0 : index
    %c0_105 = arith.constant 0 : index
    %291 = vector.load %arg9[%290, %c0_104, %c0_105] : memref<8x1x2xf32, #tpu.memory_space<vmem>>, vector<1x1x2xf32>
    %292 = vector.shape_cast %291 : vector<1x1x2xf32> to vector<1x2xf32>
    %293 = vector.shape_cast %289 : vector<1x2xf32> to vector<1x1x2xf32>
    tpu.vector_store %arg9[%290, %c0_104, %c0_105], %293 {strides = array<i32>} : memref<8x1x2xf32, #tpu.memory_space<vmem>>, vector<1x1x2xf32>,
    %294 = vector.extract_strided_slice %287 {offsets = [1, 0, 0], sizes = [1, 2, 16], strides = [1, 1, 1]} : vector<2x2x16xf32> to vector<1x2x16xf32>
    %cst_106 = arith.constant dense<0.000000e+00> : vector<1x2xf32>
    %295 = vector.multi_reduction <add>, %294, %cst_106 [2] : vector<1x2x16xf32> to vector<1x2xf32>
    %296 = arith.index_cast %260 : i32 to index
    %c0_107 = arith.constant 0 : index
    %c0_108 = arith.constant 0 : index
    %297 = vector.load %arg10[%296, %c0_107, %c0_108] : memref<8x1x2xf32, #tpu.memory_space<vmem>>, vector<1x1x2xf32>
    %298 = vector.shape_cast %297 : vector<1x1x2xf32> to vector<1x2xf32>
    %299 = vector.shape_cast %295 : vector<1x2xf32> to vector<1x1x2xf32>
    tpu.vector_store %arg10[%296, %c0_107, %c0_108], %299 {strides = array<i32>} : memref<8x1x2xf32, #tpu.memory_space<vmem>>, vector<1x1x2xf32>,
    %c7_i32_109 = arith.constant 7 : i32
    %c7_i32_110 = arith.constant 7 : i32
    %300 = arith.subi %c7_i32_110, %c7_i32_109 : i32
    %301 = arith.index_cast %c7_i32_109 : i32 to index
    %c0_111 = arith.constant 0 : index
    %c0_112 = arith.constant 0 : index
    %302 = vector.load %arg7[%301, %c0_111, %c0_112] : memref<8x2x64xf32, #tpu.memory_space<vmem>>, vector<1x2x64xf32>
    %303 = vector.shape_cast %302 : vector<1x2x64xf32> to vector<2x64xf32>
    %304 = arith.index_cast %300 : i32 to index
    %c0_113 = arith.constant 0 : index
    %c0_114 = arith.constant 0 : index
    %305 = vector.load %arg8[%304, %c0_113, %c0_114] : memref<8x2x64xf32, #tpu.memory_space<vmem>>, vector<1x2x64xf32>
    %306 = vector.shape_cast %305 : vector<1x2x64xf32> to vector<2x64xf32>
    %307 = vector.shape_cast %303 : vector<2x64xf32> to vector<1x2x64xf32>
    %308 = vector.shape_cast %306 : vector<2x64xf32> to vector<1x2x64xf32>
    %309 = tpu.concatenate %307, %308 in 0 : vector<1x2x64xf32>, vector<1x2x64xf32> -> vector<2x2x64xf32>
    "tpu.trace_start"() <{level = 10 : i32, message = "dbh,dhg->dbg"}> : () -> ()
    %cst_115 = arith.constant dense<0.000000e+00> : vector<2x2x64xf32>
    %310 = tpu.matmul %287, %17, %cst_115 {dimension_numbers = #tpu.dot_dimension_numbers<[2], [1], [1], [2], [0, 0, 0, 1, 1, 2], [0], [0]>} : vector<2x2x16xf32>, vector<2x16x64xf32>, vector<2x2x64xf32> -> vector<2x2x64xf32>
    "tpu.trace_stop"() : () -> ()
    %311 = arith.addf %309, %310 : vector<2x2x64xf32>
    %312 = vector.extract_strided_slice %311 {offsets = [0, 0, 0], sizes = [2, 2, 48], strides = [1, 1, 1]} : vector<2x2x64xf32> to vector<2x2x48xf32>
    %313 = arith.negf %312 : vector<2x2x48xf32>
    %314 = math.exp %313 : vector<2x2x48xf32>
    %cst_116 = arith.constant 1.000000e+00 : f32
    %315 = vector.broadcast %cst_116 : f32 to vector<2x2x48xf32>
    %316 = arith.addf %315, %314 : vector<2x2x48xf32>
    %317 = arith.divf %315, %316 : vector<2x2x48xf32>
    %318 = vector.extract_strided_slice %311 {offsets = [0, 0, 48], sizes = [2, 2, 16], strides = [1, 1, 1]} : vector<2x2x64xf32> to vector<2x2x16xf32>
    %319 = math.tanh %318 : vector<2x2x16xf32>
    %320 = vector.extract_strided_slice %317 {offsets = [0, 0, 0], sizes = [2, 2, 16], strides = [1, 1, 1]} : vector<2x2x48xf32> to vector<2x2x16xf32>
    %321 = vector.extract_strided_slice %317 {offsets = [0, 0, 16], sizes = [2, 2, 16], strides = [1, 1, 1]} : vector<2x2x48xf32> to vector<2x2x16xf32>
    %322 = vector.extract_strided_slice %317 {offsets = [0, 0, 32], sizes = [2, 2, 16], strides = [1, 1, 1]} : vector<2x2x48xf32> to vector<2x2x16xf32>
    %323 = arith.mulf %321, %285 : vector<2x2x16xf32>
    %324 = arith.mulf %320, %319 : vector<2x2x16xf32>
    %325 = arith.addf %323, %324 : vector<2x2x16xf32>
    %326 = math.tanh %325 : vector<2x2x16xf32>
    %327 = arith.mulf %322, %326 : vector<2x2x16xf32>
    %328 = vector.extract_strided_slice %327 {offsets = [0, 0, 0], sizes = [1, 2, 16], strides = [1, 1, 1]} : vector<2x2x16xf32> to vector<1x2x16xf32>
    %cst_117 = arith.constant dense<0.000000e+00> : vector<1x2xf32>
    %329 = vector.multi_reduction <add>, %328, %cst_117 [2] : vector<1x2x16xf32> to vector<1x2xf32>
    %330 = arith.index_cast %c7_i32_109 : i32 to index
    %c0_118 = arith.constant 0 : index
    %c0_119 = arith.constant 0 : index
    %331 = vector.load %arg9[%330, %c0_118, %c0_119] : memref<8x1x2xf32, #tpu.memory_space<vmem>>, vector<1x1x2xf32>
    %332 = vector.shape_cast %331 : vector<1x1x2xf32> to vector<1x2xf32>
    %333 = vector.shape_cast %329 : vector<1x2xf32> to vector<1x1x2xf32>
    tpu.vector_store %arg9[%330, %c0_118, %c0_119], %333 {strides = array<i32>} : memref<8x1x2xf32, #tpu.memory_space<vmem>>, vector<1x1x2xf32>,
    %334 = vector.extract_strided_slice %327 {offsets = [1, 0, 0], sizes = [1, 2, 16], strides = [1, 1, 1]} : vector<2x2x16xf32> to vector<1x2x16xf32>
    %cst_120 = arith.constant dense<0.000000e+00> : vector<1x2xf32>
    %335 = vector.multi_reduction <add>, %334, %cst_120 [2] : vector<1x2x16xf32> to vector<1x2xf32>
    %336 = arith.index_cast %300 : i32 to index
    %c0_121 = arith.constant 0 : index
    %c0_122 = arith.constant 0 : index
    %337 = vector.load %arg10[%336, %c0_121, %c0_122] : memref<8x1x2xf32, #tpu.memory_space<vmem>>, vector<1x1x2xf32>
    %338 = vector.shape_cast %337 : vector<1x1x2xf32> to vector<1x2xf32>
    %339 = vector.shape_cast %335 : vector<1x2xf32> to vector<1x1x2xf32>
    tpu.vector_store %arg10[%336, %c0_121, %c0_122], %339 {strides = array<i32>} : memref<8x1x2xf32, #tpu.memory_space<vmem>>, vector<1x1x2xf32>,
    %c8_i32 = arith.constant 8 : i32
    %c0_123 = arith.constant 0 : index
    %c0_124 = arith.constant 0 : index
    %c0_125 = arith.constant 0 : index
    %340 = vector.load %arg9[%c0_123, %c0_124, %c0_125] : memref<8x1x2xf32, #tpu.memory_space<vmem>>, vector<8x1x2xf32>
    %c0_126 = arith.constant 0 : index
    %c0_127 = arith.constant 0 : index
    %c0_128 = arith.constant 0 : index
    %341 = vector.load %arg10[%c0_126, %c0_127, %c0_128] : memref<8x1x2xf32, #tpu.memory_space<vmem>>, vector<8x1x2xf32>
    %342 = arith.addf %340, %341 : vector<8x1x2xf32>
    %343 = vector.shape_cast %342 : vector<8x1x2xf32> to vector<8x2xf32>
    %cst_129 = arith.constant dense<0xFF800000> : vector<2xf32>
    %344 = vector.multi_reduction <maximumf>, %343, %cst_129 [0] : vector<8x2xf32> to vector<2xf32>
    %345 = vector.shape_cast %344 : vector<2xf32> to vector<1x2xf32>
    %346 = vector.broadcast %345 : vector<1x2xf32> to vector<8x2xf32>
    %347 = arith.subf %343, %346 : vector<8x2xf32>
    %348 = math.exp %347 : vector<8x2xf32>
    %cst_130 = arith.constant dense<0.000000e+00> : vector<2xf32>
    %349 = vector.multi_reduction <add>, %348, %cst_130 [0] : vector<8x2xf32> to vector<2xf32>
    %350 = vector.shape_cast %349 : vector<2xf32> to vector<1x2xf32>
    %351 = vector.broadcast %350 : vector<1x2xf32> to vector<8x2xf32>
    %352 = arith.divf %348, %351 : vector<8x2xf32>
    %353 = tpu.transpose %352, [1, 0] : vector<8x2xf32> -> vector<2x8xf32>
    %354 = vector.shape_cast %353 : vector<2x8xf32> to vector<2x8x1xf32>
    %355 = vector.broadcast %354 : vector<2x8x1xf32> to vector<2x8x32xf32>
    %356 = arith.mulf %0, %355 : vector<2x8x32xf32>
    %cst_131 = arith.constant dense<0.000000e+00> : vector<2x32xf32>
    %357 = vector.multi_reduction <add>, %356, %cst_131 [1] : vector<2x8x32xf32> to vector<2x32xf32>
    %c0_132 = arith.constant 0 : index
    %c0_133 = arith.constant 0 : index
    %358 = vector.load %arg6[%c0_132, %c0_133] : memref<2x32xf32, #tpu.memory_space<vmem>>, vector<2x32xf32>
    tpu.vector_store %arg6[%c0_132, %c0_133], %357 {strides = array<i32>} : memref<2x32xf32, #tpu.memory_space<vmem>>, vector<2x32xf32>,
    return
  }
  func.func @transform_0(%arg0: i32) -> (i32, i32, i32) {
    %c0_i32 = arith.constant 0 : i32
    %c0_i32_0 = arith.constant 0 : i32
    %c0_i32_1 = arith.constant 0 : i32
    return %arg0, %c0_i32, %c0_i32_0 : i32, i32, i32
  }
  func.func @transform_1(%arg0: i32) -> (i32, i32) {
    %c0_i32 = arith.constant 0 : i32
    %c0_i32_0 = arith.constant 0 : i32
    return %arg0, %c0_i32 : i32, i32
  }
  func.func @transform_2(%arg0: i32) -> (i32, i32) {
    %c0_i32 = arith.constant 0 : i32
    %c0_i32_0 = arith.constant 0 : i32
    %c0_i32_1 = arith.constant 0 : i32
    return %c0_i32, %c0_i32_0 : i32, i32
  }
  func.func @transform_3(%arg0: i32) -> (i32, i32) {
    %c0_i32 = arith.constant 0 : i32
    %c0_i32_0 = arith.constant 0 : i32
    %c0_i32_1 = arith.constant 0 : i32
    return %c0_i32, %c0_i32_0 : i32, i32
  }
  func.func @transform_4(%arg0: i32) -> (i32, i32, i32) {
    %c0_i32 = arith.constant 0 : i32
    %c0_i32_0 = arith.constant 0 : i32
    %c0_i32_1 = arith.constant 0 : i32
    %c0_i32_2 = arith.constant 0 : i32
    return %c0_i32, %c0_i32_0, %c0_i32_1 : i32, i32, i32
  }
  func.func @transform_5(%arg0: i32) -> (i32, i32) {
    %c0_i32 = arith.constant 0 : i32
    %c0_i32_0 = arith.constant 0 : i32
    return %arg0, %c0_i32 : i32, i32
  }
}

</mosaic_0001>

<llo_original>
// kernel: tpu_custom_call.1
$region0: #{tpu_custom_call.1}
  #allocation0 [shape = 'u32[]', space=smem, size = 0x4, offset = 0x4, fixed_abs, tag = 'smem constant byte address 0x4 - core index']
  #allocation1 [shape = 'u32[144,128]{1,0:T(1,128)}', space=vmem, size = 0x12000, scoped, tag = 'internal scratch']
  #allocation2 [shape = 'f32[8,2,64]{2,1,0:T(2,128)}', space=vmem, size = 0x2000, scoped, tag = 'scratch operand']
  #allocation3 [shape = 'f32[8,2,64]{2,1,0:T(2,128)}', space=vmem, size = 0x2000, scoped, tag = 'scratch operand']
  #allocation4 [shape = 'f32[8,1,2]{2,1,0:T(1,128)}', space=vmem, size = 0x1000, scoped, tag = 'scratch operand']
  #allocation5 [shape = 'f32[8,1,2]{2,1,0:T(1,128)}', space=vmem, size = 0x1000, scoped, tag = 'scratch operand']
  %s0 = inlined_call_operand.hbm [shape: f32[2,8,32], index: 0, kind: input, shape index: {}]
  %s1 = inlined_call_operand.vmem [shape: f32[2,32], index: 1, kind: input, shape index: {}]
  %s2 = inlined_call_operand.hbm [shape: f32[32,128], index: 2, kind: input, shape index: {}]
  %s3 = inlined_call_operand.vmem [shape: f32[1,128], index: 3, kind: input, shape index: {}]
  %s4 = inlined_call_operand.hbm [shape: f32[2,16,64], index: 4, kind: input, shape index: {}]
  %s5 = inlined_call_operand.hbm [shape: f32[2,32], index: 5, kind: output, shape index: {}]
  %s6 = sld [smem:[#allocation0]]
  $region42: #{tpu_custom_call.1} parent=0
    _
  %s8 = ssub.s32 1, %s6
  %s9 = scalar_select 0, %s8, %s6
  $region1: #{tpu_custom_call.1} parent=0
    #allocation6 [shape = 'u8[8192]{0}', space=vmem, size = 0x2000, scoped, tag = 'input window, operand 0, single buffered']
    #allocation7 [shape = 's32[1]{0}', space=sflag, size = 0x4, scoped, tag = 'scoped memory for tpu_custom_call.1']
    #allocation8 [shape = 's32[1]{0}', space=sflag, size = 0x4, scoped, tag = 'scoped memory for tpu_custom_call.1']
    #allocation9 [shape = 'u8[16384]{0}', space=vmem, size = 0x4000, scoped, tag = 'input window, operand 2, single buffered']
    #allocation10 [shape = 's32[1]{0}', space=sflag, size = 0x4, scoped, tag = 'scoped memory for tpu_custom_call.1']
    #allocation11 [shape = 'u8[16384]{0}', space=vmem, size = 0x4000, scoped, tag = 'input window, operand 4, single buffered']
    #allocation12 [shape = 'u8[1024]{0}', space=vmem, size = 0x400, scoped, tag = 'output window, operand 0, single buffered']
    %10 = vsyncpa [#allocation7], 0
    %11 = vsyncpa [#allocation10], 0
    %12 = vsyncpa [#allocation8], 0
    // Predicated region
    $region2: #{tpu_custom_call.1} parent=1 // pred_check
      _
    $region3: #{tpu_custom_call.1} parent=1 // pred_check_branch
      %14 = sbr.rel (0) target = $region5
    $region4: #{tpu_custom_call.1} parent=1 // pred_region
      %s16 = ssub.s32 256, 256
      %17 = vsyncadd [#allocation7], %s16
      %s18 = sshll.u32 [#allocation6], 4
      %s19 = int_to_ptr.vmem [resolvable:$true] %s18
      %24 = dma.hbm_to_vmem [thread:$0]  %s0, 256, %s19, [#allocation7], 128, 128, 8
    $region5: #{tpu_custom_call.1} parent=1 // pred_fallthru
      _
    // Predicated region
    $region6: #{tpu_custom_call.1} parent=1 // pred_check
      _
    $region7: #{tpu_custom_call.1} parent=1 // pred_check_branch
      %26 = sbr.rel (0) target = $region9
    $region8: #{tpu_custom_call.1} parent=1 // pred_region
      _
    $region9: #{tpu_custom_call.1} parent=1 // pred_fallthru
      _
    // Predicated region
    $region10: #{tpu_custom_call.1} parent=1 // pred_check
      _
    $region11: #{tpu_custom_call.1} parent=1 // pred_check_branch
      %28 = sbr.rel (0) target = $region13
    $region12: #{tpu_custom_call.1} parent=1 // pred_region
      %s30 = ssub.s32 512, 512
      %31 = vsyncadd [#allocation10], %s30
      %s32 = sshll.u32 [#allocation9], 4
      %s33 = int_to_ptr.vmem [resolvable:$true] %s32
      %38 = dma.hbm_to_vmem [thread:$0]  %s2, 512, %s33, [#allocation10], 128, 128, 8
    $region13: #{tpu_custom_call.1} parent=1 // pred_fallthru
      _
    // Predicated region
    $region14: #{tpu_custom_call.1} parent=1 // pred_check
      _
    $region15: #{tpu_custom_call.1} parent=1 // pred_check_branch
      %40 = sbr.rel (0) target = $region17
    $region16: #{tpu_custom_call.1} parent=1 // pred_region
      _
    $region17: #{tpu_custom_call.1} parent=1 // pred_fallthru
      _
    // Predicated region
    $region18: #{tpu_custom_call.1} parent=1 // pred_check
      _
    $region19: #{tpu_custom_call.1} parent=1 // pred_check_branch
      %42 = sbr.rel (0) target = $region21
    $region20: #{tpu_custom_call.1} parent=1 // pred_region
      %s44 = ssub.s32 512, 512
      %45 = vsyncadd [#allocation10], %s44
      %s46 = sshll.u32 [#allocation11], 4
      %s47 = int_to_ptr.vmem [resolvable:$true] %s46
      %52 = dma.hbm_to_vmem [thread:$0]  %s4, 512, %s47, [#allocation10], 128, 128, 8
    $region21: #{tpu_custom_call.1} parent=1 // pred_fallthru
      _
    // Predicated region
    $region22: #{tpu_custom_call.1} parent=1 // pred_check
      _
    $region23: #{tpu_custom_call.1} parent=1 // pred_check_branch
      %54 = sbr.rel (0) target = $region25
    $region24: #{tpu_custom_call.1} parent=1 // pred_region
      %55 = dma.done [#allocation7], 256
    $region25: #{tpu_custom_call.1} parent=1 // pred_fallthru
      _
    // Predicated region
    $region26: #{tpu_custom_call.1} parent=1 // pred_check
      _
    $region27: #{tpu_custom_call.1} parent=1 // pred_check_branch
      %57 = sbr.rel (0) target = $region29
    $region28: #{tpu_custom_call.1} parent=1 // pred_region
      %58 = dma.done [#allocation10], 512
    $region29: #{tpu_custom_call.1} parent=1 // pred_fallthru
      _
    // Predicated region
    $region30: #{tpu_custom_call.1} parent=1 // pred_check
      _
    $region31: #{tpu_custom_call.1} parent=1 // pred_check_branch
      %60 = sbr.rel (0) target = $region33
    $region32: #{tpu_custom_call.1} parent=1 // pred_region
      %61 = dma.done [#allocation10], 512
    $region33: #{tpu_custom_call.1} parent=1 // pred_fallthru
      _
    %v62 = vld [vmem:[#allocation6] sm:$0xff]
    %v63 = vld [vmem:[#allocation6 + $0x8] sm:$0xff]
    %v64 = vld [vmem:[%s1] sm:$0x3]
    %v67 = vunpack.c.l.s4 1966171168
    %v68 = vunpack.c.0.s8 %v67
    %v69 = vlaneseq
    %v70 = vshrl.u32 %v69, 7
    %v71 = vsub.s32 %v68, %v70
    %v72 = vrot.slane %v64, %v71
    %v73 = vcombine.high %v72, %v72
    %v75 = vunpack.c.l.s4 1966171168
    %v76 = vunpack.c.0.s8 %v75
    %v77 = vlaneseq
    %v78 = vshrl.u32 %v77, 7
    %v79 = vsub.s32 %v76, %v78
    %v80 = vrot.slane %v72, %v79
    %v82 = vunpack.c.l.s4 1966171168
    %v83 = vunpack.c.0.s8 %v82
    %v84 = vlaneseq
    %v85 = vshrl.u32 %v84, 7
    %v86 = vsub.s32 %v83, %v85
    %v87 = vrot.slane %v73, %v86
    %v88 = vlaneseq
    %v89 = vshrl.u32 %v88, 7
    %v90 = vsub.s32 0, %v89
    %v91 = vrot.slane %v80, %v90
    %v92 = vlaneseq
    %v93 = vshrl.u32 %v92, 7
    %v94 = vsub.s32 0, %v93
    %v95 = vrot.slane %v87, %v94
    %v98 = vmul.f32 %v62, %v91
    %v99 = vmul.f32 %v63, %v95
    %v100 = vld [vmem:[#allocation9] sm:$0xff]
    %v101 = vld [vmem:[#allocation9 + $0x8] sm:$0xff]
    %v102 = vld [vmem:[#allocation9 + $0x10] sm:$0xff]
    %v103 = vld [vmem:[#allocation9 + $0x18] sm:$0xff]
    %v104 = vld [vmem:[%s3] sm:$0x1]
    %v106 = vlaneseq
    %v107 = vshrl.u32 %v106, 7
    %v108 = vsub.s32 0, %v107
    %v109 = vrot.slane %v104, %v108
    %vm111 = vcmask 261120
    %v113 = vsel %vm111, %v98, 0
    %v116 = vsel %vm111, %v99, 0
    %118 = vmatprep.subr.mxu0 0.0
    %119 = vmatpush1.msra.mxu0 %v100
    %120 = vmatprep.subr.mxu0 0.0
    %121 = vmatpush1.msra.mxu0 %v101
    %122 = vmatprep.subr.mxu0 0.0
    %123 = vmatpush1.msra.mxu0 %v102
    %124 = vmatprep.subr.mxu0 0.0
    %125 = vmatpush1.msra.mxu0 %v103
    %126 = vmatprep.subr.mxu0 0.0
    %127 = vmatpush1.msra.mxu0 0.0
    %128 = vmatprep.subr.mxu0 0.0
    %129 = vmatpush1.msra.mxu0 0.0
    %130 = vmatprep.subr.mxu0 0.0
    %131 = vmatpush1.msra.mxu0 0.0
    %132 = vmatprep.subr.mxu0 0.0
    %133 = vmatpush1.msra.mxu0 0.0
    %134 = vmatprep.subr.mxu0 0.0
    %135 = vmatpush1.msra.mxu0 0.0
    %136 = vmatprep.subr.mxu0 0.0
    %137 = vmatpush1.msra.mxu0 0.0
    %138 = vmatprep.subr.mxu0 0.0
    %139 = vmatpush1.msra.mxu0 0.0
    %140 = vmatprep.subr.mxu0 0.0
    %141 = vmatpush1.msra.mxu0 0.0
    %142 = vmatprep.subr.mxu0 0.0
    %143 = vmatpush1.msra.mxu0 0.0
    %144 = vmatprep.subr.mxu0 0.0
    %145 = vmatpush1.msra.mxu0 0.0
    %146 = vmatprep.subr.mxu0 0.0
    %147 = vmatpush1.msra.mxu0 0.0
    %148 = vmatprep.subr.mxu0 0.0
    %149 = vmatpush1.msra.mxu0 0.0
    %150 = vmatprep.subr.mxu0 0.0
    %151 = vmatpush1.msra.mxu0 0.0
    %152 = vmatprep.subr.mxu0 0.0
    %153 = vmatpush1.msra.mxu0 0.0
    %154 = vmatprep.subr.mxu0 0.0
    %155 = vmatpush1.msra.mxu0 0.0
    %156 = vmatprep.subr.mxu0 0.0
    %157 = vmatpush1.msra.mxu0 0.0
    %158 = vmatprep.subr.mxu0 0.0
    %159 = vmatpush1.msra.mxu0 0.0
    %160 = vmatprep.subr.mxu0 0.0
    %161 = vmatpush1.msra.mxu0 0.0
    %162 = vmatprep.subr.mxu0 0.0
    %163 = vmatpush1.msra.mxu0 0.0
    %164 = vmatprep.subr.mxu0 0.0
    %165 = vmatpush1.msra.mxu0 0.0
    %166 = vmatprep.subr.mxu0 0.0
    %167 = vmatpush1.msra.mxu0 0.0
    %168 = vmatprep.subr.mxu0 0.0
    %169 = vmatpush1.msra.mxu0 0.0
    %170 = vmatprep.subr.mxu0 0.0
    %171 = vmatpush1.msra.mxu0 0.0
    %172 = vmatprep.subr.mxu0 0.0
    %173 = vmatpush1.msra.mxu0 0.0
    %174 = vmatprep.subr.mxu0 0.0
    %175 = vmatpush1.msra.mxu0 0.0
    %176 = vmatprep.subr.mxu0 0.0
    %177 = vmatpush1.msra.mxu0 0.0
    %178 = vmatprep.subr.mxu0 0.0
    %179 = vmatpush1.msra.mxu0 0.0
    %180 = vmatprep.subr.mxu0 0.0
    %181 = vmatpush1.msra.mxu0 0.0
    %182 = vmatprep.mubr.f32.mxu0 0.0
    %183 = vmatmul.mubr.f32.gmra.mrb[0].mxu0 %v113
    %v184 = vpop.f32.mrb[0].mxu0
    %v185 = vadd.f32 %v109, %v184
    %v186 = vpop.f32.mrb[0].mxu0
    %187 = vmatprep.mubr.f32.mxu0 0.0
    %188 = vmatmul.mubr.f32.gmra.mrb[0].mxu0 %v116
    %v189 = vpop.f32.mrb[0].mxu0
    %v190 = vadd.f32 %v109, %v189
    %v191 = vpop.f32.mrb[0].mxu0
    %192 = vdwg.mxu0
    %v193 = vcombine.high %v185, 0.0
    %v195 = vunpack.c.l.s4 1983009808
    %v196 = vunpack.c.0.s8 %v195
    %v197 = vlaneseq
    %v198 = vshrl.u32 %v197, 7
    %v199 = vsub.s32 %v196, %v198
    %v200 = vrot.slane %v185, %v199
    %v202 = vunpack.c.l.s4 1983009808
    %v203 = vunpack.c.0.s8 %v202
    %v204 = vlaneseq
    %v205 = vshrl.u32 %v204, 7
    %v206 = vsub.s32 %v203, %v205
    %v207 = vrot.slane %v193, %v206
    %v208 = vcombine.high %v190, 0.0
    %v210 = vunpack.c.l.s4 1983009808
    %v211 = vunpack.c.0.s8 %v210
    %v212 = vlaneseq
    %v213 = vshrl.u32 %v212, 7
    %v214 = vsub.s32 %v211, %v213
    %v215 = vrot.slane %v190, %v214
    %v217 = vunpack.c.l.s4 1983009808
    %v218 = vunpack.c.0.s8 %v217
    %v219 = vlaneseq
    %v220 = vshrl.u32 %v219, 7
    %v221 = vsub.s32 %v218, %v220
    %v222 = vrot.slane %v208, %v221
    %v223 = vcombine.low %v200, %v215
    %v224 = vcombine.high %v200, %v215
    %v226 = vunpack.c.l.s4 1934713408
    %v227 = vunpack.c.0.s8 %v226
    %v228 = vlaneseq
    %v229 = vshrl.u32 %v228, 7
    %v230 = vsub.s32 %v227, %v229
    %v231 = vrot.slane %v223, %v230
    %v233 = vunpack.c.l.s4 1934713408
    %v234 = vunpack.c.0.s8 %v233
    %v235 = vlaneseq
    %v236 = vshrl.u32 %v235, 7
    %v237 = vsub.s32 %v234, %v236
    %v238 = vrot.slane %v224, %v237
    %v239 = vcombine.low %v207, %v222
    %v240 = vcombine.high %v207, %v222
    %v242 = vunpack.c.l.s4 1934713408
    %v243 = vunpack.c.0.s8 %v242
    %v244 = vlaneseq
    %v245 = vshrl.u32 %v244, 7
    %v246 = vsub.s32 %v243, %v245
    %v247 = vrot.slane %v239, %v246
    %v249 = vunpack.c.l.s4 1934713408
    %v250 = vunpack.c.0.s8 %v249
    %v251 = vlaneseq
    %v252 = vshrl.u32 %v251, 7
    %v253 = vsub.s32 %v250, %v252
    %v254 = vrot.slane %v240, %v253
    %v255 = vcombine.high %v231, 0.0
    %v256 = vcombine.high %v238, 0.0
    %v257 = vcombine.high %v247, 0.0
    %v258 = vcombine.high %v254, 0.0
    %vm259 = vcmask 517120
    %260 = vst.msk [vmem:[#allocation2] sm:$0x3] %vm259, %v231
    %261 = vst.msk [vmem:[#allocation2 + $0x2] sm:$0x3] %vm259, %v255
    %262 = vst.msk [vmem:[#allocation2 + $0x4] sm:$0x3] %vm259, %v238
    %263 = vst.msk [vmem:[#allocation2 + $0x6] sm:$0x3] %vm259, %v256
    %264 = vst.msk [vmem:[#allocation2 + $0x8] sm:$0x3] %vm259, %v247
    %265 = vst.msk [vmem:[#allocation2 + $0xa] sm:$0x3] %vm259, %v257
    %266 = vst.msk [vmem:[#allocation2 + $0xc] sm:$0x3] %vm259, %v254
    %267 = vst.msk [vmem:[#allocation2 + $0xe] sm:$0x3] %vm259, %v258
    %276 = vrot.lane.b32.xlu0 %v231, 64
    %v277 = vpop.permute.xlu0 %276
    %278 = vrot.lane.b32.xlu0 %v255, 64
    %v279 = vpop.permute.xlu0 %278
    %280 = vrot.lane.b32.xlu0 %v238, 64
    %v281 = vpop.permute.xlu0 %280
    %282 = vrot.lane.b32.xlu0 %v256, 64
    %v283 = vpop.permute.xlu0 %282
    %284 = vrot.lane.b32.xlu0 %v247, 64
    %v285 = vpop.permute.xlu0 %284
    %286 = vrot.lane.b32.xlu0 %v257, 64
    %v287 = vpop.permute.xlu0 %286
    %288 = vrot.lane.b32.xlu0 %v254, 64
    %v289 = vpop.permute.xlu0 %288
    %290 = vrot.lane.b32.xlu0 %v258, 64
    %v291 = vpop.permute.xlu0 %290
    %300 = vst.msk [vmem:[#allocation3] sm:$0x3] %vm259, %v277
    %301 = vst.msk [vmem:[#allocation3 + $0x2] sm:$0x3] %vm259, %v279
    %302 = vst.msk [vmem:[#allocation3 + $0x4] sm:$0x3] %vm259, %v281
    %303 = vst.msk [vmem:[#allocation3 + $0x6] sm:$0x3] %vm259, %v283
    %304 = vst.msk [vmem:[#allocation3 + $0x8] sm:$0x3] %vm259, %v285
    %305 = vst.msk [vmem:[#allocation3 + $0xa] sm:$0x3] %vm259, %v287
    %306 = vst.msk [vmem:[#allocation3 + $0xc] sm:$0x3] %vm259, %v289
    %307 = vst.msk [vmem:[#allocation3 + $0xe] sm:$0x3] %vm259, %v291
    %v308 = vld [vmem:[#allocation11] sm:$0xff]
    %v309 = vld [vmem:[#allocation11 + $0x8] sm:$0xff]
    %v310 = vld [vmem:[#allocation11 + $0x10] sm:$0xff]
    %v311 = vld [vmem:[#allocation11 + $0x18] sm:$0xff]
    %v312 = vld [vmem:[#allocation2] sm:$0x3]
    %s313 = scalar_lea.vmem [#allocation3], 14
    %v314 = vld [vmem:[%s313] sm:$0x3]
    %vm315 = vcmask 130048
    %v317 = vsel %vm315, 0.0, 0
    %319 = vmatprep.subr.mxu0 0.0
    %320 = vmatpush1.msra.mxu0 %v308
    %321 = vmatprep.subr.mxu0 0.0
    %322 = vmatpush1.msra.mxu0 %v309
    %323 = vmatprep.subr.mxu0 0.0
    %324 = vmatpush1.msra.mxu0 0.0
    %325 = vmatprep.subr.mxu0 0.0
    %326 = vmatpush1.msra.mxu0 0.0
    %327 = vmatprep.subr.mxu0 0.0
    %328 = vmatpush1.msra.mxu0 0.0
    %329 = vmatprep.subr.mxu0 0.0
    %330 = vmatpush1.msra.mxu0 0.0
    %331 = vmatprep.subr.mxu0 0.0
    %332 = vmatpush1.msra.mxu0 0.0
    %333 = vmatprep.subr.mxu0 0.0
    %334 = vmatpush1.msra.mxu0 0.0
    %335 = vmatprep.subr.mxu0 0.0
    %336 = vmatpush1.msra.mxu0 0.0
    %337 = vmatprep.subr.mxu0 0.0
    %338 = vmatpush1.msra.mxu0 0.0
    %339 = vmatprep.subr.mxu0 0.0
    %340 = vmatpush1.msra.mxu0 0.0
    %341 = vmatprep.subr.mxu0 0.0
    %342 = vmatpush1.msra.mxu0 0.0
    %343 = vmatprep.subr.mxu0 0.0
    %344 = vmatpush1.msra.mxu0 0.0
    %345 = vmatprep.subr.mxu0 0.0
    %346 = vmatpush1.msra.mxu0 0.0
    %347 = vmatprep.subr.mxu0 0.0
    %348 = vmatpush1.msra.mxu0 0.0
    %349 = vmatprep.subr.mxu0 0.0
    %350 = vmatpush1.msra.mxu0 0.0
    %351 = vmatprep.subr.mxu0 0.0
    %352 = vmatpush1.msra.mxu0 0.0
    %353 = vmatprep.subr.mxu0 0.0
    %354 = vmatpush1.msra.mxu0 0.0
    %355 = vmatprep.subr.mxu0 0.0
    %356 = vmatpush1.msra.mxu0 0.0
    %357 = vmatprep.subr.mxu0 0.0
    %358 = vmatpush1.msra.mxu0 0.0
    %359 = vmatprep.subr.mxu0 0.0
    %360 = vmatpush1.msra.mxu0 0.0
    %361 = vmatprep.subr.mxu0 0.0
    %362 = vmatpush1.msra.mxu0 0.0
    %363 = vmatprep.subr.mxu0 0.0
    %364 = vmatpush1.msra.mxu0 0.0
    %365 = vmatprep.subr.mxu0 0.0
    %366 = vmatpush1.msra.mxu0 0.0
    %367 = vmatprep.subr.mxu0 0.0
    %368 = vmatpush1.msra.mxu0 0.0
    %369 = vmatprep.subr.mxu0 0.0
    %370 = vmatpush1.msra.mxu0 0.0
    %371 = vmatprep.subr.mxu0 0.0
    %372 = vmatpush1.msra.mxu0 0.0
    %373 = vmatprep.subr.mxu0 0.0
    %374 = vmatpush1.msra.mxu0 0.0
    %375 = vmatprep.subr.mxu0 0.0
    %376 = vmatpush1.msra.mxu0 0.0
    %377 = vmatprep.subr.mxu0 0.0
    %378 = vmatpush1.msra.mxu0 0.0
    %379 = vmatprep.subr.mxu0 0.0
    %380 = vmatpush1.msra.mxu0 0.0
    %381 = vmatprep.subr.mxu0 0.0
    %382 = vmatpush1.msra.mxu0 0.0
    %383 = vmatprep.mubr.f32.mxu0 0.0
    %384 = vmatmul.mubr.f32.gmra.mrb[0].mxu0 %v317
    %v385 = vpop.f32.mrb[0].mxu0
    %v386 = vadd.f32 0.0, %v385
    %v387 = vpop.f32.mrb[0].mxu0
    %388 = vdwg.mxu0
    %389 = vmatprep.subr.mxu0 0.0
    %390 = vmatpush1.msra.mxu0 %v310
    %391 = vmatprep.subr.mxu0 0.0
    %392 = vmatpush1.msra.mxu0 %v311
    %393 = vmatprep.subr.mxu0 0.0
    %394 = vmatpush1.msra.mxu0 0.0
    %395 = vmatprep.subr.mxu0 0.0
    %396 = vmatpush1.msra.mxu0 0.0
    %397 = vmatprep.subr.mxu0 0.0
    %398 = vmatpush1.msra.mxu0 0.0
    %399 = vmatprep.subr.mxu0 0.0
    %400 = vmatpush1.msra.mxu0 0.0
    %401 = vmatprep.subr.mxu0 0.0
    %402 = vmatpush1.msra.mxu0 0.0
    %403 = vmatprep.subr.mxu0 0.0
    %404 = vmatpush1.msra.mxu0 0.0
    %405 = vmatprep.subr.mxu0 0.0
    %406 = vmatpush1.msra.mxu0 0.0
    %407 = vmatprep.subr.mxu0 0.0
    %408 = vmatpush1.msra.mxu0 0.0
    %409 = vmatprep.subr.mxu0 0.0
    %410 = vmatpush1.msra.mxu0 0.0
    %411 = vmatprep.subr.mxu0 0.0
    %412 = vmatpush1.msra.mxu0 0.0
    %413 = vmatprep.subr.mxu0 0.0
    %414 = vmatpush1.msra.mxu0 0.0
    %415 = vmatprep.subr.mxu0 0.0
    %416 = vmatpush1.msra.mxu0 0.0
    %417 = vmatprep.subr.mxu0 0.0
    %418 = vmatpush1.msra.mxu0 0.0
    %419 = vmatprep.subr.mxu0 0.0
    %420 = vmatpush1.msra.mxu0 0.0
    %421 = vmatprep.subr.mxu0 0.0
    %422 = vmatpush1.msra.mxu0 0.0
    %423 = vmatprep.subr.mxu0 0.0
    %424 = vmatpush1.msra.mxu0 0.0
    %425 = vmatprep.subr.mxu0 0.0
    %426 = vmatpush1.msra.mxu0 0.0
    %427 = vmatprep.subr.mxu0 0.0
    %428 = vmatpush1.msra.mxu0 0.0
    %429 = vmatprep.subr.mxu0 0.0
    %430 = vmatpush1.msra.mxu0 0.0
    %431 = vmatprep.subr.mxu0 0.0
    %432 = vmatpush1.msra.mxu0 0.0
    %433 = vmatprep.subr.mxu0 0.0
    %434 = vmatpush1.msra.mxu0 0.0
    %435 = vmatprep.subr.mxu0 0.0
    %436 = vmatpush1.msra.mxu0 0.0
    %437 = vmatprep.subr.mxu0 0.0
    %438 = vmatpush1.msra.mxu0 0.0
    %439 = vmatprep.subr.mxu0 0.0
    %440 = vmatpush1.msra.mxu0 0.0
    %441 = vmatprep.subr.mxu0 0.0
    %442 = vmatpush1.msra.mxu0 0.0
    %443 = vmatprep.subr.mxu0 0.0
    %444 = vmatpush1.msra.mxu0 0.0
    %445 = vmatprep.subr.mxu0 0.0
    %446 = vmatpush1.msra.mxu0 0.0
    %447 = vmatprep.subr.mxu0 0.0
    %448 = vmatpush1.msra.mxu0 0.0
    %449 = vmatprep.subr.mxu0 0.0
    %450 = vmatpush1.msra.mxu0 0.0
    %451 = vmatprep.subr.mxu0 0.0
    %452 = vmatpush1.msra.mxu0 0.0
    %453 = vmatprep.mubr.f32.mxu0 0.0
    %454 = vmatmul.mubr.f32.gmra.mrb[0].mxu0 %v317
    %v455 = vpop.f32.mrb[0].mxu0
    %v456 = vadd.f32 0.0, %v455
    %v457 = vpop.f32.mrb[0].mxu0
    %458 = vdwg.mxu0
    %v459 = vadd.f32 %v312, %v386
    %v460 = vadd.f32 %v314, %v456
    %v461 = vxor.u32 %v459, 2147483648
    %v462 = vxor.u32 %v460, 2147483648
    %v463 = vmul.f32 %v461, 1.442695
    %v464 = vpow.pop %v463
    %v465 = vmul.f32 %v462, 1.442695
    %v466 = vpow.pop %v465
    %v467 = vadd.f32 %v464, 1.0
    %v468 = vadd.f32 %v466, 1.0
    %v469 = vrcp.pop %v467
    %v470 = vmul.f32 1.0, %v469
    %v471 = vrcp.pop %v468
    %v472 = vmul.f32 1.0, %v471
    %v473 = vtanh.pop %v459
    %v474 = vtanh.pop %v460
    %v475 = vmul.f32 %v470, 0.0
    %v476 = vmul.f32 %v472, 0.0
    %479 = vrot.lane.b32.xlu0 %v473, 80
    %v480 = vpop.permute.xlu0 %479
    %481 = vrot.lane.b32.xlu0 %v474, 80
    %v482 = vpop.permute.xlu0 %481
    %v485 = vmul.f32 %v470, %v480
    %v486 = vmul.f32 %v472, %v482
    %489 = vrot.lane.b32.xlu0 %v485, 16
    %v490 = vpop.permute.xlu0 %489
    %491 = vrot.lane.b32.xlu0 %v486, 16
    %v492 = vpop.permute.xlu0 %491
    %v495 = vadd.f32 %v475, %v490
    %v496 = vadd.f32 %v476, %v492
    %v497 = vtanh.pop %v495
    %v498 = vtanh.pop %v496
    %501 = vrot.lane.b32.xlu0 %v497, 16
    %v502 = vpop.permute.xlu0 %501
    %503 = vrot.lane.b32.xlu0 %v498, 16
    %v504 = vpop.permute.xlu0 %503
    %v507 = vmul.f32 %v470, %v502
    %v508 = vmul.f32 %v472, %v504
    %510 = vrot.lane.b32.xlu0 %v507, 96
    %v511 = vpop.permute.xlu0 %510
    %vm513 = vcmask 123904
    %v514 = vsel %vm513, %v511, 0.0
    %515 = vadd.xlane.f32.xlu0 %v514
    %v516 = vpop.xlane.xlu0 %515
    %v518 = vlaneseq
    %v519 = vand.u32 %v518, 127
    %v520 = vlaneseq
    %v521 = vshrl.u32 %v520, 7
    %v522 = vsub.s32 %v519, %v521
    %v523 = vrot.slane %v516, %v522
    %vm525 = vcmask 8192
    %526 = vst.msk [vmem:[#allocation4] sm:$0x1] %vm525, %v523
    %528 = vrot.lane.b32.xlu0 %v508, 96
    %v529 = vpop.permute.xlu0 %528
    %v531 = vsel %vm513, %v529, 0.0
    %532 = vadd.xlane.f32.xlu0 %v531
    %v533 = vpop.xlane.xlu0 %532
    %v535 = vlaneseq
    %v536 = vshrl.u32 %v535, 7
    %v537 = vsub.s32 %v519, %v536
    %v538 = vrot.slane %v533, %v537
    %s540 = scalar_lea.vmem [#allocation5], 7
    %541 = vst.msk [vmem:[%s540] sm:$0x1] %vm525, %v538
    %s542 = scalar_lea.vmem [#allocation2], 2
    %v543 = vld [vmem:[%s542] sm:$0x3]
    %s544 = scalar_lea.vmem [#allocation3], 12
    %v545 = vld [vmem:[%s544] sm:$0x3]
    %v546 = vsel %vm315, %v511, 0
    %548 = vmatprep.subr.mxu0 0.0
    %549 = vmatpush1.msra.mxu0 %v308
    %550 = vmatprep.subr.mxu0 0.0
    %551 = vmatpush1.msra.mxu0 %v309
    %552 = vmatprep.subr.mxu0 0.0
    %553 = vmatpush1.msra.mxu0 0.0
    %554 = vmatprep.subr.mxu0 0.0
    %555 = vmatpush1.msra.mxu0 0.0
    %556 = vmatprep.subr.mxu0 0.0
    %557 = vmatpush1.msra.mxu0 0.0
    %558 = vmatprep.subr.mxu0 0.0
    %559 = vmatpush1.msra.mxu0 0.0
    %560 = vmatprep.subr.mxu0 0.0
    %561 = vmatpush1.msra.mxu0 0.0
    %562 = vmatprep.subr.mxu0 0.0
    %563 = vmatpush1.msra.mxu0 0.0
    %564 = vmatprep.subr.mxu0 0.0
    %565 = vmatpush1.msra.mxu0 0.0
    %566 = vmatprep.subr.mxu0 0.0
    %567 = vmatpush1.msra.mxu0 0.0
    %568 = vmatprep.subr.mxu0 0.0
    %569 = vmatpush1.msra.mxu0 0.0
    %570 = vmatprep.subr.mxu0 0.0
    %571 = vmatpush1.msra.mxu0 0.0
    %572 = vmatprep.subr.mxu0 0.0
    %573 = vmatpush1.msra.mxu0 0.0
    %574 = vmatprep.subr.mxu0 0.0
    %575 = vmatpush1.msra.mxu0 0.0
    %576 = vmatprep.subr.mxu0 0.0
    %577 = vmatpush1.msra.mxu0 0.0
    %578 = vmatprep.subr.mxu0 0.0
    %579 = vmatpush1.msra.mxu0 0.0
    %580 = vmatprep.subr.mxu0 0.0
    %581 = vmatpush1.msra.mxu0 0.0
    %582 = vmatprep.subr.mxu0 0.0
    %583 = vmatpush1.msra.mxu0 0.0
    %584 = vmatprep.subr.mxu0 0.0
    %585 = vmatpush1.msra.mxu0 0.0
    %586 = vmatprep.subr.mxu0 0.0
    %587 = vmatpush1.msra.mxu0 0.0
    %588 = vmatprep.subr.mxu0 0.0
    %589 = vmatpush1.msra.mxu0 0.0
    %590 = vmatprep.subr.mxu0 0.0
    %591 = vmatpush1.msra.mxu0 0.0
    %592 = vmatprep.subr.mxu0 0.0
    %593 = vmatpush1.msra.mxu0 0.0
    %594 = vmatprep.subr.mxu0 0.0
    %595 = vmatpush1.msra.mxu0 0.0
    %596 = vmatprep.subr.mxu0 0.0
    %597 = vmatpush1.msra.mxu0 0.0
    %598 = vmatprep.subr.mxu0 0.0
    %599 = vmatpush1.msra.mxu0 0.0
    %600 = vmatprep.subr.mxu0 0.0
    %601 = vmatpush1.msra.mxu0 0.0
    %602 = vmatprep.subr.mxu0 0.0
    %603 = vmatpush1.msra.mxu0 0.0
    %604 = vmatprep.subr.mxu0 0.0
    %605 = vmatpush1.msra.mxu0 0.0
    %606 = vmatprep.subr.mxu0 0.0
    %607 = vmatpush1.msra.mxu0 0.0
    %608 = vmatprep.subr.mxu0 0.0
    %609 = vmatpush1.msra.mxu0 0.0
    %610 = vmatprep.subr.mxu0 0.0
    %611 = vmatpush1.msra.mxu0 0.0
    %612 = vmatprep.mubr.f32.mxu0 0.0
    %613 = vmatmul.mubr.f32.gmra.mrb[0].mxu0 %v546
    %v614 = vpop.f32.mrb[0].mxu0
    %v615 = vadd.f32 0.0, %v614
    %v616 = vpop.f32.mrb[0].mxu0
    %617 = vdwg.mxu0
    %v618 = vsel %vm315, %v529, 0
    %620 = vmatprep.subr.mxu0 0.0
    %621 = vmatpush1.msra.mxu0 %v310
    %622 = vmatprep.subr.mxu0 0.0
    %623 = vmatpush1.msra.mxu0 %v311
    %624 = vmatprep.subr.mxu0 0.0
    %625 = vmatpush1.msra.mxu0 0.0
    %626 = vmatprep.subr.mxu0 0.0
    %627 = vmatpush1.msra.mxu0 0.0
    %628 = vmatprep.subr.mxu0 0.0
    %629 = vmatpush1.msra.mxu0 0.0
    %630 = vmatprep.subr.mxu0 0.0
    %631 = vmatpush1.msra.mxu0 0.0
    %632 = vmatprep.subr.mxu0 0.0
    %633 = vmatpush1.msra.mxu0 0.0
    %634 = vmatprep.subr.mxu0 0.0
    %635 = vmatpush1.msra.mxu0 0.0
    %636 = vmatprep.subr.mxu0 0.0
    %637 = vmatpush1.msra.mxu0 0.0
    %638 = vmatprep.subr.mxu0 0.0
    %639 = vmatpush1.msra.mxu0 0.0
    %640 = vmatprep.subr.mxu0 0.0
    %641 = vmatpush1.msra.mxu0 0.0
    %642 = vmatprep.subr.mxu0 0.0
    %643 = vmatpush1.msra.mxu0 0.0
    %644 = vmatprep.subr.mxu0 0.0
    %645 = vmatpush1.msra.mxu0 0.0
    %646 = vmatprep.subr.mxu0 0.0
    %647 = vmatpush1.msra.mxu0 0.0
    %648 = vmatprep.subr.mxu0 0.0
    %649 = vmatpush1.msra.mxu0 0.0
    %650 = vmatprep.subr.mxu0 0.0
    %651 = vmatpush1.msra.mxu0 0.0
    %652 = vmatprep.subr.mxu0 0.0
    %653 = vmatpush1.msra.mxu0 0.0
    %654 = vmatprep.subr.mxu0 0.0
    %655 = vmatpush1.msra.mxu0 0.0
    %656 = vmatprep.subr.mxu0 0.0
    %657 = vmatpush1.msra.mxu0 0.0
    %658 = vmatprep.subr.mxu0 0.0
    %659 = vmatpush1.msra.mxu0 0.0
    %660 = vmatprep.subr.mxu0 0.0
    %661 = vmatpush1.msra.mxu0 0.0
    %662 = vmatprep.subr.mxu0 0.0
    %663 = vmatpush1.msra.mxu0 0.0
    %664 = vmatprep.subr.mxu0 0.0
    %665 = vmatpush1.msra.mxu0 0.0
    %666 = vmatprep.subr.mxu0 0.0
    %667 = vmatpush1.msra.mxu0 0.0
    %668 = vmatprep.subr.mxu0 0.0
    %669 = vmatpush1.msra.mxu0 0.0
    %670 = vmatprep.subr.mxu0 0.0
    %671 = vmatpush1.msra.mxu0 0.0
    %672 = vmatprep.subr.mxu0 0.0
    %673 = vmatpush1.msra.mxu0 0.0
    %674 = vmatprep.subr.mxu0 0.0
    %675 = vmatpush1.msra.mxu0 0.0
    %676 = vmatprep.subr.mxu0 0.0
    %677 = vmatpush1.msra.mxu0 0.0
    %678 = vmatprep.subr.mxu0 0.0
    %679 = vmatpush1.msra.mxu0 0.0
    %680 = vmatprep.subr.mxu0 0.0
    %681 = vmatpush1.msra.mxu0 0.0
    %682 = vmatprep.subr.mxu0 0.0
    %683 = vmatpush1.msra.mxu0 0.0
    %684 = vmatprep.mubr.f32.mxu0 0.0
    %685 = vmatmul.mubr.f32.gmra.mrb[0].mxu0 %v618
    %v686 = vpop.f32.mrb[0].mxu0
    %v687 = vadd.f32 0.0, %v686
    %v688 = vpop.f32.mrb[0].mxu0
    %689 = vdwg.mxu0
    %v690 = vadd.f32 %v543, %v615
    %v691 = vadd.f32 %v545, %v687
    %v692 = vxor.u32 %v690, 2147483648
    %v693 = vxor.u32 %v691, 2147483648
    %v694 = vmul.f32 %v692, 1.442695
    %v695 = vpow.pop %v694
    %v696 = vmul.f32 %v693, 1.442695
    %v697 = vpow.pop %v696
    %v698 = vadd.f32 %v695, 1.0
    %v699 = vadd.f32 %v697, 1.0
    %v700 = vrcp.pop %v698
    %v701 = vmul.f32 1.0, %v700
    %v702 = vrcp.pop %v699
    %v703 = vmul.f32 1.0, %v702
    %v704 = vtanh.pop %v690
    %v705 = vtanh.pop %v691
    %v706 = vmul.f32 %v701, %v495
    %v707 = vmul.f32 %v703, %v496
    %710 = vrot.lane.b32.xlu0 %v704, 80
    %v711 = vpop.permute.xlu0 %710
    %712 = vrot.lane.b32.xlu0 %v705, 80
    %v713 = vpop.permute.xlu0 %712
    %v716 = vmul.f32 %v701, %v711
    %v717 = vmul.f32 %v703, %v713
    %720 = vrot.lane.b32.xlu0 %v716, 16
    %v721 = vpop.permute.xlu0 %720
    %722 = vrot.lane.b32.xlu0 %v717, 16
    %v723 = vpop.permute.xlu0 %722
    %v726 = vadd.f32 %v706, %v721
    %v727 = vadd.f32 %v707, %v723
    %v728 = vtanh.pop %v726
    %v729 = vtanh.pop %v727
    %732 = vrot.lane.b32.xlu0 %v728, 16
    %v733 = vpop.permute.xlu0 %732
    %734 = vrot.lane.b32.xlu0 %v729, 16
    %v735 = vpop.permute.xlu0 %734
    %v738 = vmul.f32 %v701, %v733
    %v739 = vmul.f32 %v703, %v735
    %741 = vrot.lane.b32.xlu0 %v738, 96
    %v742 = vpop.permute.xlu0 %741
    %v744 = vsel %vm513, %v742, 0.0
    %745 = vadd.xlane.f32.xlu0 %v744
    %v746 = vpop.xlane.xlu0 %745
    %v748 = vlaneseq
    %v749 = vshrl.u32 %v748, 7
    %v750 = vsub.s32 %v519, %v749
    %v751 = vrot.slane %v746, %v750
    %s753 = scalar_lea.vmem [#allocation4], 1
    %754 = vst.msk [vmem:[%s753] sm:$0x1] %vm525, %v751
    %756 = vrot.lane.b32.xlu0 %v739, 96
    %v757 = vpop.permute.xlu0 %756
    %v759 = vsel %vm513, %v757, 0.0
    %760 = vadd.xlane.f32.xlu0 %v759
    %v761 = vpop.xlane.xlu0 %760
    %v763 = vlaneseq
    %v764 = vshrl.u32 %v763, 7
    %v765 = vsub.s32 %v519, %v764
    %v766 = vrot.slane %v761, %v765
    %s768 = scalar_lea.vmem [#allocation5], 6
    %769 = vst.msk [vmem:[%s768] sm:$0x1] %vm525, %v766
    %s770 = scalar_lea.vmem [#allocation2], 4
    %v771 = vld [vmem:[%s770] sm:$0x3]
    %s772 = scalar_lea.vmem [#allocation3], 10
    %v773 = vld [vmem:[%s772] sm:$0x3]
    %v774 = vsel %vm315, %v742, 0
    %776 = vmatprep.subr.mxu0 0.0
    %777 = vmatpush1.msra.mxu0 %v308
    %778 = vmatprep.subr.mxu0 0.0
    %779 = vmatpush1.msra.mxu0 %v309
    %780 = vmatprep.subr.mxu0 0.0
    %781 = vmatpush1.msra.mxu0 0.0
    %782 = vmatprep.subr.mxu0 0.0
    %783 = vmatpush1.msra.mxu0 0.0
    %784 = vmatprep.subr.mxu0 0.0
    %785 = vmatpush1.msra.mxu0 0.0
    %786 = vmatprep.subr.mxu0 0.0
    %787 = vmatpush1.msra.mxu0 0.0
    %788 = vmatprep.subr.mxu0 0.0
    %789 = vmatpush1.msra.mxu0 0.0
    %790 = vmatprep.subr.mxu0 0.0
    %791 = vmatpush1.msra.mxu0 0.0
    %792 = vmatprep.subr.mxu0 0.0
    %793 = vmatpush1.msra.mxu0 0.0
    %794 = vmatprep.subr.mxu0 0.0
    %795 = vmatpush1.msra.mxu0 0.0
    %796 = vmatprep.subr.mxu0 0.0
    %797 = vmatpush1.msra.mxu0 0.0
    %798 = vmatprep.subr.mxu0 0.0
    %799 = vmatpush1.msra.mxu0 0.0
    %800 = vmatprep.subr.mxu0 0.0
    %801 = vmatpush1.msra.mxu0 0.0
    %802 = vmatprep.subr.mxu0 0.0
    %803 = vmatpush1.msra.mxu0 0.0
    %804 = vmatprep.subr.mxu0 0.0
    %805 = vmatpush1.msra.mxu0 0.0
    %806 = vmatprep.subr.mxu0 0.0
    %807 = vmatpush1.msra.mxu0 0.0
    %808 = vmatprep.subr.mxu0 0.0
    %809 = vmatpush1.msra.mxu0 0.0
    %810 = vmatprep.subr.mxu0 0.0
    %811 = vmatpush1.msra.mxu0 0.0
    %812 = vmatprep.subr.mxu0 0.0
    %813 = vmatpush1.msra.mxu0 0.0
    %814 = vmatprep.subr.mxu0 0.0
    %815 = vmatpush1.msra.mxu0 0.0
    %816 = vmatprep.subr.mxu0 0.0
    %817 = vmatpush1.msra.mxu0 0.0
    %818 = vmatprep.subr.mxu0 0.0
    %819 = vmatpush1.msra.mxu0 0.0
    %820 = vmatprep.subr.mxu0 0.0
    %821 = vmatpush1.msra.mxu0 0.0
    %822 = vmatprep.subr.mxu0 0.0
    %823 = vmatpush1.msra.mxu0 0.0
    %824 = vmatprep.subr.mxu0 0.0
    %825 = vmatpush1.msra.mxu0 0.0
    %826 = vmatprep.subr.mxu0 0.0
    %827 = vmatpush1.msra.mxu0 0.0
    %828 = vmatprep.subr.mxu0 0.0
    %829 = vmatpush1.msra.mxu0 0.0
    %830 = vmatprep.subr.mxu0 0.0
    %831 = vmatpush1.msra.mxu0 0.0
    %832 = vmatprep.subr.mxu0 0.0
    %833 = vmatpush1.msra.mxu0 0.0
    %834 = vmatprep.subr.mxu0 0.0
    %835 = vmatpush1.msra.mxu0 0.0
    %836 = vmatprep.subr.mxu0 0.0
    %837 = vmatpush1.msra.mxu0 0.0
    %838 = vmatprep.subr.mxu0 0.0
    %839 = vmatpush1.msra.mxu0 0.0
    %840 = vmatprep.mubr.f32.mxu0 0.0
    %841 = vmatmul.mubr.f32.gmra.mrb[0].mxu0 %v774
    %v842 = vpop.f32.mrb[0].mxu0
    %v843 = vadd.f32 0.0, %v842
    %v844 = vpop.f32.mrb[0].mxu0
    %845 = vdwg.mxu0
    %v846 = vsel %vm315, %v757, 0
    %848 = vmatprep.subr.mxu0 0.0
    %849 = vmatpush1.msra.mxu0 %v310
    %850 = vmatprep.subr.mxu0 0.0
    %851 = vmatpush1.msra.mxu0 %v311
    %852 = vmatprep.subr.mxu0 0.0
    %853 = vmatpush1.msra.mxu0 0.0
    %854 = vmatprep.subr.mxu0 0.0
    %855 = vmatpush1.msra.mxu0 0.0
    %856 = vmatprep.subr.mxu0 0.0
    %857 = vmatpush1.msra.mxu0 0.0
    %858 = vmatprep.subr.mxu0 0.0
    %859 = vmatpush1.msra.mxu0 0.0
    %860 = vmatprep.subr.mxu0 0.0
    %861 = vmatpush1.msra.mxu0 0.0
    %862 = vmatprep.subr.mxu0 0.0
    %863 = vmatpush1.msra.mxu0 0.0
    %864 = vmatprep.subr.mxu0 0.0
    %865 = vmatpush1.msra.mxu0 0.0
    %866 = vmatprep.subr.mxu0 0.0
    %867 = vmatpush1.msra.mxu0 0.0
    %868 = vmatprep.subr.mxu0 0.0
    %869 = vmatpush1.msra.mxu0 0.0
    %870 = vmatprep.subr.mxu0 0.0
    %871 = vmatpush1.msra.mxu0 0.0
    %872 = vmatprep.subr.mxu0 0.0
    %873 = vmatpush1.msra.mxu0 0.0
    %874 = vmatprep.subr.mxu0 0.0
    %875 = vmatpush1.msra.mxu0 0.0
    %876 = vmatprep.subr.mxu0 0.0
    %877 = vmatpush1.msra.mxu0 0.0
    %878 = vmatprep.subr.mxu0 0.0
    %879 = vmatpush1.msra.mxu0 0.0
    %880 = vmatprep.subr.mxu0 0.0
    %881 = vmatpush1.msra.mxu0 0.0
    %882 = vmatprep.subr.mxu0 0.0
    %883 = vmatpush1.msra.mxu0 0.0
    %884 = vmatprep.subr.mxu0 0.0
    %885 = vmatpush1.msra.mxu0 0.0
    %886 = vmatprep.subr.mxu0 0.0
    %887 = vmatpush1.msra.mxu0 0.0
    %888 = vmatprep.subr.mxu0 0.0
    %889 = vmatpush1.msra.mxu0 0.0
    %890 = vmatprep.subr.mxu0 0.0
    %891 = vmatpush1.msra.mxu0 0.0
    %892 = vmatprep.subr.mxu0 0.0
    %893 = vmatpush1.msra.mxu0 0.0
    %894 = vmatprep.subr.mxu0 0.0
    %895 = vmatpush1.msra.mxu0 0.0
    %896 = vmatprep.subr.mxu0 0.0
    %897 = vmatpush1.msra.mxu0 0.0
    %898 = vmatprep.subr.mxu0 0.0
    %899 = vmatpush1.msra.mxu0 0.0
    %900 = vmatprep.subr.mxu0 0.0
    %901 = vmatpush1.msra.mxu0 0.0
    %902 = vmatprep.subr.mxu0 0.0
    %903 = vmatpush1.msra.mxu0 0.0
    %904 = vmatprep.subr.mxu0 0.0
    %905 = vmatpush1.msra.mxu0 0.0
    %906 = vmatprep.subr.mxu0 0.0
    %907 = vmatpush1.msra.mxu0 0.0
    %908 = vmatprep.subr.mxu0 0.0
    %909 = vmatpush1.msra.mxu0 0.0
    %910 = vmatprep.subr.mxu0 0.0
    %911 = vmatpush1.msra.mxu0 0.0
    %912 = vmatprep.mubr.f32.mxu0 0.0
    %913 = vmatmul.mubr.f32.gmra.mrb[0].mxu0 %v846
    %v914 = vpop.f32.mrb[0].mxu0
    %v915 = vadd.f32 0.0, %v914
    %v916 = vpop.f32.mrb[0].mxu0
    %917 = vdwg.mxu0
    %v918 = vadd.f32 %v771, %v843
    %v919 = vadd.f32 %v773, %v915
    %v920 = vxor.u32 %v918, 2147483648
    %v921 = vxor.u32 %v919, 2147483648
    %v922 = vmul.f32 %v920, 1.442695
    %v923 = vpow.pop %v922
    %v924 = vmul.f32 %v921, 1.442695
    %v925 = vpow.pop %v924
    %v926 = vadd.f32 %v923, 1.0
    %v927 = vadd.f32 %v925, 1.0
    %v928 = vrcp.pop %v926
    %v929 = vmul.f32 1.0, %v928
    %v930 = vrcp.pop %v927
    %v931 = vmul.f32 1.0, %v930
    %v932 = vtanh.pop %v918
    %v933 = vtanh.pop %v919
    %v934 = vmul.f32 %v929, %v726
    %v935 = vmul.f32 %v931, %v727
    %938 = vrot.lane.b32.xlu0 %v932, 80
    %v939 = vpop.permute.xlu0 %938
    %940 = vrot.lane.b32.xlu0 %v933, 80
    %v941 = vpop.permute.xlu0 %940
    %v944 = vmul.f32 %v929, %v939
    %v945 = vmul.f32 %v931, %v941
    %948 = vrot.lane.b32.xlu0 %v944, 16
    %v949 = vpop.permute.xlu0 %948
    %950 = vrot.lane.b32.xlu0 %v945, 16
    %v951 = vpop.permute.xlu0 %950
    %v954 = vadd.f32 %v934, %v949
    %v955 = vadd.f32 %v935, %v951
    %v956 = vtanh.pop %v954
    %v957 = vtanh.pop %v955
    %960 = vrot.lane.b32.xlu0 %v956, 16
    %v961 = vpop.permute.xlu0 %960
    %962 = vrot.lane.b32.xlu0 %v957, 16
    %v963 = vpop.permute.xlu0 %962
    %v966 = vmul.f32 %v929, %v961
    %v967 = vmul.f32 %v931, %v963
    %969 = vrot.lane.b32.xlu0 %v966, 96
    %v970 = vpop.permute.xlu0 %969
    %v972 = vsel %vm513, %v970, 0.0
    %973 = vadd.xlane.f32.xlu0 %v972
    %v974 = vpop.xlane.xlu0 %973
    %v976 = vlaneseq
    %v977 = vshrl.u32 %v976, 7
    %v978 = vsub.s32 %v519, %v977
    %v979 = vrot.slane %v974, %v978
    %s981 = scalar_lea.vmem [#allocation4], 2
    %982 = vst.msk [vmem:[%s981] sm:$0x1] %vm525, %v979
    %984 = vrot.lane.b32.xlu0 %v967, 96
    %v985 = vpop.permute.xlu0 %984
    %v987 = vsel %vm513, %v985, 0.0
    %988 = vadd.xlane.f32.xlu0 %v987
    %v989 = vpop.xlane.xlu0 %988
    %v991 = vlaneseq
    %v992 = vshrl.u32 %v991, 7
    %v993 = vsub.s32 %v519, %v992
    %v994 = vrot.slane %v989, %v993
    %s996 = scalar_lea.vmem [#allocation5], 5
    %997 = vst.msk [vmem:[%s996] sm:$0x1] %vm525, %v994
    %s998 = scalar_lea.vmem [#allocation2], 6
    %v999 = vld [vmem:[%s998] sm:$0x3]
    %s1000 = scalar_lea.vmem [#allocation3], 8
    %v1001 = vld [vmem:[%s1000] sm:$0x3]
    %v1002 = vsel %vm315, %v970, 0
    %1004 = vmatprep.subr.mxu0 0.0
    %1005 = vmatpush1.msra.mxu0 %v308
    %1006 = vmatprep.subr.mxu0 0.0
    %1007 = vmatpush1.msra.mxu0 %v309
    %1008 = vmatprep.subr.mxu0 0.0
    %1009 = vmatpush1.msra.mxu0 0.0
    %1010 = vmatprep.subr.mxu0 0.0
    %1011 = vmatpush1.msra.mxu0 0.0
    %1012 = vmatprep.subr.mxu0 0.0
    %1013 = vmatpush1.msra.mxu0 0.0
    %1014 = vmatprep.subr.mxu0 0.0
    %1015 = vmatpush1.msra.mxu0 0.0
    %1016 = vmatprep.subr.mxu0 0.0
    %1017 = vmatpush1.msra.mxu0 0.0
    %1018 = vmatprep.subr.mxu0 0.0
    %1019 = vmatpush1.msra.mxu0 0.0
    %1020 = vmatprep.subr.mxu0 0.0
    %1021 = vmatpush1.msra.mxu0 0.0
    %1022 = vmatprep.subr.mxu0 0.0
    %1023 = vmatpush1.msra.mxu0 0.0
    %1024 = vmatprep.subr.mxu0 0.0
    %1025 = vmatpush1.msra.mxu0 0.0
    %1026 = vmatprep.subr.mxu0 0.0
    %1027 = vmatpush1.msra.mxu0 0.0
    %1028 = vmatprep.subr.mxu0 0.0
    %1029 = vmatpush1.msra.mxu0 0.0
    %1030 = vmatprep.subr.mxu0 0.0
    %1031 = vmatpush1.msra.mxu0 0.0
    %1032 = vmatprep.subr.mxu0 0.0
    %1033 = vmatpush1.msra.mxu0 0.0
    %1034 = vmatprep.subr.mxu0 0.0
    %1035 = vmatpush1.msra.mxu0 0.0
    %1036 = vmatprep.subr.mxu0 0.0
    %1037 = vmatpush1.msra.mxu0 0.0
    %1038 = vmatprep.subr.mxu0 0.0
    %1039 = vmatpush1.msra.mxu0 0.0
    %1040 = vmatprep.subr.mxu0 0.0
    %1041 = vmatpush1.msra.mxu0 0.0
    %1042 = vmatprep.subr.mxu0 0.0
    %1043 = vmatpush1.msra.mxu0 0.0
    %1044 = vmatprep.subr.mxu0 0.0
    %1045 = vmatpush1.msra.mxu0 0.0
    %1046 = vmatprep.subr.mxu0 0.0
    %1047 = vmatpush1.msra.mxu0 0.0
    %1048 = vmatprep.subr.mxu0 0.0
    %1049 = vmatpush1.msra.mxu0 0.0
    %1050 = vmatprep.subr.mxu0 0.0
    %1051 = vmatpush1.msra.mxu0 0.0
    %1052 = vmatprep.subr.mxu0 0.0
    %1053 = vmatpush1.msra.mxu0 0.0
    %1054 = vmatprep.subr.mxu0 0.0
    %1055 = vmatpush1.msra.mxu0 0.0
    %1056 = vmatprep.subr.mxu0 0.0
    %1057 = vmatpush1.msra.mxu0 0.0
    %1058 = vmatprep.subr.mxu0 0.0
    %1059 = vmatpush1.msra.mxu0 0.0
    %1060 = vmatprep.subr.mxu0 0.0
    %1061 = vmatpush1.msra.mxu0 0.0
    %1062 = vmatprep.subr.mxu0 0.0
    %1063 = vmatpush1.msra.mxu0 0.0
    %1064 = vmatprep.subr.mxu0 0.0
    %1065 = vmatpush1.msra.mxu0 0.0
    %1066 = vmatprep.subr.mxu0 0.0
    %1067 = vmatpush1.msra.mxu0 0.0
    %1068 = vmatprep.mubr.f32.mxu0 0.0
    %1069 = vmatmul.mubr.f32.gmra.mrb[0].mxu0 %v1002
    %v1070 = vpop.f32.mrb[0].mxu0
    %v1071 = vadd.f32 0.0, %v1070
    %v1072 = vpop.f32.mrb[0].mxu0
    %1073 = vdwg.mxu0
    %v1074 = vsel %vm315, %v985, 0
    %1076 = vmatprep.subr.mxu0 0.0
    %1077 = vmatpush1.msra.mxu0 %v310
    %1078 = vmatprep.subr.mxu0 0.0
    %1079 = vmatpush1.msra.mxu0 %v311
    %1080 = vmatprep.subr.mxu0 0.0
    %1081 = vmatpush1.msra.mxu0 0.0
    %1082 = vmatprep.subr.mxu0 0.0
    %1083 = vmatpush1.msra.mxu0 0.0
    %1084 = vmatprep.subr.mxu0 0.0
    %1085 = vmatpush1.msra.mxu0 0.0
    %1086 = vmatprep.subr.mxu0 0.0
    %1087 = vmatpush1.msra.mxu0 0.0
    %1088 = vmatprep.subr.mxu0 0.0
    %1089 = vmatpush1.msra.mxu0 0.0
    %1090 = vmatprep.subr.mxu0 0.0
    %1091 = vmatpush1.msra.mxu0 0.0
    %1092 = vmatprep.subr.mxu0 0.0
    %1093 = vmatpush1.msra.mxu0 0.0
    %1094 = vmatprep.subr.mxu0 0.0
    %1095 = vmatpush1.msra.mxu0 0.0
    %1096 = vmatprep.subr.mxu0 0.0
    %1097 = vmatpush1.msra.mxu0 0.0
    %1098 = vmatprep.subr.mxu0 0.0
    %1099 = vmatpush1.msra.mxu0 0.0
    %1100 = vmatprep.subr.mxu0 0.0
    %1101 = vmatpush1.msra.mxu0 0.0
    %1102 = vmatprep.subr.mxu0 0.0
    %1103 = vmatpush1.msra.mxu0 0.0
    %1104 = vmatprep.subr.mxu0 0.0
    %1105 = vmatpush1.msra.mxu0 0.0
    %1106 = vmatprep.subr.mxu0 0.0
    %1107 = vmatpush1.msra.mxu0 0.0
    %1108 = vmatprep.subr.mxu0 0.0
    %1109 = vmatpush1.msra.mxu0 0.0
    %1110 = vmatprep.subr.mxu0 0.0
    %1111 = vmatpush1.msra.mxu0 0.0
    %1112 = vmatprep.subr.mxu0 0.0
    %1113 = vmatpush1.msra.mxu0 0.0
    %1114 = vmatprep.subr.mxu0 0.0
    %1115 = vmatpush1.msra.mxu0 0.0
    %1116 = vmatprep.subr.mxu0 0.0
    %1117 = vmatpush1.msra.mxu0 0.0
    %1118 = vmatprep.subr.mxu0 0.0
    %1119 = vmatpush1.msra.mxu0 0.0
    %1120 = vmatprep.subr.mxu0 0.0
    %1121 = vmatpush1.msra.mxu0 0.0
    %1122 = vmatprep.subr.mxu0 0.0
    %1123 = vmatpush1.msra.mxu0 0.0
    %1124 = vmatprep.subr.mxu0 0.0
    %1125 = vmatpush1.msra.mxu0 0.0
    %1126 = vmatprep.subr.mxu0 0.0
    %1127 = vmatpush1.msra.mxu0 0.0
    %1128 = vmatprep.subr.mxu0 0.0
    %1129 = vmatpush1.msra.mxu0 0.0
    %1130 = vmatprep.subr.mxu0 0.0
    %1131 = vmatpush1.msra.mxu0 0.0
    %1132 = vmatprep.subr.mxu0 0.0
    %1133 = vmatpush1.msra.mxu0 0.0
    %1134 = vmatprep.subr.mxu0 0.0
    %1135 = vmatpush1.msra.mxu0 0.0
    %1136 = vmatprep.subr.mxu0 0.0
    %1137 = vmatpush1.msra.mxu0 0.0
    %1138 = vmatprep.subr.mxu0 0.0
    %1139 = vmatpush1.msra.mxu0 0.0
    %1140 = vmatprep.mubr.f32.mxu0 0.0
    %1141 = vmatmul.mubr.f32.gmra.mrb[0].mxu0 %v1074
    %v1142 = vpop.f32.mrb[0].mxu0
    %v1143 = vadd.f32 0.0, %v1142
    %v1144 = vpop.f32.mrb[0].mxu0
    %1145 = vdwg.mxu0
    %v1146 = vadd.f32 %v999, %v1071
    %v1147 = vadd.f32 %v1001, %v1143
    %v1148 = vxor.u32 %v1146, 2147483648
    %v1149 = vxor.u32 %v1147, 2147483648
    %v1150 = vmul.f32 %v1148, 1.442695
    %v1151 = vpow.pop %v1150
    %v1152 = vmul.f32 %v1149, 1.442695
    %v1153 = vpow.pop %v1152
    %v1154 = vadd.f32 %v1151, 1.0
    %v1155 = vadd.f32 %v1153, 1.0
    %v1156 = vrcp.pop %v1154
    %v1157 = vmul.f32 1.0, %v1156
    %v1158 = vrcp.pop %v1155
    %v1159 = vmul.f32 1.0, %v1158
    %v1160 = vtanh.pop %v1146
    %v1161 = vtanh.pop %v1147
    %v1162 = vmul.f32 %v1157, %v954
    %v1163 = vmul.f32 %v1159, %v955
    %1166 = vrot.lane.b32.xlu0 %v1160, 80
    %v1167 = vpop.permute.xlu0 %1166
    %1168 = vrot.lane.b32.xlu0 %v1161, 80
    %v1169 = vpop.permute.xlu0 %1168
    %v1172 = vmul.f32 %v1157, %v1167
    %v1173 = vmul.f32 %v1159, %v1169
    %1176 = vrot.lane.b32.xlu0 %v1172, 16
    %v1177 = vpop.permute.xlu0 %1176
    %1178 = vrot.lane.b32.xlu0 %v1173, 16
    %v1179 = vpop.permute.xlu0 %1178
    %v1182 = vadd.f32 %v1162, %v1177
    %v1183 = vadd.f32 %v1163, %v1179
    %v1184 = vtanh.pop %v1182
    %v1185 = vtanh.pop %v1183
    %1188 = vrot.lane.b32.xlu0 %v1184, 16
    %v1189 = vpop.permute.xlu0 %1188
    %1190 = vrot.lane.b32.xlu0 %v1185, 16
    %v1191 = vpop.permute.xlu0 %1190
    %v1194 = vmul.f32 %v1157, %v1189
    %v1195 = vmul.f32 %v1159, %v1191
    %1197 = vrot.lane.b32.xlu0 %v1194, 96
    %v1198 = vpop.permute.xlu0 %1197
    %v1200 = vsel %vm513, %v1198, 0.0
    %1201 = vadd.xlane.f32.xlu0 %v1200
    %v1202 = vpop.xlane.xlu0 %1201
    %v1204 = vlaneseq
    %v1205 = vshrl.u32 %v1204, 7
    %v1206 = vsub.s32 %v519, %v1205
    %v1207 = vrot.slane %v1202, %v1206
    %s1209 = scalar_lea.vmem [#allocation4], 3
    %1210 = vst.msk [vmem:[%s1209] sm:$0x1] %vm525, %v1207
    %1212 = vrot.lane.b32.xlu0 %v1195, 96
    %v1213 = vpop.permute.xlu0 %1212
    %v1215 = vsel %vm513, %v1213, 0.0
    %1216 = vadd.xlane.f32.xlu0 %v1215
    %v1217 = vpop.xlane.xlu0 %1216
    %v1219 = vlaneseq
    %v1220 = vshrl.u32 %v1219, 7
    %v1221 = vsub.s32 %v519, %v1220
    %v1222 = vrot.slane %v1217, %v1221
    %s1224 = scalar_lea.vmem [#allocation5], 4
    %1225 = vst.msk [vmem:[%s1224] sm:$0x1] %vm525, %v1222
    %s1226 = scalar_lea.vmem [#allocation2], 8
    %v1227 = vld [vmem:[%s1226] sm:$0x3]
    %s1228 = scalar_lea.vmem [#allocation3], 6
    %v1229 = vld [vmem:[%s1228] sm:$0x3]
    %v1230 = vsel %vm315, %v1198, 0
    %1232 = vmatprep.subr.mxu0 0.0
    %1233 = vmatpush1.msra.mxu0 %v308
    %1234 = vmatprep.subr.mxu0 0.0
    %1235 = vmatpush1.msra.mxu0 %v309
    %1236 = vmatprep.subr.mxu0 0.0
    %1237 = vmatpush1.msra.mxu0 0.0
    %1238 = vmatprep.subr.mxu0 0.0
    %1239 = vmatpush1.msra.mxu0 0.0
    %1240 = vmatprep.subr.mxu0 0.0
    %1241 = vmatpush1.msra.mxu0 0.0
    %1242 = vmatprep.subr.mxu0 0.0
    %1243 = vmatpush1.msra.mxu0 0.0
    %1244 = vmatprep.subr.mxu0 0.0
    %1245 = vmatpush1.msra.mxu0 0.0
    %1246 = vmatprep.subr.mxu0 0.0
    %1247 = vmatpush1.msra.mxu0 0.0
    %1248 = vmatprep.subr.mxu0 0.0
    %1249 = vmatpush1.msra.mxu0 0.0
    %1250 = vmatprep.subr.mxu0 0.0
    %1251 = vmatpush1.msra.mxu0 0.0
    %1252 = vmatprep.subr.mxu0 0.0
    %1253 = vmatpush1.msra.mxu0 0.0
    %1254 = vmatprep.subr.mxu0 0.0
    %1255 = vmatpush1.msra.mxu0 0.0
    %1256 = vmatprep.subr.mxu0 0.0
    %1257 = vmatpush1.msra.mxu0 0.0
    %1258 = vmatprep.subr.mxu0 0.0
    %1259 = vmatpush1.msra.mxu0 0.0
    %1260 = vmatprep.subr.mxu0 0.0
    %1261 = vmatpush1.msra.mxu0 0.0
    %1262 = vmatprep.subr.mxu0 0.0
    %1263 = vmatpush1.msra.mxu0 0.0
    %1264 = vmatprep.subr.mxu0 0.0
    %1265 = vmatpush1.msra.mxu0 0.0
    %1266 = vmatprep.subr.mxu0 0.0
    %1267 = vmatpush1.msra.mxu0 0.0
    %1268 = vmatprep.subr.mxu0 0.0
    %1269 = vmatpush1.msra.mxu0 0.0
    %1270 = vmatprep.subr.mxu0 0.0
    %1271 = vmatpush1.msra.mxu0 0.0
    %1272 = vmatprep.subr.mxu0 0.0
    %1273 = vmatpush1.msra.mxu0 0.0
    %1274 = vmatprep.subr.mxu0 0.0
    %1275 = vmatpush1.msra.mxu0 0.0
    %1276 = vmatprep.subr.mxu0 0.0
    %1277 = vmatpush1.msra.mxu0 0.0
    %1278 = vmatprep.subr.mxu0 0.0
    %1279 = vmatpush1.msra.mxu0 0.0
    %1280 = vmatprep.subr.mxu0 0.0
    %1281 = vmatpush1.msra.mxu0 0.0
    %1282 = vmatprep.subr.mxu0 0.0
    %1283 = vmatpush1.msra.mxu0 0.0
    %1284 = vmatprep.subr.mxu0 0.0
    %1285 = vmatpush1.msra.mxu0 0.0
    %1286 = vmatprep.subr.mxu0 0.0
    %1287 = vmatpush1.msra.mxu0 0.0
    %1288 = vmatprep.subr.mxu0 0.0
    %1289 = vmatpush1.msra.mxu0 0.0
    %1290 = vmatprep.subr.mxu0 0.0
    %1291 = vmatpush1.msra.mxu0 0.0
    %1292 = vmatprep.subr.mxu0 0.0
    %1293 = vmatpush1.msra.mxu0 0.0
    %1294 = vmatprep.subr.mxu0 0.0
    %1295 = vmatpush1.msra.mxu0 0.0
    %1296 = vmatprep.mubr.f32.mxu0 0.0
    %1297 = vmatmul.mubr.f32.gmra.mrb[0].mxu0 %v1230
    %v1298 = vpop.f32.mrb[0].mxu0
    %v1299 = vadd.f32 0.0, %v1298
    %v1300 = vpop.f32.mrb[0].mxu0
    %1301 = vdwg.mxu0
    %v1302 = vsel %vm315, %v1213, 0
    %1304 = vmatprep.subr.mxu0 0.0
    %1305 = vmatpush1.msra.mxu0 %v310
    %1306 = vmatprep.subr.mxu0 0.0
    %1307 = vmatpush1.msra.mxu0 %v311
    %1308 = vmatprep.subr.mxu0 0.0
    %1309 = vmatpush1.msra.mxu0 0.0
    %1310 = vmatprep.subr.mxu0 0.0
    %1311 = vmatpush1.msra.mxu0 0.0
    %1312 = vmatprep.subr.mxu0 0.0
    %1313 = vmatpush1.msra.mxu0 0.0
    %1314 = vmatprep.subr.mxu0 0.0
    %1315 = vmatpush1.msra.mxu0 0.0
    %1316 = vmatprep.subr.mxu0 0.0
    %1317 = vmatpush1.msra.mxu0 0.0
    %1318 = vmatprep.subr.mxu0 0.0
    %1319 = vmatpush1.msra.mxu0 0.0
    %1320 = vmatprep.subr.mxu0 0.0
    %1321 = vmatpush1.msra.mxu0 0.0
    %1322 = vmatprep.subr.mxu0 0.0
    %1323 = vmatpush1.msra.mxu0 0.0
    %1324 = vmatprep.subr.mxu0 0.0
    %1325 = vmatpush1.msra.mxu0 0.0
    %1326 = vmatprep.subr.mxu0 0.0
    %1327 = vmatpush1.msra.mxu0 0.0
    %1328 = vmatprep.subr.mxu0 0.0
    %1329 = vmatpush1.msra.mxu0 0.0
    %1330 = vmatprep.subr.mxu0 0.0
    %1331 = vmatpush1.msra.mxu0 0.0
    %1332 = vmatprep.subr.mxu0 0.0
    %1333 = vmatpush1.msra.mxu0 0.0
    %1334 = vmatprep.subr.mxu0 0.0
    %1335 = vmatpush1.msra.mxu0 0.0
    %1336 = vmatprep.subr.mxu0 0.0
    %1337 = vmatpush1.msra.mxu0 0.0
    %1338 = vmatprep.subr.mxu0 0.0
    %1339 = vmatpush1.msra.mxu0 0.0
    %1340 = vmatprep.subr.mxu0 0.0
    %1341 = vmatpush1.msra.mxu0 0.0
    %1342 = vmatprep.subr.mxu0 0.0
    %1343 = vmatpush1.msra.mxu0 0.0
    %1344 = vmatprep.subr.mxu0 0.0
    %1345 = vmatpush1.msra.mxu0 0.0
    %1346 = vmatprep.subr.mxu0 0.0
    %1347 = vmatpush1.msra.mxu0 0.0
    %1348 = vmatprep.subr.mxu0 0.0
    %1349 = vmatpush1.msra.mxu0 0.0
    %1350 = vmatprep.subr.mxu0 0.0
    %1351 = vmatpush1.msra.mxu0 0.0
    %1352 = vmatprep.subr.mxu0 0.0
    %1353 = vmatpush1.msra.mxu0 0.0
    %1354 = vmatprep.subr.mxu0 0.0
    %1355 = vmatpush1.msra.mxu0 0.0
    %1356 = vmatprep.subr.mxu0 0.0
    %1357 = vmatpush1.msra.mxu0 0.0
    %1358 = vmatprep.subr.mxu0 0.0
    %1359 = vmatpush1.msra.mxu0 0.0
    %1360 = vmatprep.subr.mxu0 0.0
    %1361 = vmatpush1.msra.mxu0 0.0
    %1362 = vmatprep.subr.mxu0 0.0
    %1363 = vmatpush1.msra.mxu0 0.0
    %1364 = vmatprep.subr.mxu0 0.0
    %1365 = vmatpush1.msra.mxu0 0.0
    %1366 = vmatprep.subr.mxu0 0.0
    %1367 = vmatpush1.msra.mxu0 0.0
    %1368 = vmatprep.mubr.f32.mxu0 0.0
    %1369 = vmatmul.mubr.f32.gmra.mrb[0].mxu0 %v1302
    %v1370 = vpop.f32.mrb[0].mxu0
    %v1371 = vadd.f32 0.0, %v1370
    %v1372 = vpop.f32.mrb[0].mxu0
    %1373 = vdwg.mxu0
    %v1374 = vadd.f32 %v1227, %v1299
    %v1375 = vadd.f32 %v1229, %v1371
    %v1376 = vxor.u32 %v1374, 2147483648
    %v1377 = vxor.u32 %v1375, 2147483648
    %v1378 = vmul.f32 %v1376, 1.442695
    %v1379 = vpow.pop %v1378
    %v1380 = vmul.f32 %v1377, 1.442695
    %v1381 = vpow.pop %v1380
    %v1382 = vadd.f32 %v1379, 1.0
    %v1383 = vadd.f32 %v1381, 1.0
    %v1384 = vrcp.pop %v1382
    %v1385 = vmul.f32 1.0, %v1384
    %v1386 = vrcp.pop %v1383
    %v1387 = vmul.f32 1.0, %v1386
    %v1388 = vtanh.pop %v1374
    %v1389 = vtanh.pop %v1375
    %v1390 = vmul.f32 %v1385, %v1182
    %v1391 = vmul.f32 %v1387, %v1183
    %1394 = vrot.lane.b32.xlu0 %v1388, 80
    %v1395 = vpop.permute.xlu0 %1394
    %1396 = vrot.lane.b32.xlu0 %v1389, 80
    %v1397 = vpop.permute.xlu0 %1396
    %v1400 = vmul.f32 %v1385, %v1395
    %v1401 = vmul.f32 %v1387, %v1397
    %1404 = vrot.lane.b32.xlu0 %v1400, 16
    %v1405 = vpop.permute.xlu0 %1404
    %1406 = vrot.lane.b32.xlu0 %v1401, 16
    %v1407 = vpop.permute.xlu0 %1406
    %v1410 = vadd.f32 %v1390, %v1405
    %v1411 = vadd.f32 %v1391, %v1407
    %v1412 = vtanh.pop %v1410
    %v1413 = vtanh.pop %v1411
    %1416 = vrot.lane.b32.xlu0 %v1412, 16
    %v1417 = vpop.permute.xlu0 %1416
    %1418 = vrot.lane.b32.xlu0 %v1413, 16
    %v1419 = vpop.permute.xlu0 %1418
    %v1422 = vmul.f32 %v1385, %v1417
    %v1423 = vmul.f32 %v1387, %v1419
    %1425 = vrot.lane.b32.xlu0 %v1422, 96
    %v1426 = vpop.permute.xlu0 %1425
    %v1428 = vsel %vm513, %v1426, 0.0
    %1429 = vadd.xlane.f32.xlu0 %v1428
    %v1430 = vpop.xlane.xlu0 %1429
    %v1432 = vlaneseq
    %v1433 = vshrl.u32 %v1432, 7
    %v1434 = vsub.s32 %v519, %v1433
    %v1435 = vrot.slane %v1430, %v1434
    %s1437 = scalar_lea.vmem [#allocation4], 4
    %1438 = vst.msk [vmem:[%s1437] sm:$0x1] %vm525, %v1435
    %1440 = vrot.lane.b32.xlu0 %v1423, 96
    %v1441 = vpop.permute.xlu0 %1440
    %v1443 = vsel %vm513, %v1441, 0.0
    %1444 = vadd.xlane.f32.xlu0 %v1443
    %v1445 = vpop.xlane.xlu0 %1444
    %v1447 = vlaneseq
    %v1448 = vshrl.u32 %v1447, 7
    %v1449 = vsub.s32 %v519, %v1448
    %v1450 = vrot.slane %v1445, %v1449
    %s1452 = scalar_lea.vmem [#allocation5], 3
    %1453 = vst.msk [vmem:[%s1452] sm:$0x1] %vm525, %v1450
    %s1454 = scalar_lea.vmem [#allocation2], 10
    %v1455 = vld [vmem:[%s1454] sm:$0x3]
    %s1456 = scalar_lea.vmem [#allocation3], 4
    %v1457 = vld [vmem:[%s1456] sm:$0x3]
    %v1458 = vsel %vm315, %v1426, 0
    %1460 = vmatprep.subr.mxu0 0.0
    %1461 = vmatpush1.msra.mxu0 %v308
    %1462 = vmatprep.subr.mxu0 0.0
    %1463 = vmatpush1.msra.mxu0 %v309
    %1464 = vmatprep.subr.mxu0 0.0
    %1465 = vmatpush1.msra.mxu0 0.0
    %1466 = vmatprep.subr.mxu0 0.0
    %1467 = vmatpush1.msra.mxu0 0.0
    %1468 = vmatprep.subr.mxu0 0.0
    %1469 = vmatpush1.msra.mxu0 0.0
    %1470 = vmatprep.subr.mxu0 0.0
    %1471 = vmatpush1.msra.mxu0 0.0
    %1472 = vmatprep.subr.mxu0 0.0
    %1473 = vmatpush1.msra.mxu0 0.0
    %1474 = vmatprep.subr.mxu0 0.0
    %1475 = vmatpush1.msra.mxu0 0.0
    %1476 = vmatprep.subr.mxu0 0.0
    %1477 = vmatpush1.msra.mxu0 0.0
    %1478 = vmatprep.subr.mxu0 0.0
    %1479 = vmatpush1.msra.mxu0 0.0
    %1480 = vmatprep.subr.mxu0 0.0
    %1481 = vmatpush1.msra.mxu0 0.0
    %1482 = vmatprep.subr.mxu0 0.0
    %1483 = vmatpush1.msra.mxu0 0.0
    %1484 = vmatprep.subr.mxu0 0.0
    %1485 = vmatpush1.msra.mxu0 0.0
    %1486 = vmatprep.subr.mxu0 0.0
    %1487 = vmatpush1.msra.mxu0 0.0
    %1488 = vmatprep.subr.mxu0 0.0
    %1489 = vmatpush1.msra.mxu0 0.0
    %1490 = vmatprep.subr.mxu0 0.0
    %1491 = vmatpush1.msra.mxu0 0.0
    %1492 = vmatprep.subr.mxu0 0.0
    %1493 = vmatpush1.msra.mxu0 0.0
    %1494 = vmatprep.subr.mxu0 0.0
    %1495 = vmatpush1.msra.mxu0 0.0
    %1496 = vmatprep.subr.mxu0 0.0
    %1497 = vmatpush1.msra.mxu0 0.0
    %1498 = vmatprep.subr.mxu0 0.0
    %1499 = vmatpush1.msra.mxu0 0.0
    %1500 = vmatprep.subr.mxu0 0.0
    %1501 = vmatpush1.msra.mxu0 0.0
    %1502 = vmatprep.subr.mxu0 0.0
    %1503 = vmatpush1.msra.mxu0 0.0
    %1504 = vmatprep.subr.mxu0 0.0
    %1505 = vmatpush1.msra.mxu0 0.0
    %1506 = vmatprep.subr.mxu0 0.0
    %1507 = vmatpush1.msra.mxu0 0.0
    %1508 = vmatprep.subr.mxu0 0.0
    %1509 = vmatpush1.msra.mxu0 0.0
    %1510 = vmatprep.subr.mxu0 0.0
    %1511 = vmatpush1.msra.mxu0 0.0
    %1512 = vmatprep.subr.mxu0 0.0
    %1513 = vmatpush1.msra.mxu0 0.0
    %1514 = vmatprep.subr.mxu0 0.0
    %1515 = vmatpush1.msra.mxu0 0.0
    %1516 = vmatprep.subr.mxu0 0.0
    %1517 = vmatpush1.msra.mxu0 0.0
    %1518 = vmatprep.subr.mxu0 0.0
    %1519 = vmatpush1.msra.mxu0 0.0
    %1520 = vmatprep.subr.mxu0 0.0
    %1521 = vmatpush1.msra.mxu0 0.0
    %1522 = vmatprep.subr.mxu0 0.0
    %1523 = vmatpush1.msra.mxu0 0.0
    %1524 = vmatprep.mubr.f32.mxu0 0.0
    %1525 = vmatmul.mubr.f32.gmra.mrb[0].mxu0 %v1458
    %v1526 = vpop.f32.mrb[0].mxu0
    %v1527 = vadd.f32 0.0, %v1526
    %v1528 = vpop.f32.mrb[0].mxu0
    %1529 = vdwg.mxu0
    %v1530 = vsel %vm315, %v1441, 0
    %1532 = vmatprep.subr.mxu0 0.0
    %1533 = vmatpush1.msra.mxu0 %v310
    %1534 = vmatprep.subr.mxu0 0.0
    %1535 = vmatpush1.msra.mxu0 %v311
    %1536 = vmatprep.subr.mxu0 0.0
    %1537 = vmatpush1.msra.mxu0 0.0
    %1538 = vmatprep.subr.mxu0 0.0
    %1539 = vmatpush1.msra.mxu0 0.0
    %1540 = vmatprep.subr.mxu0 0.0
    %1541 = vmatpush1.msra.mxu0 0.0
    %1542 = vmatprep.subr.mxu0 0.0
    %1543 = vmatpush1.msra.mxu0 0.0
    %1544 = vmatprep.subr.mxu0 0.0
    %1545 = vmatpush1.msra.mxu0 0.0
    %1546 = vmatprep.subr.mxu0 0.0
    %1547 = vmatpush1.msra.mxu0 0.0
    %1548 = vmatprep.subr.mxu0 0.0
    %1549 = vmatpush1.msra.mxu0 0.0
    %1550 = vmatprep.subr.mxu0 0.0
    %1551 = vmatpush1.msra.mxu0 0.0
    %1552 = vmatprep.subr.mxu0 0.0
    %1553 = vmatpush1.msra.mxu0 0.0
    %1554 = vmatprep.subr.mxu0 0.0
    %1555 = vmatpush1.msra.mxu0 0.0
    %1556 = vmatprep.subr.mxu0 0.0
    %1557 = vmatpush1.msra.mxu0 0.0
    %1558 = vmatprep.subr.mxu0 0.0
    %1559 = vmatpush1.msra.mxu0 0.0
    %1560 = vmatprep.subr.mxu0 0.0
    %1561 = vmatpush1.msra.mxu0 0.0
    %1562 = vmatprep.subr.mxu0 0.0
    %1563 = vmatpush1.msra.mxu0 0.0
    %1564 = vmatprep.subr.mxu0 0.0
    %1565 = vmatpush1.msra.mxu0 0.0
    %1566 = vmatprep.subr.mxu0 0.0
    %1567 = vmatpush1.msra.mxu0 0.0
    %1568 = vmatprep.subr.mxu0 0.0
    %1569 = vmatpush1.msra.mxu0 0.0
    %1570 = vmatprep.subr.mxu0 0.0
    %1571 = vmatpush1.msra.mxu0 0.0
    %1572 = vmatprep.subr.mxu0 0.0
    %1573 = vmatpush1.msra.mxu0 0.0
    %1574 = vmatprep.subr.mxu0 0.0
    %1575 = vmatpush1.msra.mxu0 0.0
    %1576 = vmatprep.subr.mxu0 0.0
    %1577 = vmatpush1.msra.mxu0 0.0
    %1578 = vmatprep.subr.mxu0 0.0
    %1579 = vmatpush1.msra.mxu0 0.0
    %1580 = vmatprep.subr.mxu0 0.0
    %1581 = vmatpush1.msra.mxu0 0.0
    %1582 = vmatprep.subr.mxu0 0.0
    %1583 = vmatpush1.msra.mxu0 0.0
    %1584 = vmatprep.subr.mxu0 0.0
    %1585 = vmatpush1.msra.mxu0 0.0
    %1586 = vmatprep.subr.mxu0 0.0
    %1587 = vmatpush1.msra.mxu0 0.0
    %1588 = vmatprep.subr.mxu0 0.0
    %1589 = vmatpush1.msra.mxu0 0.0
    %1590 = vmatprep.subr.mxu0 0.0
    %1591 = vmatpush1.msra.mxu0 0.0
    %1592 = vmatprep.subr.mxu0 0.0
    %1593 = vmatpush1.msra.mxu0 0.0
    %1594 = vmatprep.subr.mxu0 0.0
    %1595 = vmatpush1.msra.mxu0 0.0
    %1596 = vmatprep.mubr.f32.mxu0 0.0
    %1597 = vmatmul.mubr.f32.gmra.mrb[0].mxu0 %v1530
    %v1598 = vpop.f32.mrb[0].mxu0
    %v1599 = vadd.f32 0.0, %v1598
    %v1600 = vpop.f32.mrb[0].mxu0
    %1601 = vdwg.mxu0
    %v1602 = vadd.f32 %v1455, %v1527
    %v1603 = vadd.f32 %v1457, %v1599
    %v1604 = vxor.u32 %v1602, 2147483648
    %v1605 = vxor.u32 %v1603, 2147483648
    %v1606 = vmul.f32 %v1604, 1.442695
    %v1607 = vpow.pop %v1606
    %v1608 = vmul.f32 %v1605, 1.442695
    %v1609 = vpow.pop %v1608
    %v1610 = vadd.f32 %v1607, 1.0
    %v1611 = vadd.f32 %v1609, 1.0
    %v1612 = vrcp.pop %v1610
    %v1613 = vmul.f32 1.0, %v1612
    %v1614 = vrcp.pop %v1611
    %v1615 = vmul.f32 1.0, %v1614
    %v1616 = vtanh.pop %v1602
    %v1617 = vtanh.pop %v1603
    %v1618 = vmul.f32 %v1613, %v1410
    %v1619 = vmul.f32 %v1615, %v1411
    %1622 = vrot.lane.b32.xlu0 %v1616, 80
    %v1623 = vpop.permute.xlu0 %1622
    %1624 = vrot.lane.b32.xlu0 %v1617, 80
    %v1625 = vpop.permute.xlu0 %1624
    %v1628 = vmul.f32 %v1613, %v1623
    %v1629 = vmul.f32 %v1615, %v1625
    %1632 = vrot.lane.b32.xlu0 %v1628, 16
    %v1633 = vpop.permute.xlu0 %1632
    %1634 = vrot.lane.b32.xlu0 %v1629, 16
    %v1635 = vpop.permute.xlu0 %1634
    %v1638 = vadd.f32 %v1618, %v1633
    %v1639 = vadd.f32 %v1619, %v1635
    %v1640 = vtanh.pop %v1638
    %v1641 = vtanh.pop %v1639
    %1644 = vrot.lane.b32.xlu0 %v1640, 16
    %v1645 = vpop.permute.xlu0 %1644
    %1646 = vrot.lane.b32.xlu0 %v1641, 16
    %v1647 = vpop.permute.xlu0 %1646
    %v1650 = vmul.f32 %v1613, %v1645
    %v1651 = vmul.f32 %v1615, %v1647
    %1653 = vrot.lane.b32.xlu0 %v1650, 96
    %v1654 = vpop.permute.xlu0 %1653
    %v1656 = vsel %vm513, %v1654, 0.0
    %1657 = vadd.xlane.f32.xlu0 %v1656
    %v1658 = vpop.xlane.xlu0 %1657
    %v1660 = vlaneseq
    %v1661 = vshrl.u32 %v1660, 7
    %v1662 = vsub.s32 %v519, %v1661
    %v1663 = vrot.slane %v1658, %v1662
    %s1665 = scalar_lea.vmem [#allocation4], 5
    %1666 = vst.msk [vmem:[%s1665] sm:$0x1] %vm525, %v1663
    %1668 = vrot.lane.b32.xlu0 %v1651, 96
    %v1669 = vpop.permute.xlu0 %1668
    %v1671 = vsel %vm513, %v1669, 0.0
    %1672 = vadd.xlane.f32.xlu0 %v1671
    %v1673 = vpop.xlane.xlu0 %1672
    %v1675 = vlaneseq
    %v1676 = vshrl.u32 %v1675, 7
    %v1677 = vsub.s32 %v519, %v1676
    %v1678 = vrot.slane %v1673, %v1677
    %s1680 = scalar_lea.vmem [#allocation5], 2
    %1681 = vst.msk [vmem:[%s1680] sm:$0x1] %vm525, %v1678
    %s1682 = scalar_lea.vmem [#allocation2], 12
    %v1683 = vld [vmem:[%s1682] sm:$0x3]
    %s1684 = scalar_lea.vmem [#allocation3], 2
    %v1685 = vld [vmem:[%s1684] sm:$0x3]
    %v1686 = vsel %vm315, %v1654, 0
    %1688 = vmatprep.subr.mxu0 0.0
    %1689 = vmatpush1.msra.mxu0 %v308
    %1690 = vmatprep.subr.mxu0 0.0
    %1691 = vmatpush1.msra.mxu0 %v309
    %1692 = vmatprep.subr.mxu0 0.0
    %1693 = vmatpush1.msra.mxu0 0.0
    %1694 = vmatprep.subr.mxu0 0.0
    %1695 = vmatpush1.msra.mxu0 0.0
    %1696 = vmatprep.subr.mxu0 0.0
    %1697 = vmatpush1.msra.mxu0 0.0
    %1698 = vmatprep.subr.mxu0 0.0
    %1699 = vmatpush1.msra.mxu0 0.0
    %1700 = vmatprep.subr.mxu0 0.0
    %1701 = vmatpush1.msra.mxu0 0.0
    %1702 = vmatprep.subr.mxu0 0.0
    %1703 = vmatpush1.msra.mxu0 0.0
    %1704 = vmatprep.subr.mxu0 0.0
    %1705 = vmatpush1.msra.mxu0 0.0
    %1706 = vmatprep.subr.mxu0 0.0
    %1707 = vmatpush1.msra.mxu0 0.0
    %1708 = vmatprep.subr.mxu0 0.0
    %1709 = vmatpush1.msra.mxu0 0.0
    %1710 = vmatprep.subr.mxu0 0.0
    %1711 = vmatpush1.msra.mxu0 0.0
    %1712 = vmatprep.subr.mxu0 0.0
    %1713 = vmatpush1.msra.mxu0 0.0
    %1714 = vmatprep.subr.mxu0 0.0
    %1715 = vmatpush1.msra.mxu0 0.0
    %1716 = vmatprep.subr.mxu0 0.0
    %1717 = vmatpush1.msra.mxu0 0.0
    %1718 = vmatprep.subr.mxu0 0.0
    %1719 = vmatpush1.msra.mxu0 0.0
    %1720 = vmatprep.subr.mxu0 0.0
    %1721 = vmatpush1.msra.mxu0 0.0
    %1722 = vmatprep.subr.mxu0 0.0
    %1723 = vmatpush1.msra.mxu0 0.0
    %1724 = vmatprep.subr.mxu0 0.0
    %1725 = vmatpush1.msra.mxu0 0.0
    %1726 = vmatprep.subr.mxu0 0.0
    %1727 = vmatpush1.msra.mxu0 0.0
    %1728 = vmatprep.subr.mxu0 0.0
    %1729 = vmatpush1.msra.mxu0 0.0
    %1730 = vmatprep.subr.mxu0 0.0
    %1731 = vmatpush1.msra.mxu0 0.0
    %1732 = vmatprep.subr.mxu0 0.0
    %1733 = vmatpush1.msra.mxu0 0.0
    %1734 = vmatprep.subr.mxu0 0.0
    %1735 = vmatpush1.msra.mxu0 0.0
    %1736 = vmatprep.subr.mxu0 0.0
    %1737 = vmatpush1.msra.mxu0 0.0
    %1738 = vmatprep.subr.mxu0 0.0
    %1739 = vmatpush1.msra.mxu0 0.0
    %1740 = vmatprep.subr.mxu0 0.0
    %1741 = vmatpush1.msra.mxu0 0.0
    %1742 = vmatprep.subr.mxu0 0.0
    %1743 = vmatpush1.msra.mxu0 0.0
    %1744 = vmatprep.subr.mxu0 0.0
    %1745 = vmatpush1.msra.mxu0 0.0
    %1746 = vmatprep.subr.mxu0 0.0
    %1747 = vmatpush1.msra.mxu0 0.0
    %1748 = vmatprep.subr.mxu0 0.0
    %1749 = vmatpush1.msra.mxu0 0.0
    %1750 = vmatprep.subr.mxu0 0.0
    %1751 = vmatpush1.msra.mxu0 0.0
    %1752 = vmatprep.mubr.f32.mxu0 0.0
    %1753 = vmatmul.mubr.f32.gmra.mrb[0].mxu0 %v1686
    %v1754 = vpop.f32.mrb[0].mxu0
    %v1755 = vadd.f32 0.0, %v1754
    %v1756 = vpop.f32.mrb[0].mxu0
    %1757 = vdwg.mxu0
    %v1758 = vsel %vm315, %v1669, 0
    %1760 = vmatprep.subr.mxu0 0.0
    %1761 = vmatpush1.msra.mxu0 %v310
    %1762 = vmatprep.subr.mxu0 0.0
    %1763 = vmatpush1.msra.mxu0 %v311
    %1764 = vmatprep.subr.mxu0 0.0
    %1765 = vmatpush1.msra.mxu0 0.0
    %1766 = vmatprep.subr.mxu0 0.0
    %1767 = vmatpush1.msra.mxu0 0.0
    %1768 = vmatprep.subr.mxu0 0.0
    %1769 = vmatpush1.msra.mxu0 0.0
    %1770 = vmatprep.subr.mxu0 0.0
    %1771 = vmatpush1.msra.mxu0 0.0
    %1772 = vmatprep.subr.mxu0 0.0
    %1773 = vmatpush1.msra.mxu0 0.0
    %1774 = vmatprep.subr.mxu0 0.0
    %1775 = vmatpush1.msra.mxu0 0.0
    %1776 = vmatprep.subr.mxu0 0.0
    %1777 = vmatpush1.msra.mxu0 0.0
    %1778 = vmatprep.subr.mxu0 0.0
    %1779 = vmatpush1.msra.mxu0 0.0
    %1780 = vmatprep.subr.mxu0 0.0
    %1781 = vmatpush1.msra.mxu0 0.0
    %1782 = vmatprep.subr.mxu0 0.0
    %1783 = vmatpush1.msra.mxu0 0.0
    %1784 = vmatprep.subr.mxu0 0.0
    %1785 = vmatpush1.msra.mxu0 0.0
    %1786 = vmatprep.subr.mxu0 0.0
    %1787 = vmatpush1.msra.mxu0 0.0
    %1788 = vmatprep.subr.mxu0 0.0
    %1789 = vmatpush1.msra.mxu0 0.0
    %1790 = vmatprep.subr.mxu0 0.0
    %1791 = vmatpush1.msra.mxu0 0.0
    %1792 = vmatprep.subr.mxu0 0.0
    %1793 = vmatpush1.msra.mxu0 0.0
    %1794 = vmatprep.subr.mxu0 0.0
    %1795 = vmatpush1.msra.mxu0 0.0
    %1796 = vmatprep.subr.mxu0 0.0
    %1797 = vmatpush1.msra.mxu0 0.0
    %1798 = vmatprep.subr.mxu0 0.0
    %1799 = vmatpush1.msra.mxu0 0.0
    %1800 = vmatprep.subr.mxu0 0.0
    %1801 = vmatpush1.msra.mxu0 0.0
    %1802 = vmatprep.subr.mxu0 0.0
    %1803 = vmatpush1.msra.mxu0 0.0
    %1804 = vmatprep.subr.mxu0 0.0
    %1805 = vmatpush1.msra.mxu0 0.0
    %1806 = vmatprep.subr.mxu0 0.0
    %1807 = vmatpush1.msra.mxu0 0.0
    %1808 = vmatprep.subr.mxu0 0.0
    %1809 = vmatpush1.msra.mxu0 0.0
    %1810 = vmatprep.subr.mxu0 0.0
    %1811 = vmatpush1.msra.mxu0 0.0
    %1812 = vmatprep.subr.mxu0 0.0
    %1813 = vmatpush1.msra.mxu0 0.0
    %1814 = vmatprep.subr.mxu0 0.0
    %1815 = vmatpush1.msra.mxu0 0.0
    %1816 = vmatprep.subr.mxu0 0.0
    %1817 = vmatpush1.msra.mxu0 0.0
    %1818 = vmatprep.subr.mxu0 0.0
    %1819 = vmatpush1.msra.mxu0 0.0
    %1820 = vmatprep.subr.mxu0 0.0
    %1821 = vmatpush1.msra.mxu0 0.0
    %1822 = vmatprep.subr.mxu0 0.0
    %1823 = vmatpush1.msra.mxu0 0.0
    %1824 = vmatprep.mubr.f32.mxu0 0.0
    %1825 = vmatmul.mubr.f32.gmra.mrb[0].mxu0 %v1758
    %v1826 = vpop.f32.mrb[0].mxu0
    %v1827 = vadd.f32 0.0, %v1826
    %v1828 = vpop.f32.mrb[0].mxu0
    %1829 = vdwg.mxu0
    %v1830 = vadd.f32 %v1683, %v1755
    %v1831 = vadd.f32 %v1685, %v1827
    %v1832 = vxor.u32 %v1830, 2147483648
    %v1833 = vxor.u32 %v1831, 2147483648
    %v1834 = vmul.f32 %v1832, 1.442695
    %v1835 = vpow.pop %v1834
    %v1836 = vmul.f32 %v1833, 1.442695
    %v1837 = vpow.pop %v1836
    %v1838 = vadd.f32 %v1835, 1.0
    %v1839 = vadd.f32 %v1837, 1.0
    %v1840 = vrcp.pop %v1838
    %v1841 = vmul.f32 1.0, %v1840
    %v1842 = vrcp.pop %v1839
    %v1843 = vmul.f32 1.0, %v1842
    %v1844 = vtanh.pop %v1830
    %v1845 = vtanh.pop %v1831
    %v1846 = vmul.f32 %v1841, %v1638
    %v1847 = vmul.f32 %v1843, %v1639
    %1850 = vrot.lane.b32.xlu0 %v1844, 80
    %v1851 = vpop.permute.xlu0 %1850
    %1852 = vrot.lane.b32.xlu0 %v1845, 80
    %v1853 = vpop.permute.xlu0 %1852
    %v1856 = vmul.f32 %v1841, %v1851
    %v1857 = vmul.f32 %v1843, %v1853
    %1860 = vrot.lane.b32.xlu0 %v1856, 16
    %v1861 = vpop.permute.xlu0 %1860
    %1862 = vrot.lane.b32.xlu0 %v1857, 16
    %v1863 = vpop.permute.xlu0 %1862
    %v1866 = vadd.f32 %v1846, %v1861
    %v1867 = vadd.f32 %v1847, %v1863
    %v1868 = vtanh.pop %v1866
    %v1869 = vtanh.pop %v1867
    %1872 = vrot.lane.b32.xlu0 %v1868, 16
    %v1873 = vpop.permute.xlu0 %1872
    %1874 = vrot.lane.b32.xlu0 %v1869, 16
    %v1875 = vpop.permute.xlu0 %1874
    %v1878 = vmul.f32 %v1841, %v1873
    %v1879 = vmul.f32 %v1843, %v1875
    %1881 = vrot.lane.b32.xlu0 %v1878, 96
    %v1882 = vpop.permute.xlu0 %1881
    %v1884 = vsel %vm513, %v1882, 0.0
    %1885 = vadd.xlane.f32.xlu0 %v1884
    %v1886 = vpop.xlane.xlu0 %1885
    %v1888 = vlaneseq
    %v1889 = vshrl.u32 %v1888, 7
    %v1890 = vsub.s32 %v519, %v1889
    %v1891 = vrot.slane %v1886, %v1890
    %s1893 = scalar_lea.vmem [#allocation4], 6
    %1894 = vst.msk [vmem:[%s1893] sm:$0x1] %vm525, %v1891
    %1896 = vrot.lane.b32.xlu0 %v1879, 96
    %v1897 = vpop.permute.xlu0 %1896
    %v1899 = vsel %vm513, %v1897, 0.0
    %1900 = vadd.xlane.f32.xlu0 %v1899
    %v1901 = vpop.xlane.xlu0 %1900
    %v1903 = vlaneseq
    %v1904 = vshrl.u32 %v1903, 7
    %v1905 = vsub.s32 %v519, %v1904
    %v1906 = vrot.slane %v1901, %v1905
    %s1908 = scalar_lea.vmem [#allocation5], 1
    %1909 = vst.msk [vmem:[%s1908] sm:$0x1] %vm525, %v1906
    %s1910 = scalar_lea.vmem [#allocation2], 14
    %v1911 = vld [vmem:[%s1910] sm:$0x3]
    %v1912 = vld [vmem:[#allocation3] sm:$0x3]
    %v1913 = vsel %vm315, %v1882, 0
    %1915 = vmatprep.subr.mxu0 0.0
    %1916 = vmatpush1.msra.mxu0 %v308
    %1917 = vmatprep.subr.mxu0 0.0
    %1918 = vmatpush1.msra.mxu0 %v309
    %1919 = vmatprep.subr.mxu0 0.0
    %1920 = vmatpush1.msra.mxu0 0.0
    %1921 = vmatprep.subr.mxu0 0.0
    %1922 = vmatpush1.msra.mxu0 0.0
    %1923 = vmatprep.subr.mxu0 0.0
    %1924 = vmatpush1.msra.mxu0 0.0
    %1925 = vmatprep.subr.mxu0 0.0
    %1926 = vmatpush1.msra.mxu0 0.0
    %1927 = vmatprep.subr.mxu0 0.0
    %1928 = vmatpush1.msra.mxu0 0.0
    %1929 = vmatprep.subr.mxu0 0.0
    %1930 = vmatpush1.msra.mxu0 0.0
    %1931 = vmatprep.subr.mxu0 0.0
    %1932 = vmatpush1.msra.mxu0 0.0
    %1933 = vmatprep.subr.mxu0 0.0
    %1934 = vmatpush1.msra.mxu0 0.0
    %1935 = vmatprep.subr.mxu0 0.0
    %1936 = vmatpush1.msra.mxu0 0.0
    %1937 = vmatprep.subr.mxu0 0.0
    %1938 = vmatpush1.msra.mxu0 0.0
    %1939 = vmatprep.subr.mxu0 0.0
    %1940 = vmatpush1.msra.mxu0 0.0
    %1941 = vmatprep.subr.mxu0 0.0
    %1942 = vmatpush1.msra.mxu0 0.0
    %1943 = vmatprep.subr.mxu0 0.0
    %1944 = vmatpush1.msra.mxu0 0.0
    %1945 = vmatprep.subr.mxu0 0.0
    %1946 = vmatpush1.msra.mxu0 0.0
    %1947 = vmatprep.subr.mxu0 0.0
    %1948 = vmatpush1.msra.mxu0 0.0
    %1949 = vmatprep.subr.mxu0 0.0
    %1950 = vmatpush1.msra.mxu0 0.0
    %1951 = vmatprep.subr.mxu0 0.0
    %1952 = vmatpush1.msra.mxu0 0.0
    %1953 = vmatprep.subr.mxu0 0.0
    %1954 = vmatpush1.msra.mxu0 0.0
    %1955 = vmatprep.subr.mxu0 0.0
    %1956 = vmatpush1.msra.mxu0 0.0
    %1957 = vmatprep.subr.mxu0 0.0
    %1958 = vmatpush1.msra.mxu0 0.0
    %1959 = vmatprep.subr.mxu0 0.0
    %1960 = vmatpush1.msra.mxu0 0.0
    %1961 = vmatprep.subr.mxu0 0.0
    %1962 = vmatpush1.msra.mxu0 0.0
    %1963 = vmatprep.subr.mxu0 0.0
    %1964 = vmatpush1.msra.mxu0 0.0
    %1965 = vmatprep.subr.mxu0 0.0
    %1966 = vmatpush1.msra.mxu0 0.0
    %1967 = vmatprep.subr.mxu0 0.0
    %1968 = vmatpush1.msra.mxu0 0.0
    %1969 = vmatprep.subr.mxu0 0.0
    %1970 = vmatpush1.msra.mxu0 0.0
    %1971 = vmatprep.subr.mxu0 0.0
    %1972 = vmatpush1.msra.mxu0 0.0
    %1973 = vmatprep.subr.mxu0 0.0
    %1974 = vmatpush1.msra.mxu0 0.0
    %1975 = vmatprep.subr.mxu0 0.0
    %1976 = vmatpush1.msra.mxu0 0.0
    %1977 = vmatprep.subr.mxu0 0.0
    %1978 = vmatpush1.msra.mxu0 0.0
    %1979 = vmatprep.mubr.f32.mxu0 0.0
    %1980 = vmatmul.mubr.f32.gmra.mrb[0].mxu0 %v1913
    %v1981 = vpop.f32.mrb[0].mxu0
    %v1982 = vadd.f32 0.0, %v1981
    %v1983 = vpop.f32.mrb[0].mxu0
    %1984 = vdwg.mxu0
    %v1985 = vsel %vm315, %v1897, 0
    %1987 = vmatprep.subr.mxu0 0.0
    %1988 = vmatpush1.msra.mxu0 %v310
    %1989 = vmatprep.subr.mxu0 0.0
    %1990 = vmatpush1.msra.mxu0 %v311
    %1991 = vmatprep.subr.mxu0 0.0
    %1992 = vmatpush1.msra.mxu0 0.0
    %1993 = vmatprep.subr.mxu0 0.0
    %1994 = vmatpush1.msra.mxu0 0.0
    %1995 = vmatprep.subr.mxu0 0.0
    %1996 = vmatpush1.msra.mxu0 0.0
    %1997 = vmatprep.subr.mxu0 0.0
    %1998 = vmatpush1.msra.mxu0 0.0
    %1999 = vmatprep.subr.mxu0 0.0
    %2000 = vmatpush1.msra.mxu0 0.0
    %2001 = vmatprep.subr.mxu0 0.0
    %2002 = vmatpush1.msra.mxu0 0.0
    %2003 = vmatprep.subr.mxu0 0.0
    %2004 = vmatpush1.msra.mxu0 0.0
    %2005 = vmatprep.subr.mxu0 0.0
    %2006 = vmatpush1.msra.mxu0 0.0
    %2007 = vmatprep.subr.mxu0 0.0
    %2008 = vmatpush1.msra.mxu0 0.0
    %2009 = vmatprep.subr.mxu0 0.0
    %2010 = vmatpush1.msra.mxu0 0.0
    %2011 = vmatprep.subr.mxu0 0.0
    %2012 = vmatpush1.msra.mxu0 0.0
    %2013 = vmatprep.subr.mxu0 0.0
    %2014 = vmatpush1.msra.mxu0 0.0
    %2015 = vmatprep.subr.mxu0 0.0
    %2016 = vmatpush1.msra.mxu0 0.0
    %2017 = vmatprep.subr.mxu0 0.0
    %2018 = vmatpush1.msra.mxu0 0.0
    %2019 = vmatprep.subr.mxu0 0.0
    %2020 = vmatpush1.msra.mxu0 0.0
    %2021 = vmatprep.subr.mxu0 0.0
    %2022 = vmatpush1.msra.mxu0 0.0
    %2023 = vmatprep.subr.mxu0 0.0
    %2024 = vmatpush1.msra.mxu0 0.0
    %2025 = vmatprep.subr.mxu0 0.0
    %2026 = vmatpush1.msra.mxu0 0.0
    %2027 = vmatprep.subr.mxu0 0.0
    %2028 = vmatpush1.msra.mxu0 0.0
    %2029 = vmatprep.subr.mxu0 0.0
    %2030 = vmatpush1.msra.mxu0 0.0
    %2031 = vmatprep.subr.mxu0 0.0
    %2032 = vmatpush1.msra.mxu0 0.0
    %2033 = vmatprep.subr.mxu0 0.0
    %2034 = vmatpush1.msra.mxu0 0.0
    %2035 = vmatprep.subr.mxu0 0.0
    %2036 = vmatpush1.msra.mxu0 0.0
    %2037 = vmatprep.subr.mxu0 0.0
    %2038 = vmatpush1.msra.mxu0 0.0
    %2039 = vmatprep.subr.mxu0 0.0
    %2040 = vmatpush1.msra.mxu0 0.0
    %2041 = vmatprep.subr.mxu0 0.0
    %2042 = vmatpush1.msra.mxu0 0.0
    %2043 = vmatprep.subr.mxu0 0.0
    %2044 = vmatpush1.msra.mxu0 0.0
    %2045 = vmatprep.subr.mxu0 0.0
    %2046 = vmatpush1.msra.mxu0 0.0
    %2047 = vmatprep.subr.mxu0 0.0
    %2048 = vmatpush1.msra.mxu0 0.0
    %2049 = vmatprep.subr.mxu0 0.0
    %2050 = vmatpush1.msra.mxu0 0.0
    %2051 = vmatprep.mubr.f32.mxu0 0.0
    %2052 = vmatmul.mubr.f32.gmra.mrb[0].mxu0 %v1985
    %v2053 = vpop.f32.mrb[0].mxu0
    %v2054 = vadd.f32 0.0, %v2053
    %v2055 = vpop.f32.mrb[0].mxu0
    %2056 = vdwg.mxu0
    %v2057 = vadd.f32 %v1911, %v1982
    %v2058 = vadd.f32 %v1912, %v2054
    %v2059 = vxor.u32 %v2057, 2147483648
    %v2060 = vxor.u32 %v2058, 2147483648
    %v2061 = vmul.f32 %v2059, 1.442695
    %v2062 = vpow.pop %v2061
    %v2063 = vmul.f32 %v2060, 1.442695
    %v2064 = vpow.pop %v2063
    %v2065 = vadd.f32 %v2062, 1.0
    %v2066 = vadd.f32 %v2064, 1.0
    %v2067 = vrcp.pop %v2065
    %v2068 = vmul.f32 1.0, %v2067
    %v2069 = vrcp.pop %v2066
    %v2070 = vmul.f32 1.0, %v2069
    %v2071 = vtanh.pop %v2057
    %v2072 = vtanh.pop %v2058
    %v2073 = vmul.f32 %v2068, %v1866
    %v2074 = vmul.f32 %v2070, %v1867
    %2077 = vrot.lane.b32.xlu0 %v2071, 80
    %v2078 = vpop.permute.xlu0 %2077
    %2079 = vrot.lane.b32.xlu0 %v2072, 80
    %v2080 = vpop.permute.xlu0 %2079
    %v2083 = vmul.f32 %v2068, %v2078
    %v2084 = vmul.f32 %v2070, %v2080
    %2087 = vrot.lane.b32.xlu0 %v2083, 16
    %v2088 = vpop.permute.xlu0 %2087
    %2089 = vrot.lane.b32.xlu0 %v2084, 16
    %v2090 = vpop.permute.xlu0 %2089
    %v2093 = vadd.f32 %v2073, %v2088
    %v2094 = vadd.f32 %v2074, %v2090
    %v2095 = vtanh.pop %v2093
    %v2096 = vtanh.pop %v2094
    %2099 = vrot.lane.b32.xlu0 %v2095, 16
    %v2100 = vpop.permute.xlu0 %2099
    %2101 = vrot.lane.b32.xlu0 %v2096, 16
    %v2102 = vpop.permute.xlu0 %2101
    %v2105 = vmul.f32 %v2068, %v2100
    %v2106 = vmul.f32 %v2070, %v2102
    %2108 = vrot.lane.b32.xlu0 %v2105, 96
    %v2109 = vpop.permute.xlu0 %2108
    %v2111 = vsel %vm513, %v2109, 0.0
    %2112 = vadd.xlane.f32.xlu0 %v2111
    %v2113 = vpop.xlane.xlu0 %2112
    %v2115 = vlaneseq
    %v2116 = vshrl.u32 %v2115, 7
    %v2117 = vsub.s32 %v519, %v2116
    %v2118 = vrot.slane %v2113, %v2117
    %s2120 = scalar_lea.vmem [#allocation4], 7
    %2121 = vst.msk [vmem:[%s2120] sm:$0x1] %vm525, %v2118
    %2123 = vrot.lane.b32.xlu0 %v2106, 96
    %v2124 = vpop.permute.xlu0 %2123
    %v2126 = vsel %vm513, %v2124, 0.0
    %2127 = vadd.xlane.f32.xlu0 %v2126
    %v2128 = vpop.xlane.xlu0 %2127
    %v2130 = vlaneseq
    %v2131 = vshrl.u32 %v2130, 7
    %v2132 = vsub.s32 %v519, %v2131
    %v2133 = vrot.slane %v2128, %v2132
    %2135 = vst.msk [vmem:[#allocation5] sm:$0x1] %vm525, %v2133
    %v2136 = vld [vmem:[#allocation4] sm:$0x1]
    %v2137 = vld [vmem:[#allocation4 + $0x1] sm:$0x1]
    %v2138 = vld [vmem:[#allocation4 + $0x2] sm:$0x1]
    %v2139 = vld [vmem:[#allocation4 + $0x3] sm:$0x1]
    %v2140 = vld [vmem:[#allocation4 + $0x4] sm:$0x1]
    %v2141 = vld [vmem:[#allocation4 + $0x5] sm:$0x1]
    %v2142 = vld [vmem:[#allocation4 + $0x6] sm:$0x1]
    %v2143 = vld [vmem:[#allocation4 + $0x7] sm:$0x1]
    %v2144 = vld [vmem:[#allocation5] sm:$0x1]
    %v2145 = vld [vmem:[#allocation5 + $0x1] sm:$0x1]
    %v2146 = vld [vmem:[#allocation5 + $0x2] sm:$0x1]
    %v2147 = vld [vmem:[#allocation5 + $0x3] sm:$0x1]
    %v2148 = vld [vmem:[#allocation5 + $0x4] sm:$0x1]
    %v2149 = vld [vmem:[#allocation5 + $0x5] sm:$0x1]
    %v2150 = vld [vmem:[#allocation5 + $0x6] sm:$0x1]
    %v2151 = vld [vmem:[#allocation5 + $0x7] sm:$0x1]
    %v2152 = vadd.f32 %v2136, %v2144
    %v2153 = vadd.f32 %v2137, %v2145
    %v2154 = vadd.f32 %v2138, %v2146
    %v2155 = vadd.f32 %v2139, %v2147
    %v2156 = vadd.f32 %v2140, %v2148
    %v2157 = vadd.f32 %v2141, %v2149
    %v2158 = vadd.f32 %v2142, %v2150
    %v2159 = vadd.f32 %v2143, %v2151
    %v2160 = vlaneseq
    %vm2161 = vcmp.ge.s32.totalorder %v2160, 0
    %vm2162 = vcmp.lt.s32.totalorder %v2160, 2
    %vm2163 = vmand %vm2161, %vm2162
    %v2164 = vsel %vm2163, %v2152, -inf
    %v2165 = vsel %vm2163, %v2153, -inf
    %v2166 = vsel %vm2163, %v2154, -inf
    %v2167 = vsel %vm2163, %v2155, -inf
    %v2168 = vsel %vm2163, %v2156, -inf
    %v2169 = vmax.f32 %v2164, %v2168
    %v2170 = vsel %vm2163, %v2157, -inf
    %v2171 = vmax.f32 %v2165, %v2170
    %v2172 = vsel %vm2163, %v2158, -inf
    %v2173 = vmax.f32 %v2166, %v2172
    %v2174 = vsel %vm2163, %v2159, -inf
    %v2175 = vmax.f32 %v2167, %v2174
    %v2176 = vmax.f32 %v2169, %v2171
    %v2177 = vmax.f32 %v2173, %v2175
    %v2178 = vmax.f32 %v2176, %v2177
    %v2180 = vlaneseq
    %v2181 = vshrl.u32 %v2180, 7
    %v2182 = vsub.s32 0, %v2181
    %v2183 = vrot.slane %v2178, %v2182
    %v2184 = vcombine.high %v2183, %v2183
    %v2186 = vunpack.c.l.s4 1966171168
    %v2187 = vunpack.c.0.s8 %v2186
    %v2188 = vlaneseq
    %v2189 = vshrl.u32 %v2188, 7
    %v2190 = vsub.s32 %v2187, %v2189
    %v2191 = vrot.slane %v2183, %v2190
    %v2193 = vunpack.c.l.s4 1966171168
    %v2194 = vunpack.c.0.s8 %v2193
    %v2195 = vlaneseq
    %v2196 = vshrl.u32 %v2195, 7
    %v2197 = vsub.s32 %v2194, %v2196
    %v2198 = vrot.slane %v2184, %v2197
    %v2199 = vcombine.high %v2191, %v2191
    %v2200 = vcombine.high %v2198, %v2198
    %v2202 = vunpack.c.l.s4 1966171168
    %v2203 = vunpack.c.0.s8 %v2202
    %v2204 = vlaneseq
    %v2205 = vshrl.u32 %v2204, 7
    %v2206 = vsub.s32 %v2203, %v2205
    %v2207 = vrot.slane %v2191, %v2206
    %v2209 = vunpack.c.l.s4 1966171168
    %v2210 = vunpack.c.0.s8 %v2209
    %v2211 = vlaneseq
    %v2212 = vshrl.u32 %v2211, 7
    %v2213 = vsub.s32 %v2210, %v2212
    %v2214 = vrot.slane %v2198, %v2213
    %v2216 = vunpack.c.l.s4 1966171168
    %v2217 = vunpack.c.0.s8 %v2216
    %v2218 = vlaneseq
    %v2219 = vshrl.u32 %v2218, 7
    %v2220 = vsub.s32 %v2217, %v2219
    %v2221 = vrot.slane %v2199, %v2220
    %v2223 = vunpack.c.l.s4 1966171168
    %v2224 = vunpack.c.0.s8 %v2223
    %v2225 = vlaneseq
    %v2226 = vshrl.u32 %v2225, 7
    %v2227 = vsub.s32 %v2224, %v2226
    %v2228 = vrot.slane %v2200, %v2227
    %v2229 = vcombine.high %v2207, %v2207
    %v2230 = vcombine.high %v2214, %v2214
    %v2231 = vcombine.high %v2221, %v2221
    %v2232 = vcombine.high %v2228, %v2228
    %v2241 = vsub.f32 %v2152, %v2207
    %v2242 = vsub.f32 %v2153, %v2221
    %v2243 = vsub.f32 %v2154, %v2229
    %v2244 = vsub.f32 %v2155, %v2231
    %v2245 = vsub.f32 %v2156, %v2214
    %v2246 = vsub.f32 %v2157, %v2228
    %v2247 = vsub.f32 %v2158, %v2230
    %v2248 = vsub.f32 %v2159, %v2232
    %v2249 = vmul.f32 %v2241, 1.442695
    %v2250 = vpow.pop %v2249
    %v2251 = vmul.f32 %v2242, 1.442695
    %v2252 = vpow.pop %v2251
    %v2253 = vmul.f32 %v2243, 1.442695
    %v2254 = vpow.pop %v2253
    %v2255 = vmul.f32 %v2244, 1.442695
    %v2256 = vpow.pop %v2255
    %v2257 = vmul.f32 %v2245, 1.442695
    %v2258 = vpow.pop %v2257
    %v2259 = vmul.f32 %v2246, 1.442695
    %v2260 = vpow.pop %v2259
    %v2261 = vmul.f32 %v2247, 1.442695
    %v2262 = vpow.pop %v2261
    %v2263 = vmul.f32 %v2248, 1.442695
    %v2264 = vpow.pop %v2263
    %v2273 = vcombine.low %v2250, %v2252
    %v2274 = vcombine.low %v2254, %v2256
    %v2275 = vcombine.low %v2258, %v2260
    %v2276 = vcombine.low %v2262, %v2264
    %v2278 = vunpack.c.l.s4 1966171168
    %v2279 = vunpack.c.0.s8 %v2278
    %v2280 = vlaneseq
    %v2281 = vshrl.u32 %v2280, 7
    %v2282 = vsub.s32 %v2279, %v2281
    %v2283 = vrot.slane %v2273, %v2282
    %v2285 = vunpack.c.l.s4 1966171168
    %v2286 = vunpack.c.0.s8 %v2285
    %v2287 = vlaneseq
    %v2288 = vshrl.u32 %v2287, 7
    %v2289 = vsub.s32 %v2286, %v2288
    %v2290 = vrot.slane %v2274, %v2289
    %v2292 = vunpack.c.l.s4 1966171168
    %v2293 = vunpack.c.0.s8 %v2292
    %v2294 = vlaneseq
    %v2295 = vshrl.u32 %v2294, 7
    %v2296 = vsub.s32 %v2293, %v2295
    %v2297 = vrot.slane %v2275, %v2296
    %v2299 = vunpack.c.l.s4 1966171168
    %v2300 = vunpack.c.0.s8 %v2299
    %v2301 = vlaneseq
    %v2302 = vshrl.u32 %v2301, 7
    %v2303 = vsub.s32 %v2300, %v2302
    %v2304 = vrot.slane %v2276, %v2303
    %v2305 = vcombine.low %v2283, %v2290
    %v2306 = vcombine.low %v2297, %v2304
    %v2308 = vunpack.c.l.s4 1966171168
    %v2309 = vunpack.c.0.s8 %v2308
    %v2310 = vlaneseq
    %v2311 = vshrl.u32 %v2310, 7
    %v2312 = vsub.s32 %v2309, %v2311
    %v2313 = vrot.slane %v2305, %v2312
    %v2315 = vunpack.c.l.s4 1966171168
    %v2316 = vunpack.c.0.s8 %v2315
    %v2317 = vlaneseq
    %v2318 = vshrl.u32 %v2317, 7
    %v2319 = vsub.s32 %v2316, %v2318
    %v2320 = vrot.slane %v2306, %v2319
    %v2321 = vcombine.low %v2313, %v2320
    %vm2323 = vcmask 15360
    %v2324 = vsel %vm2323, %v2321, 0.0
    %v2325 = vrot.slane %v2324, 4
    %v2326 = vadd.f32 %v2324, %v2325
    %v2327 = vrot.slane %v2326, 2
    %v2328 = vadd.f32 %v2326, %v2327
    %v2329 = vrot.slane %v2328, 1
    %v2330 = vadd.f32 %v2328, %v2329
    %v2331 = vlaneseq
    %v2332 = vshrl.u32 %v2331, 7
    %v2333 = vsub.s32 0, %v2332
    %v2334 = vrot.slane %v2330, %v2333
    %v2336 = vcombine.high %v2334, %v2334
    %v2338 = vunpack.c.l.s4 1966171168
    %v2339 = vunpack.c.0.s8 %v2338
    %v2340 = vlaneseq
    %v2341 = vshrl.u32 %v2340, 7
    %v2342 = vsub.s32 %v2339, %v2341
    %v2343 = vrot.slane %v2334, %v2342
    %v2345 = vunpack.c.l.s4 1966171168
    %v2346 = vunpack.c.0.s8 %v2345
    %v2347 = vlaneseq
    %v2348 = vshrl.u32 %v2347, 7
    %v2349 = vsub.s32 %v2346, %v2348
    %v2350 = vrot.slane %v2336, %v2349
    %v2351 = vcombine.high %v2343, %v2343
    %v2352 = vcombine.high %v2350, %v2350
    %v2354 = vunpack.c.l.s4 1966171168
    %v2355 = vunpack.c.0.s8 %v2354
    %v2356 = vlaneseq
    %v2357 = vshrl.u32 %v2356, 7
    %v2358 = vsub.s32 %v2355, %v2357
    %v2359 = vrot.slane %v2343, %v2358
    %v2361 = vunpack.c.l.s4 1966171168
    %v2362 = vunpack.c.0.s8 %v2361
    %v2363 = vlaneseq
    %v2364 = vshrl.u32 %v2363, 7
    %v2365 = vsub.s32 %v2362, %v2364
    %v2366 = vrot.slane %v2350, %v2365
    %v2368 = vunpack.c.l.s4 1966171168
    %v2369 = vunpack.c.0.s8 %v2368
    %v2370 = vlaneseq
    %v2371 = vshrl.u32 %v2370, 7
    %v2372 = vsub.s32 %v2369, %v2371
    %v2373 = vrot.slane %v2351, %v2372
    %v2375 = vunpack.c.l.s4 1966171168
    %v2376 = vunpack.c.0.s8 %v2375
    %v2377 = vlaneseq
    %v2378 = vshrl.u32 %v2377, 7
    %v2379 = vsub.s32 %v2376, %v2378
    %v2380 = vrot.slane %v2352, %v2379
    %v2381 = vcombine.high %v2359, %v2359
    %v2382 = vcombine.high %v2366, %v2366
    %v2383 = vcombine.high %v2373, %v2373
    %v2384 = vcombine.high %v2380, %v2380
    %v2393 = vrcp.pop %v2359
    %v2394 = vmul.f32 %v2250, %v2393
    %v2395 = vrcp.pop %v2373
    %v2396 = vmul.f32 %v2252, %v2395
    %v2397 = vrcp.pop %v2381
    %v2398 = vmul.f32 %v2254, %v2397
    %v2399 = vrcp.pop %v2383
    %v2400 = vmul.f32 %v2256, %v2399
    %v2401 = vrcp.pop %v2366
    %v2402 = vmul.f32 %v2258, %v2401
    %v2403 = vrcp.pop %v2380
    %v2404 = vmul.f32 %v2260, %v2403
    %v2405 = vrcp.pop %v2382
    %v2406 = vmul.f32 %v2262, %v2405
    %v2407 = vrcp.pop %v2384
    %v2408 = vmul.f32 %v2264, %v2407
    %v2417 = vcombine.low %v2394, %v2396
    %v2418 = vcombine.low %v2398, %v2400
    %v2419 = vcombine.low %v2402, %v2404
    %v2420 = vcombine.low %v2406, %v2408
    %v2422 = vunpack.c.l.s4 1966171168
    %v2423 = vunpack.c.0.s8 %v2422
    %v2424 = vlaneseq
    %v2425 = vshrl.u32 %v2424, 7
    %v2426 = vsub.s32 %v2423, %v2425
    %v2427 = vrot.slane %v2417, %v2426
    %v2429 = vunpack.c.l.s4 1966171168
    %v2430 = vunpack.c.0.s8 %v2429
    %v2431 = vlaneseq
    %v2432 = vshrl.u32 %v2431, 7
    %v2433 = vsub.s32 %v2430, %v2432
    %v2434 = vrot.slane %v2418, %v2433
    %v2436 = vunpack.c.l.s4 1966171168
    %v2437 = vunpack.c.0.s8 %v2436
    %v2438 = vlaneseq
    %v2439 = vshrl.u32 %v2438, 7
    %v2440 = vsub.s32 %v2437, %v2439
    %v2441 = vrot.slane %v2419, %v2440
    %v2443 = vunpack.c.l.s4 1966171168
    %v2444 = vunpack.c.0.s8 %v2443
    %v2445 = vlaneseq
    %v2446 = vshrl.u32 %v2445, 7
    %v2447 = vsub.s32 %v2444, %v2446
    %v2448 = vrot.slane %v2420, %v2447
    %v2449 = vcombine.low %v2427, %v2434
    %v2450 = vcombine.low %v2441, %v2448
    %v2452 = vunpack.c.l.s4 1966171168
    %v2453 = vunpack.c.0.s8 %v2452
    %v2454 = vlaneseq
    %v2455 = vshrl.u32 %v2454, 7
    %v2456 = vsub.s32 %v2453, %v2455
    %v2457 = vrot.slane %v2449, %v2456
    %v2459 = vunpack.c.l.s4 1966171168
    %v2460 = vunpack.c.0.s8 %v2459
    %v2461 = vlaneseq
    %v2462 = vshrl.u32 %v2461, 7
    %v2463 = vsub.s32 %v2460, %v2462
    %v2464 = vrot.slane %v2450, %v2463
    %v2465 = vcombine.low %v2457, %v2464
    %2467 = vxpose.xlu0.b32.start [1/16] %v2465, 128
    %2468 = vxpose.xlu0.b32.cont [2/16] 0.0, 128
    %2469 = vxpose.xlu0.b32.cont [3/16] 0.0, 128
    %2470 = vxpose.xlu0.b32.cont [4/16] 0.0, 128
    %2471 = vxpose.xlu0.b32.cont [5/16] 0.0, 128
    %2472 = vxpose.xlu0.b32.cont [6/16] 0.0, 128
    %2473 = vxpose.xlu0.b32.cont [7/16] 0.0, 128
    %2474 = vxpose.xlu0.b32.cont [8/16] 0.0, 128
    %2475 = vxpose.xlu0.b32.cont [9/16] 0.0, 128
    %2476 = vxpose.xlu0.b32.cont [10/16] 0.0, 128
    %2477 = vxpose.xlu0.b32.cont [11/16] 0.0, 128
    %2478 = vxpose.xlu0.b32.cont [12/16] 0.0, 128
    %2479 = vxpose.xlu0.b32.cont [13/16] 0.0, 128
    %2480 = vxpose.xlu0.b32.cont [14/16] 0.0, 128
    %2481 = vxpose.xlu0.b32.cont [15/16] 0.0, 128
    %2482 = vxpose.xlu0.b32.end [16/16] 0.0, 128
    %v2483 = vpop.trf.xlu0
    %v2484 = vpop.trf.xlu0
    %v2485 = vpop.trf.xlu0
    %v2486 = vpop.trf.xlu0
    %v2487 = vpop.trf.xlu0
    %v2488 = vpop.trf.xlu0
    %v2489 = vpop.trf.xlu0
    %v2490 = vpop.trf.xlu0
    %v2491 = vpop.trf.xlu0
    %v2492 = vpop.trf.xlu0
    %v2493 = vpop.trf.xlu0
    %v2494 = vpop.trf.xlu0
    %v2495 = vpop.trf.xlu0
    %v2496 = vpop.trf.xlu0
    %v2497 = vpop.trf.xlu0
    %v2498 = vpop.trf.xlu0
    %v2499 = vlaneseq
    %v2500 = vshrl.u32 %v2499, 7
    %v2501 = vsub.s32 0, %v2500
    %v2502 = vrot.slane %v2483, %v2501
    %2504 = vbcast.lane.b32.xlu0 %v2502, 256
    %v2505 = vpop.permute.xlu0 %2504
    %v2506 = vlaneseq
    %v2507 = vshrl.u32 %v2506, 7
    %v2508 = vsub.s32 1, %v2507
    %v2509 = vrot.slane %v2483, %v2508
    %2511 = vbcast.lane.b32.xlu0 %v2509, 256
    %v2512 = vpop.permute.xlu0 %2511
    %v2513 = vmul.f32 %v62, %v2505
    %v2514 = vmul.f32 %v63, %v2512
    %v2515 = vsel %vm111, %v2513, 0.0
    %v2516 = vrot.slane %v2515, 4
    %v2517 = vadd.f32 %v2515, %v2516
    %v2518 = vrot.slane %v2517, 2
    %v2519 = vadd.f32 %v2517, %v2518
    %v2520 = vrot.slane %v2519, 1
    %v2521 = vadd.f32 %v2519, %v2520
    %v2522 = vsel %vm111, %v2514, 0.0
    %v2523 = vrot.slane %v2522, 4
    %v2524 = vadd.f32 %v2522, %v2523
    %v2525 = vrot.slane %v2524, 2
    %v2526 = vadd.f32 %v2524, %v2525
    %v2527 = vrot.slane %v2526, 1
    %v2528 = vadd.f32 %v2526, %v2527
    %vm2531 = vcmask 1041409
    %v2532 = vsel %vm2531, %v2528, %v2521
    %vm2534 = vcmask 254976
    %2535 = vst.msk [vmem:[#allocation12] sm:$0x3] %vm2534, %v2532
    // Predicated region
    $region34: #{tpu_custom_call.1} parent=1 // pred_check
      _
    $region35: #{tpu_custom_call.1} parent=1 // pred_check_branch
      %2537 = sbr.rel (0) target = $region37
    $region36: #{tpu_custom_call.1} parent=1 // pred_region
      %s2539 = ssub.s32 32, 32
      %2540 = vsyncadd [#allocation8], %s2539
      %s2542 = sshll.u32 [#allocation12], 4
      %s2543 = int_to_ptr.vmem [resolvable:$true] %s2542
      %2545 = dma.vmem_to_hbm [thread:$0]  %s2543, 32, %s5, [#allocation8]
    $region37: #{tpu_custom_call.1} parent=1 // pred_fallthru
      _
    // Predicated region
    $region38: #{tpu_custom_call.1} parent=1 // pred_check
      _
    $region39: #{tpu_custom_call.1} parent=1 // pred_check_branch
      %2547 = sbr.rel (0) target = $region41
    $region40: #{tpu_custom_call.1} parent=1 // pred_region
      %2548 = dma.done [#allocation8], 32
    $region41: #{tpu_custom_call.1} parent=1 // pred_fallthru
      _
    %2549 = vsyncpa [#allocation7], 1
    %2550 = vsyncpa [#allocation10], 1
    %2551 = vsyncpa [#allocation8], 1

</llo_original>
